<compile_context>
chip_gen: v6e
topology: v6e:2x2x1
jax: 0.10.0
libtpu: 0.0.40
codegen_flags: <defaults>
</compile_context>

<pallas_src>
import functools

import jax
import jax.numpy as jnp
from jax.experimental import pallas as pl
from jax.experimental.pallas import tpu as pltpu


# ------------------------------ fused kernel -------------------------------

def _ln(x, g, b, eps=1e-6):
    # eps=1e-6 follows the MAE repo's norm_layer override (PyTorch default 1e-5).
    mu = jnp.mean(x, axis=-1, keepdims=True)
    var = jnp.mean(jnp.square(x - mu), axis=-1, keepdims=True)
    return (x - mu) * jax.lax.rsqrt(var + eps) * g + b


def _mae_kernel(patches_ref, pe_w_ref, tok_bias_ref, vecs_ref,
                qkv_w_ref, proj_w_ref, fc1_w_ref, fc2_w_ref,
                norm_g_ref, norm_b_ref, head_w_ref, head_b_ref,
                logits_ref, tok_ref,
                *, depth, heads, dh, n_tok, bblk, hidden, scale):
    layer = pl.program_id(1)
    f32, bf16 = jnp.float32, jnp.bfloat16
    d = heads * dh

    # ---- patch embed + positional embed + cls token (first depth step) ----
    # Row 0 of each image's patch slab is all-zero, so its matmul row is zero
    # and tok_bias row 0 supplies (cls_token + pos[0]); rows 1.. receive
    # patch_emb + pe_b + pos[1:].  tok_bias arrives pre-tiled to (bblk*Np, D).
    # TODO(synk): on v7x (64 MiB VMEM) hoist this into a separate small
    # pallas_call so patches/pe_w/tok_bias do not stay resident for the whole
    # depth sweep; at these sizes (and on v5e/v6e) the cost is negligible.
    @pl.when(layer == 0)
    def _():
        emb = jnp.dot(patches_ref[0], pe_w_ref[...], preferred_element_type=f32)
        tok_ref[...] = emb + tok_bias_ref[...]

    x = tok_ref[...]                                    # (bblk*Np, D) f32, VMEM-resident

    # Packed per-layer vectors: one per-depth DMA instead of eight tiny ones.
    vecs = vecs_ref[0]                                  # (8, Wmax) f32
    ln1_g, ln1_b = vecs[0:1, :d], vecs[1:2, :d]
    qkv_b = vecs[2:3, :3 * d]
    proj_b = vecs[3:4, :d]
    ln2_g, ln2_b = vecs[4:5, :d], vecs[5:6, :d]
    fc1_b = vecs[6:7, :hidden]
    fc2_b = vecs[7:8, :d]

    # ---- attention branch: x = x + proj(MHA(LN1(x))) ----
    h1 = _ln(x, ln1_g, ln1_b)
    qkv = jnp.dot(h1.astype(bf16), qkv_w_ref[0],
                  preferred_element_type=f32) + qkv_b   # (M, 3D) f32
    # bf16 attention operands, f32 accumulation + f32 softmax math.
    # TODO(synk): per-head lane slices at h*dh offsets still relayout for odd
    # heads when dh=64; a per-layer (heads, Np, dh) relayout (pltpu.einshape)
    # or head-pair-aligned qkv column ordering would remove them entirely.
    q_all = (qkv[:, :d] * scale).astype(bf16)           # scale folded into q
    k_all = qkv[:, d:2 * d].astype(bf16)
    v_all = qkv[:, 2 * d:3 * d].astype(bf16)

    dims = (((1,), (1,)), ((), ()))                     # q @ k^T without a transpose
    o_imgs = []
    for i in range(bblk):                               # scores/softmax are per-image
        r0 = i * n_tok
        q_i = q_all[r0:r0 + n_tok]
        k_i = k_all[r0:r0 + n_tok]
        v_i = v_all[r0:r0 + n_tok]
        o_heads = []
        for hh in range(heads):
            c0 = hh * dh
            s = jax.lax.dot_general(q_i[:, c0:c0 + dh], k_i[:, c0:c0 + dh],
                                    dims, preferred_element_type=f32)   # (Np, Np)
            s = s - jnp.max(s, axis=-1, keepdims=True)
            p = jnp.exp(s)
            # TODO(synk): approx reciprocal runs on the EUP; use approx=False
            # if bit-level parity with torch.softmax is required.
            p = p * pl.reciprocal(jnp.sum(p, axis=-1, keepdims=True), approx=True)
            o_heads.append(jnp.dot(p.astype(bf16), v_i[:, c0:c0 + dh],
                                   preferred_element_type=f32))          # (Np, dh)
        o_imgs.append(jnp.concatenate(o_heads, axis=-1))                 # (Np, D)
    o = jnp.concatenate(o_imgs, axis=0)                                  # (M, D) f32
    # Single full-K head-merge + output projection: (M, D) @ (D, D).
    x = x + jnp.dot(o.astype(bf16), proj_w_ref[0],
                    preferred_element_type=f32) + proj_b

    # ---- MLP branch: x = x + fc2(GELU(fc1(LN2(x)))) ----
    # TODO(synk): on v7x ViT-L, tile fc1_w/fc2_w along the hidden dim (or use
    # pl.Buffered(1) / fp8 storage) to fit the 64 MiB VMEM; not needed here.
    h2 = _ln(x, ln2_g, ln2_b)
    m = jnp.dot(h2.astype(bf16), fc1_w_ref[0],
                preferred_element_type=f32) + fc1_b
    # TODO(synk): tanh-approx GELU; PyTorch nn.GELU default is exact erf (~1e-3 diff).
    m = jax.nn.gelu(m, approximate=True)
    m = jnp.dot(m.astype(bf16), fc2_w_ref[0],
                preferred_element_type=f32) + fc2_b
    x = x + m
    tok_ref[...] = x

    # ---- final LayerNorm + linear head on the cls rows (last depth step) ----
    @pl.when(layer == depth - 1)
    def _():
        cls = jnp.concatenate([x[i * n_tok:i * n_tok + 1, :] for i in range(bblk)],
                              axis=0)                                    # (bblk, D)
        cls = _ln(cls, norm_g_ref[...], norm_b_ref[...])
        logits_ref[0] = jnp.dot(cls.astype(jnp.bfloat16), head_w_ref[...],
                                preferred_element_type=f32) + head_b_ref[...]


# ------------------------- parameter initialization ------------------------

def init_params(key, *, C, patch, D, depth, heads, mlp_hidden, n_patches,
                n_classes):
    """Natural (PyTorch-like) parameters; linear weights stored as (in, out)."""
    std = 0.02
    keys = iter(jax.random.split(key, 4 + depth * 4))
    nrm = lambda shape: std * jax.random.normal(next(keys), shape, jnp.float32)
    params = {
        # conv weight (D, C, p, p) flattened row-major over (C,p,p), transposed:
        "pe_w": nrm((C * patch * patch, D)),
        "pe_b": jnp.zeros((D,), jnp.float32),
        "pos_embed": nrm((1, n_patches + 1, D)),
        "cls_token": nrm((1, 1, D)),
        "norm_g": jnp.ones((D,), jnp.float32),
        "norm_b": jnp.zeros((D,), jnp.float32),
        "head_w": nrm((D, n_classes)),
        "head_b": jnp.zeros((n_classes,), jnp.float32),
        "blocks": [],
    }
    for _ in range(depth):
        params["blocks"].append({
            "ln1_g": jnp.ones((D,), jnp.float32),
            "ln1_b": jnp.zeros((D,), jnp.float32),
            "qkv_w": nrm((D, 3 * D)),
            "qkv_b": jnp.zeros((3 * D,), jnp.float32),
            "proj_w": nrm((D, D)),
            "proj_b": jnp.zeros((D,), jnp.float32),
            "ln2_g": jnp.ones((D,), jnp.float32),
            "ln2_b": jnp.zeros((D,), jnp.float32),
            "fc1_w": nrm((D, mlp_hidden)),
            "fc1_b": jnp.zeros((mlp_hidden,), jnp.float32),
            "fc2_w": nrm((mlp_hidden, D)),
            "fc2_b": jnp.zeros((D,), jnp.float32),
        })
    return params


def prepare_params(params, *, num_heads, n_pad=128):
    """Pack params for the fused kernel: per-block matmul weights stacked on a
    leading depth axis in bf16, all small per-layer vectors packed into one
    (depth, 8, Wmax) block, classifier head padded to a 128-lane multiple."""
    del num_heads  # layout no longer depends on the head split
    D = params["pe_w"].shape[1]
    depth = len(params["blocks"])
    hidden = params["blocks"][0]["fc1_w"].shape[1]
    n_classes = params["head_w"].shape[1]
    bf = lambda a: a.astype(jnp.bfloat16)
    stack_w = lambda n: bf(jnp.stack([blk[n] for blk in params["blocks"]]))

    # cls+pos / pe_b+pos bias rows folded into one (Np, D) token bias.
    tok_bias = jnp.concatenate(
        [params["cls_token"][0] + params["pos_embed"][0, :1, :],
         params["pe_b"][None, :] + params["pos_embed"][0, 1:, :]], axis=0)

    # Pack the 8 small per-layer vectors into one per-depth block (1 DMA/step).
    wmax = max(3 * D, hidden, D)
    vec_rows = ("ln1_g", "ln1_b", "qkv_b", "proj_b",
                "ln2_g", "ln2_b", "fc1_b", "fc2_b")
    vecs = jnp.zeros((depth, len(vec_rows), wmax), jnp.float32)
    for l, blk in enumerate(params["blocks"]):
        for r, name in enumerate(vec_rows):
            v = blk[name]
            vecs = vecs.at[l, r, :v.shape[0]].set(v)

    npad = max(n_pad, -(-n_classes // 128) * 128)
    head_w = jnp.zeros((D, npad), jnp.float32).at[:, :n_classes].set(params["head_w"])
    head_b = jnp.zeros((1, npad), jnp.float32).at[0, :n_classes].set(params["head_b"])

    return {
        "pe_w": bf(params["pe_w"]),
        "tok_bias": tok_bias,                # (Np, D) f32, tiled per batch block later
        "vecs": vecs,                        # (depth, 8, Wmax) f32
        "qkv_w": stack_w("qkv_w"),           # (depth, D, 3D) bf16
        "proj_w": stack_w("proj_w"),         # (depth, D, D)  bf16
        "fc1_w": stack_w("fc1_w"),           # (depth, D, hidden) bf16
        "fc2_w": stack_w("fc2_w"),           # (depth, hidden, D) bf16
        "norm_g": params["norm_g"][None, :], "norm_b": params["norm_b"][None, :],
        "head_w": bf(head_w), "head_b": head_b,
        "n_classes": int(n_classes),
    }


# ------------------------------ forward pass -------------------------------

def mae_classifier_forward(prep, x, *, patch_size, num_heads, max_block_batch=4):
    """MAE_Classifier.forward: encode(x, mask_ratio=0) -> cls token -> head."""
    B, C, H, W = x.shape
    p = patch_size
    D = prep["pe_w"].shape[1]
    depth = prep["qkv_w"].shape[0]
    hidden = prep["fc1_w"].shape[2]
    npad = prep["head_w"].shape[1]
    wmax = prep["vecs"].shape[2]
    nH, nW = H // p, W // p
    n_patches = nH * nW
    n_tok = n_patches + 1
    cpp = C * p * p
    dh = D // num_heads

    # Batch blocking: bblk images share one depth sweep so per-layer weights
    # are streamed from HBM once per block instead of once per image.
    bblk = 1
    for cand in range(min(B, max_block_batch), 0, -1):
        if B % cand == 0:
            bblk = cand
            break
    num_bb = B // bblk
    M = bblk * n_tok

    # im2col for the stride-p patch conv (XLA glue), plus a leading zero row
    # per image that becomes the cls-token slot inside the kernel.
    patches = (x.reshape(B, C, nH, p, nW, p)
                 .transpose(0, 2, 4, 1, 3, 5)
                 .reshape(B, n_patches, cpp))
    patches = jnp.pad(patches, ((0, 0), (1, 0), (0, 0)))
    patches = patches.reshape(num_bb, M, cpp).astype(jnp.bfloat16)

    tok_bias = jnp.tile(prep["tok_bias"], (bblk, 1))          # (M, D) f32

    # TODO(synk): random_masking with mask_ratio=0 keeps every token (it only
    # permutes their order, which the encoder + cls readout is invariant to),
    # so the shuffle / mask / ids_restore bookkeeping is skipped.

    kernel = functools.partial(_mae_kernel, depth=depth, heads=num_heads, dh=dh,
                               n_tok=n_tok, bblk=bblk, hidden=hidden,
                               scale=float(dh) ** -0.5)

    def full(shape):
        return pl.BlockSpec(shape, lambda bb, k: (0,) * len(shape))

    def per_bb(shape):
        return pl.BlockSpec((1,) + shape, lambda bb, k: (bb,) + (0,) * len(shape))

    def per_depth(shape):
        return pl.BlockSpec((1,) + shape, lambda bb, k: (k,) + (0,) * len(shape))

    # ---- explicit, budgeted VMEM limit ----
    per_depth_bytes = 2 * (2 * D * 3 * D + 2 * D * D + 2 * D * hidden
                           + 2 * hidden * D + 4 * 8 * wmax)     # x2 double-buffered
    resident_bytes = (2 * 2 * M * cpp + 2 * cpp * D + 4 * M * D  # patches/pe_w/tok_bias
                      + 2 * D * npad + 4 * npad + 4 * 4 * D      # head + final norm
                      + 4 * M * D                                # resident token scratch
                      + 2 * 4 * bblk * npad)                     # output block
    act_bytes = 4 * M * (3 * D + hidden + 4 * D)                 # f32 intermediates
    vmem_limit = int(min(max(per_depth_bytes + resident_bytes + act_bytes
                             + (8 << 20), 32 << 20), 100 << 20))

    nbytes = lambda a: int(a.size * a.dtype.itemsize)
    flops = int(B * (2 * n_tok * cpp * D
                     + depth * (2 * n_tok * (4 * D * D + 2 * D * hidden)
                                + 4 * n_tok * n_tok * D)
                     + 2 * D * npad))
    transcendentals = int(B * depth * (num_heads * n_tok * n_tok + n_tok * hidden))
    bytes_accessed = int(nbytes(patches) + num_bb * nbytes(tok_bias)
                         + nbytes(prep["pe_w"])
                         + num_bb * (nbytes(prep["qkv_w"]) + nbytes(prep["proj_w"])
                                     + nbytes(prep["fc1_w"]) + nbytes(prep["fc2_w"])
                                     + nbytes(prep["vecs"]))
                         + nbytes(prep["head_w"]) + B * npad * 4)

    out = pl.pallas_call(
        kernel,
        grid=(num_bb, depth),
        out_shape=jax.ShapeDtypeStruct((num_bb, bblk, npad), jnp.float32),
        in_specs=[
            per_bb((M, cpp)),                       # patches (row 0/image = cls slot)
            full((cpp, D)),                         # pe_w
            full((M, D)),                           # tok_bias (cls/pos/pe_b, pre-tiled)
            per_depth((8, wmax)),                   # packed per-layer vectors
            per_depth((D, 3 * D)),                  # qkv_w
            per_depth((D, D)),                      # proj_w
            per_depth((D, hidden)),                 # fc1_w
            per_depth((hidden, D)),                 # fc2_w
            full((1, D)), full((1, D)),             # final norm gamma/beta
            full((D, npad)), full((1, npad)),       # head (padded to 128 lanes)
        ],
        out_specs=pl.BlockSpec((1, bblk, npad), lambda bb, k: (bb, 0, 0)),
        scratch_shapes=[pltpu.VMEM((M, D), jnp.float32)],   # resident token slab
        compiler_params=pltpu.CompilerParams(
            # TODO(synk): on v7x verify the batch-block axis actually splits
            # across the two TensorCores; if not, switch to pltpu.CORE_PARALLEL
            # (or pl.core_map) for an explicit 2-way split.
            dimension_semantics=("parallel", "arbitrary"),
            vmem_limit_bytes=vmem_limit),
        cost_estimate=pl.CostEstimate(flops=flops, transcendentals=transcendentals,
                                      bytes_accessed=bytes_accessed),
    )(patches, prep["pe_w"], tok_bias, prep["vecs"],
      prep["qkv_w"], prep["proj_w"], prep["fc1_w"], prep["fc2_w"],
      prep["norm_g"], prep["norm_b"], prep["head_w"], prep["head_b"])

    return out.reshape(B, npad)[:, :prep["n_classes"]]


# ----------------------------------- main -----------------------------------

if __name__ == "__main__":
    # Small synthetic config: 16x16 RGB images, 4x4 patches -> 16 patches,
    # embed_dim=32, 2 blocks, 4 heads, mlp hidden 64, 10 classes.
    # (Benchmark at real ViT shapes — D multiple of 128, Np ~ 197 — separately.)
    B, C, H, W = 2, 3, 16, 16
    PATCH, D, DEPTH, HEADS, MLP_H, N_CLASSES = 4, 32, 2, 4, 64, 10
    N_PATCHES = (H // PATCH) * (W // PATCH)

    root = jax.random.PRNGKey(0)
    k_x, k_p = jax.random.split(root)
    x = jax.random.normal(k_x, (B, C, H, W), dtype=jnp.float32)
    params = init_params(k_p, C=C, patch=PATCH, D=D, depth=DEPTH, heads=HEADS,
                         mlp_hidden=MLP_H, n_patches=N_PATCHES,
                         n_classes=N_CLASSES)
    prep = prepare_params(params, num_heads=HEADS)

    pred = mae_classifier_forward(prep, x, patch_size=PATCH, num_heads=HEADS)
    pred = jax.block_until_ready(pred)
    assert pred.shape == (B, N_CLASSES) and pred.dtype == jnp.float32
    print("KERNEL_OK")
</pallas_src>

<mosaic_0001>
module attributes {stable_mosaic.version = 11 : i64} {
  func.func @_mae_kernel(%arg0: i32, %arg1: i32, %arg2: memref<1x34x48xbf16, #tpu.memory_space<vmem>>, %arg3: memref<48x32xbf16, #tpu.memory_space<vmem>>, %arg4: memref<34x32xf32, #tpu.memory_space<vmem>>, %arg5: memref<1x8x96xf32, #tpu.memory_space<vmem>>, %arg6: memref<1x32x96xbf16, #tpu.memory_space<vmem>>, %arg7: memref<1x32x32xbf16, #tpu.memory_space<vmem>>, %arg8: memref<1x32x64xbf16, #tpu.memory_space<vmem>>, %arg9: memref<1x64x32xbf16, #tpu.memory_space<vmem>>, %arg10: memref<1x32xf32, #tpu.memory_space<vmem>>, %arg11: memref<1x32xf32, #tpu.memory_space<vmem>>, %arg12: memref<32x128xbf16, #tpu.memory_space<vmem>>, %arg13: memref<1x128xf32, #tpu.memory_space<vmem>>, %arg14: memref<1x2x128xf32, #tpu.memory_space<vmem>>, %arg15: memref<34x32xf32, #tpu.memory_space<vmem>>) attributes {dimension_semantics = [#tpu.dimension_semantics<parallel>, #tpu.dimension_semantics<arbitrary>], iteration_bounds = array<i64: 1, 2>, scalar_prefetch = 0 : i64, scratch_operands = 1 : i64, tpu.core_type = #tpu.core_type<tc>, window_params = [{transform_indices = @transform_0, window_bounds = array<i64: 1, 34, 48>}, {pipeline_mode = #tpu.pipeline_mode<synchronous>, transform_indices = @transform_1, window_bounds = array<i64: 48, 32>}, {pipeline_mode = #tpu.pipeline_mode<synchronous>, transform_indices = @transform_2, window_bounds = array<i64: 34, 32>}, {transform_indices = @transform_3, window_bounds = array<i64: 1, 8, 96>}, {transform_indices = @transform_4, window_bounds = array<i64: 1, 32, 96>}, {transform_indices = @transform_5, window_bounds = array<i64: 1, 32, 32>}, {transform_indices = @transform_6, window_bounds = array<i64: 1, 32, 64>}, {transform_indices = @transform_7, window_bounds = array<i64: 1, 64, 32>}, {pipeline_mode = #tpu.pipeline_mode<synchronous>, transform_indices = @transform_8, window_bounds = array<i64: 1, 32>}, {pipeline_mode = #tpu.pipeline_mode<synchronous>, transform_indices = @transform_9, window_bounds = array<i64: 1, 32>}, {pipeline_mode = #tpu.pipeline_mode<synchronous>, transform_indices = @transform_10, window_bounds = array<i64: 32, 128>}, {pipeline_mode = #tpu.pipeline_mode<synchronous>, transform_indices = @transform_11, window_bounds = array<i64: 1, 128>}, {transform_indices = @transform_12, window_bounds = array<i64: 1, 2, 128>}]} {
    %c0_i32 = arith.constant 0 : i32
    %0 = arith.cmpi eq, %arg1, %c0_i32 : i32
    %1 = arith.extui %0 : i1 to i32
    %c0_i32_0 = arith.constant 0 : i32
    %2 = arith.cmpi ne, %1, %c0_i32_0 : i32
    scf.if %2 {
      %c0_70 = arith.constant 0 : index
      %c0_71 = arith.constant 0 : index
      %c0_72 = arith.constant 0 : index
      %246 = vector.load %arg2[%c0_70, %c0_71, %c0_72] : memref<1x34x48xbf16, #tpu.memory_space<vmem>>, vector<1x34x48xbf16>
      %247 = vector.shape_cast %246 : vector<1x34x48xbf16> to vector<34x48xbf16>
      %c0_73 = arith.constant 0 : index
      %c0_74 = arith.constant 0 : index
      %248 = vector.load %arg3[%c0_73, %c0_74] : memref<48x32xbf16, #tpu.memory_space<vmem>>, vector<48x32xbf16>
      %cst_75 = arith.constant dense<0.000000e+00> : vector<34x32xf32>
      %249 = tpu.matmul %247, %248, %cst_75 {dimension_numbers = #tpu.dot_dimension_numbers<[1], [0], [0], [1], [0, 0, 1, 1], [], []>} : vector<34x48xbf16>, vector<48x32xbf16>, vector<34x32xf32> -> vector<34x32xf32>
      %c0_76 = arith.constant 0 : index
      %c0_77 = arith.constant 0 : index
      %250 = vector.load %arg4[%c0_76, %c0_77] : memref<34x32xf32, #tpu.memory_space<vmem>>, vector<34x32xf32>
      %251 = arith.addf %249, %250 : vector<34x32xf32>
      %c0_78 = arith.constant 0 : index
      %c0_79 = arith.constant 0 : index
      %252 = vector.load %arg15[%c0_78, %c0_79] : memref<34x32xf32, #tpu.memory_space<vmem>>, vector<34x32xf32>
      tpu.vector_store %arg15[%c0_78, %c0_79], %251 {strides = array<i32>} : memref<34x32xf32, #tpu.memory_space<vmem>>, vector<34x32xf32>,
    } else {
    }
    %c0 = arith.constant 0 : index
    %c0_1 = arith.constant 0 : index
    %3 = vector.load %arg15[%c0, %c0_1] : memref<34x32xf32, #tpu.memory_space<vmem>>, vector<34x32xf32>
    %c0_2 = arith.constant 0 : index
    %c0_3 = arith.constant 0 : index
    %c0_4 = arith.constant 0 : index
    %4 = vector.load %arg5[%c0_2, %c0_3, %c0_4] : memref<1x8x96xf32, #tpu.memory_space<vmem>>, vector<1x8x96xf32>
    %5 = vector.shape_cast %4 : vector<1x8x96xf32> to vector<8x96xf32>
    %6 = vector.extract_strided_slice %5 {offsets = [0, 0], sizes = [1, 32], strides = [1, 1]} : vector<8x96xf32> to vector<1x32xf32>
    %7 = vector.extract_strided_slice %5 {offsets = [1, 0], sizes = [1, 32], strides = [1, 1]} : vector<8x96xf32> to vector<1x32xf32>
    %8 = vector.extract_strided_slice %5 {offsets = [2, 0], sizes = [1, 96], strides = [1, 1]} : vector<8x96xf32> to vector<1x96xf32>
    %9 = vector.extract_strided_slice %5 {offsets = [3, 0], sizes = [1, 32], strides = [1, 1]} : vector<8x96xf32> to vector<1x32xf32>
    %10 = vector.extract_strided_slice %5 {offsets = [4, 0], sizes = [1, 32], strides = [1, 1]} : vector<8x96xf32> to vector<1x32xf32>
    %11 = vector.extract_strided_slice %5 {offsets = [5, 0], sizes = [1, 32], strides = [1, 1]} : vector<8x96xf32> to vector<1x32xf32>
    %12 = vector.extract_strided_slice %5 {offsets = [6, 0], sizes = [1, 64], strides = [1, 1]} : vector<8x96xf32> to vector<1x64xf32>
    %13 = vector.extract_strided_slice %5 {offsets = [7, 0], sizes = [1, 32], strides = [1, 1]} : vector<8x96xf32> to vector<1x32xf32>
    %cst = arith.constant dense<0.000000e+00> : vector<34xf32>
    %14 = vector.multi_reduction <add>, %3, %cst [1] : vector<34x32xf32> to vector<34xf32>
    %15 = vector.shape_cast %14 : vector<34xf32> to vector<34x1xf32>
    %cst_5 = arith.constant 3.200000e+01 : f32
    %16 = vector.broadcast %cst_5 : f32 to vector<34x1xf32>
    %17 = arith.divf %15, %16 : vector<34x1xf32>
    %18 = vector.broadcast %17 : vector<34x1xf32> to vector<34x32xf32>
    %19 = arith.subf %3, %18 : vector<34x32xf32>
    %20 = arith.mulf %19, %19 : vector<34x32xf32>
    %cst_6 = arith.constant dense<0.000000e+00> : vector<34xf32>
    %21 = vector.multi_reduction <add>, %20, %cst_6 [1] : vector<34x32xf32> to vector<34xf32>
    %22 = vector.shape_cast %21 : vector<34xf32> to vector<34x1xf32>
    %cst_7 = arith.constant 3.200000e+01 : f32
    %23 = vector.broadcast %cst_7 : f32 to vector<34x1xf32>
    %24 = arith.divf %22, %23 : vector<34x1xf32>
    %25 = vector.broadcast %17 : vector<34x1xf32> to vector<34x32xf32>
    %26 = arith.subf %3, %25 : vector<34x32xf32>
    %cst_8 = arith.constant 9.99999997E-7 : f32
    %27 = vector.broadcast %cst_8 : f32 to vector<34x1xf32>
    %28 = arith.addf %24, %27 : vector<34x1xf32>
    %29 = math.rsqrt %28 : vector<34x1xf32>
    %30 = vector.broadcast %29 : vector<34x1xf32> to vector<34x32xf32>
    %31 = arith.mulf %26, %30 : vector<34x32xf32>
    %32 = vector.broadcast %6 : vector<1x32xf32> to vector<34x32xf32>
    %33 = arith.mulf %31, %32 : vector<34x32xf32>
    %34 = vector.broadcast %7 : vector<1x32xf32> to vector<34x32xf32>
    %35 = arith.addf %33, %34 : vector<34x32xf32>
    %36 = arith.truncf %35 : vector<34x32xf32> to vector<34x32xbf16>
    %c0_9 = arith.constant 0 : index
    %c0_10 = arith.constant 0 : index
    %c0_11 = arith.constant 0 : index
    %37 = vector.load %arg6[%c0_9, %c0_10, %c0_11] : memref<1x32x96xbf16, #tpu.memory_space<vmem>>, vector<1x32x96xbf16>
    %38 = vector.shape_cast %37 : vector<1x32x96xbf16> to vector<32x96xbf16>
    %cst_12 = arith.constant dense<0.000000e+00> : vector<34x96xf32>
    %39 = tpu.matmul %36, %38, %cst_12 {dimension_numbers = #tpu.dot_dimension_numbers<[1], [0], [0], [1], [0, 0, 1, 1], [], []>} : vector<34x32xbf16>, vector<32x96xbf16>, vector<34x96xf32> -> vector<34x96xf32>
    %40 = vector.broadcast %8 : vector<1x96xf32> to vector<34x96xf32>
    %41 = arith.addf %39, %40 : vector<34x96xf32>
    %42 = vector.extract_strided_slice %41 {offsets = [0, 0], sizes = [34, 32], strides = [1, 1]} : vector<34x96xf32> to vector<34x32xf32>
    %cst_13 = arith.constant 0.353553385 : f32
    %43 = vector.broadcast %cst_13 : f32 to vector<34x32xf32>
    %44 = arith.mulf %42, %43 : vector<34x32xf32>
    %45 = arith.truncf %44 : vector<34x32xf32> to vector<34x32xbf16>
    %46 = vector.extract_strided_slice %41 {offsets = [0, 32], sizes = [34, 32], strides = [1, 1]} : vector<34x96xf32> to vector<34x32xf32>
    %47 = arith.truncf %46 : vector<34x32xf32> to vector<34x32xbf16>
    %48 = vector.extract_strided_slice %41 {offsets = [0, 64], sizes = [34, 32], strides = [1, 1]} : vector<34x96xf32> to vector<34x32xf32>
    %49 = arith.truncf %48 : vector<34x32xf32> to vector<34x32xbf16>
    %50 = vector.extract_strided_slice %45 {offsets = [0, 0], sizes = [17, 32], strides = [1, 1]} : vector<34x32xbf16> to vector<17x32xbf16>
    %51 = vector.extract_strided_slice %47 {offsets = [0, 0], sizes = [17, 32], strides = [1, 1]} : vector<34x32xbf16> to vector<17x32xbf16>
    %52 = vector.extract_strided_slice %49 {offsets = [0, 0], sizes = [17, 32], strides = [1, 1]} : vector<34x32xbf16> to vector<17x32xbf16>
    %53 = vector.extract_strided_slice %50 {offsets = [0, 0], sizes = [17, 8], strides = [1, 1]} : vector<17x32xbf16> to vector<17x8xbf16>
    %54 = vector.extract_strided_slice %51 {offsets = [0, 0], sizes = [17, 8], strides = [1, 1]} : vector<17x32xbf16> to vector<17x8xbf16>
    %cst_14 = arith.constant dense<0.000000e+00> : vector<17x17xf32>
    %55 = tpu.matmul %53, %54, %cst_14 {dimension_numbers = #tpu.dot_dimension_numbers<[1], [1], [0], [0], [0, 0, 1, 0], [], []>} : vector<17x8xbf16>, vector<17x8xbf16>, vector<17x17xf32> -> vector<17x17xf32>
    %cst_15 = arith.constant dense<0xFF800000> : vector<17xf32>
    %56 = vector.multi_reduction <maximumf>, %55, %cst_15 [1] : vector<17x17xf32> to vector<17xf32>
    %57 = vector.shape_cast %56 : vector<17xf32> to vector<17x1xf32>
    %58 = vector.broadcast %57 : vector<17x1xf32> to vector<17x17xf32>
    %59 = arith.subf %55, %58 : vector<17x17xf32>
    %60 = math.exp %59 : vector<17x17xf32>
    %cst_16 = arith.constant dense<0.000000e+00> : vector<17xf32>
    %61 = vector.multi_reduction <add>, %60, %cst_16 [1] : vector<17x17xf32> to vector<17xf32>
    %62 = vector.shape_cast %61 : vector<17xf32> to vector<17x1xf32>
    %63 = tpu.reciprocal %62 {approx = true} : vector<17x1xf32> -> vector<17x1xf32>
    %64 = vector.broadcast %63 : vector<17x1xf32> to vector<17x17xf32>
    %65 = arith.mulf %60, %64 : vector<17x17xf32>
    %66 = arith.truncf %65 : vector<17x17xf32> to vector<17x17xbf16>
    %67 = vector.extract_strided_slice %52 {offsets = [0, 0], sizes = [17, 8], strides = [1, 1]} : vector<17x32xbf16> to vector<17x8xbf16>
    %cst_17 = arith.constant dense<0.000000e+00> : vector<17x8xf32>
    %68 = tpu.matmul %66, %67, %cst_17 {dimension_numbers = #tpu.dot_dimension_numbers<[1], [0], [0], [1], [0, 0, 1, 1], [], []>} : vector<17x17xbf16>, vector<17x8xbf16>, vector<17x8xf32> -> vector<17x8xf32>
    %69 = vector.extract_strided_slice %50 {offsets = [0, 8], sizes = [17, 8], strides = [1, 1]} : vector<17x32xbf16> to vector<17x8xbf16>
    %70 = vector.extract_strided_slice %51 {offsets = [0, 8], sizes = [17, 8], strides = [1, 1]} : vector<17x32xbf16> to vector<17x8xbf16>
    %cst_18 = arith.constant dense<0.000000e+00> : vector<17x17xf32>
    %71 = tpu.matmul %69, %70, %cst_18 {dimension_numbers = #tpu.dot_dimension_numbers<[1], [1], [0], [0], [0, 0, 1, 0], [], []>} : vector<17x8xbf16>, vector<17x8xbf16>, vector<17x17xf32> -> vector<17x17xf32>
    %cst_19 = arith.constant dense<0xFF800000> : vector<17xf32>
    %72 = vector.multi_reduction <maximumf>, %71, %cst_19 [1] : vector<17x17xf32> to vector<17xf32>
    %73 = vector.shape_cast %72 : vector<17xf32> to vector<17x1xf32>
    %74 = vector.broadcast %73 : vector<17x1xf32> to vector<17x17xf32>
    %75 = arith.subf %71, %74 : vector<17x17xf32>
    %76 = math.exp %75 : vector<17x17xf32>
    %cst_20 = arith.constant dense<0.000000e+00> : vector<17xf32>
    %77 = vector.multi_reduction <add>, %76, %cst_20 [1] : vector<17x17xf32> to vector<17xf32>
    %78 = vector.shape_cast %77 : vector<17xf32> to vector<17x1xf32>
    %79 = tpu.reciprocal %78 {approx = true} : vector<17x1xf32> -> vector<17x1xf32>
    %80 = vector.broadcast %79 : vector<17x1xf32> to vector<17x17xf32>
    %81 = arith.mulf %76, %80 : vector<17x17xf32>
    %82 = arith.truncf %81 : vector<17x17xf32> to vector<17x17xbf16>
    %83 = vector.extract_strided_slice %52 {offsets = [0, 8], sizes = [17, 8], strides = [1, 1]} : vector<17x32xbf16> to vector<17x8xbf16>
    %cst_21 = arith.constant dense<0.000000e+00> : vector<17x8xf32>
    %84 = tpu.matmul %82, %83, %cst_21 {dimension_numbers = #tpu.dot_dimension_numbers<[1], [0], [0], [1], [0, 0, 1, 1], [], []>} : vector<17x17xbf16>, vector<17x8xbf16>, vector<17x8xf32> -> vector<17x8xf32>
    %85 = vector.extract_strided_slice %50 {offsets = [0, 16], sizes = [17, 8], strides = [1, 1]} : vector<17x32xbf16> to vector<17x8xbf16>
    %86 = vector.extract_strided_slice %51 {offsets = [0, 16], sizes = [17, 8], strides = [1, 1]} : vector<17x32xbf16> to vector<17x8xbf16>
    %cst_22 = arith.constant dense<0.000000e+00> : vector<17x17xf32>
    %87 = tpu.matmul %85, %86, %cst_22 {dimension_numbers = #tpu.dot_dimension_numbers<[1], [1], [0], [0], [0, 0, 1, 0], [], []>} : vector<17x8xbf16>, vector<17x8xbf16>, vector<17x17xf32> -> vector<17x17xf32>
    %cst_23 = arith.constant dense<0xFF800000> : vector<17xf32>
    %88 = vector.multi_reduction <maximumf>, %87, %cst_23 [1] : vector<17x17xf32> to vector<17xf32>
    %89 = vector.shape_cast %88 : vector<17xf32> to vector<17x1xf32>
    %90 = vector.broadcast %89 : vector<17x1xf32> to vector<17x17xf32>
    %91 = arith.subf %87, %90 : vector<17x17xf32>
    %92 = math.exp %91 : vector<17x17xf32>
    %cst_24 = arith.constant dense<0.000000e+00> : vector<17xf32>
    %93 = vector.multi_reduction <add>, %92, %cst_24 [1] : vector<17x17xf32> to vector<17xf32>
    %94 = vector.shape_cast %93 : vector<17xf32> to vector<17x1xf32>
    %95 = tpu.reciprocal %94 {approx = true} : vector<17x1xf32> -> vector<17x1xf32>
    %96 = vector.broadcast %95 : vector<17x1xf32> to vector<17x17xf32>
    %97 = arith.mulf %92, %96 : vector<17x17xf32>
    %98 = arith.truncf %97 : vector<17x17xf32> to vector<17x17xbf16>
    %99 = vector.extract_strided_slice %52 {offsets = [0, 16], sizes = [17, 8], strides = [1, 1]} : vector<17x32xbf16> to vector<17x8xbf16>
    %cst_25 = arith.constant dense<0.000000e+00> : vector<17x8xf32>
    %100 = tpu.matmul %98, %99, %cst_25 {dimension_numbers = #tpu.dot_dimension_numbers<[1], [0], [0], [1], [0, 0, 1, 1], [], []>} : vector<17x17xbf16>, vector<17x8xbf16>, vector<17x8xf32> -> vector<17x8xf32>
    %101 = vector.extract_strided_slice %50 {offsets = [0, 24], sizes = [17, 8], strides = [1, 1]} : vector<17x32xbf16> to vector<17x8xbf16>
    %102 = vector.extract_strided_slice %51 {offsets = [0, 24], sizes = [17, 8], strides = [1, 1]} : vector<17x32xbf16> to vector<17x8xbf16>
    %cst_26 = arith.constant dense<0.000000e+00> : vector<17x17xf32>
    %103 = tpu.matmul %101, %102, %cst_26 {dimension_numbers = #tpu.dot_dimension_numbers<[1], [1], [0], [0], [0, 0, 1, 0], [], []>} : vector<17x8xbf16>, vector<17x8xbf16>, vector<17x17xf32> -> vector<17x17xf32>
    %cst_27 = arith.constant dense<0xFF800000> : vector<17xf32>
    %104 = vector.multi_reduction <maximumf>, %103, %cst_27 [1] : vector<17x17xf32> to vector<17xf32>
    %105 = vector.shape_cast %104 : vector<17xf32> to vector<17x1xf32>
    %106 = vector.broadcast %105 : vector<17x1xf32> to vector<17x17xf32>
    %107 = arith.subf %103, %106 : vector<17x17xf32>
    %108 = math.exp %107 : vector<17x17xf32>
    %cst_28 = arith.constant dense<0.000000e+00> : vector<17xf32>
    %109 = vector.multi_reduction <add>, %108, %cst_28 [1] : vector<17x17xf32> to vector<17xf32>
    %110 = vector.shape_cast %109 : vector<17xf32> to vector<17x1xf32>
    %111 = tpu.reciprocal %110 {approx = true} : vector<17x1xf32> -> vector<17x1xf32>
    %112 = vector.broadcast %111 : vector<17x1xf32> to vector<17x17xf32>
    %113 = arith.mulf %108, %112 : vector<17x17xf32>
    %114 = arith.truncf %113 : vector<17x17xf32> to vector<17x17xbf16>
    %115 = vector.extract_strided_slice %52 {offsets = [0, 24], sizes = [17, 8], strides = [1, 1]} : vector<17x32xbf16> to vector<17x8xbf16>
    %cst_29 = arith.constant dense<0.000000e+00> : vector<17x8xf32>
    %116 = tpu.matmul %114, %115, %cst_29 {dimension_numbers = #tpu.dot_dimension_numbers<[1], [0], [0], [1], [0, 0, 1, 1], [], []>} : vector<17x17xbf16>, vector<17x8xbf16>, vector<17x8xf32> -> vector<17x8xf32>
    %117 = tpu.concatenate %68, %84, %100, %116 in 1 : vector<17x8xf32>, vector<17x8xf32>, vector<17x8xf32>, vector<17x8xf32> -> vector<17x32xf32>
    %118 = vector.extract_strided_slice %45 {offsets = [17, 0], sizes = [17, 32], strides = [1, 1]} : vector<34x32xbf16> to vector<17x32xbf16>
    %119 = vector.extract_strided_slice %47 {offsets = [17, 0], sizes = [17, 32], strides = [1, 1]} : vector<34x32xbf16> to vector<17x32xbf16>
    %120 = vector.extract_strided_slice %49 {offsets = [17, 0], sizes = [17, 32], strides = [1, 1]} : vector<34x32xbf16> to vector<17x32xbf16>
    %121 = vector.extract_strided_slice %118 {offsets = [0, 0], sizes = [17, 8], strides = [1, 1]} : vector<17x32xbf16> to vector<17x8xbf16>
    %122 = vector.extract_strided_slice %119 {offsets = [0, 0], sizes = [17, 8], strides = [1, 1]} : vector<17x32xbf16> to vector<17x8xbf16>
    %cst_30 = arith.constant dense<0.000000e+00> : vector<17x17xf32>
    %123 = tpu.matmul %121, %122, %cst_30 {dimension_numbers = #tpu.dot_dimension_numbers<[1], [1], [0], [0], [0, 0, 1, 0], [], []>} : vector<17x8xbf16>, vector<17x8xbf16>, vector<17x17xf32> -> vector<17x17xf32>
    %cst_31 = arith.constant dense<0xFF800000> : vector<17xf32>
    %124 = vector.multi_reduction <maximumf>, %123, %cst_31 [1] : vector<17x17xf32> to vector<17xf32>
    %125 = vector.shape_cast %124 : vector<17xf32> to vector<17x1xf32>
    %126 = vector.broadcast %125 : vector<17x1xf32> to vector<17x17xf32>
    %127 = arith.subf %123, %126 : vector<17x17xf32>
    %128 = math.exp %127 : vector<17x17xf32>
    %cst_32 = arith.constant dense<0.000000e+00> : vector<17xf32>
    %129 = vector.multi_reduction <add>, %128, %cst_32 [1] : vector<17x17xf32> to vector<17xf32>
    %130 = vector.shape_cast %129 : vector<17xf32> to vector<17x1xf32>
    %131 = tpu.reciprocal %130 {approx = true} : vector<17x1xf32> -> vector<17x1xf32>
    %132 = vector.broadcast %131 : vector<17x1xf32> to vector<17x17xf32>
    %133 = arith.mulf %128, %132 : vector<17x17xf32>
    %134 = arith.truncf %133 : vector<17x17xf32> to vector<17x17xbf16>
    %135 = vector.extract_strided_slice %120 {offsets = [0, 0], sizes = [17, 8], strides = [1, 1]} : vector<17x32xbf16> to vector<17x8xbf16>
    %cst_33 = arith.constant dense<0.000000e+00> : vector<17x8xf32>
    %136 = tpu.matmul %134, %135, %cst_33 {dimension_numbers = #tpu.dot_dimension_numbers<[1], [0], [0], [1], [0, 0, 1, 1], [], []>} : vector<17x17xbf16>, vector<17x8xbf16>, vector<17x8xf32> -> vector<17x8xf32>
    %137 = vector.extract_strided_slice %118 {offsets = [0, 8], sizes = [17, 8], strides = [1, 1]} : vector<17x32xbf16> to vector<17x8xbf16>
    %138 = vector.extract_strided_slice %119 {offsets = [0, 8], sizes = [17, 8], strides = [1, 1]} : vector<17x32xbf16> to vector<17x8xbf16>
    %cst_34 = arith.constant dense<0.000000e+00> : vector<17x17xf32>
    %139 = tpu.matmul %137, %138, %cst_34 {dimension_numbers = #tpu.dot_dimension_numbers<[1], [1], [0], [0], [0, 0, 1, 0], [], []>} : vector<17x8xbf16>, vector<17x8xbf16>, vector<17x17xf32> -> vector<17x17xf32>
    %cst_35 = arith.constant dense<0xFF800000> : vector<17xf32>
    %140 = vector.multi_reduction <maximumf>, %139, %cst_35 [1] : vector<17x17xf32> to vector<17xf32>
    %141 = vector.shape_cast %140 : vector<17xf32> to vector<17x1xf32>
    %142 = vector.broadcast %141 : vector<17x1xf32> to vector<17x17xf32>
    %143 = arith.subf %139, %142 : vector<17x17xf32>
    %144 = math.exp %143 : vector<17x17xf32>
    %cst_36 = arith.constant dense<0.000000e+00> : vector<17xf32>
    %145 = vector.multi_reduction <add>, %144, %cst_36 [1] : vector<17x17xf32> to vector<17xf32>
    %146 = vector.shape_cast %145 : vector<17xf32> to vector<17x1xf32>
    %147 = tpu.reciprocal %146 {approx = true} : vector<17x1xf32> -> vector<17x1xf32>
    %148 = vector.broadcast %147 : vector<17x1xf32> to vector<17x17xf32>
    %149 = arith.mulf %144, %148 : vector<17x17xf32>
    %150 = arith.truncf %149 : vector<17x17xf32> to vector<17x17xbf16>
    %151 = vector.extract_strided_slice %120 {offsets = [0, 8], sizes = [17, 8], strides = [1, 1]} : vector<17x32xbf16> to vector<17x8xbf16>
    %cst_37 = arith.constant dense<0.000000e+00> : vector<17x8xf32>
    %152 = tpu.matmul %150, %151, %cst_37 {dimension_numbers = #tpu.dot_dimension_numbers<[1], [0], [0], [1], [0, 0, 1, 1], [], []>} : vector<17x17xbf16>, vector<17x8xbf16>, vector<17x8xf32> -> vector<17x8xf32>
    %153 = vector.extract_strided_slice %118 {offsets = [0, 16], sizes = [17, 8], strides = [1, 1]} : vector<17x32xbf16> to vector<17x8xbf16>
    %154 = vector.extract_strided_slice %119 {offsets = [0, 16], sizes = [17, 8], strides = [1, 1]} : vector<17x32xbf16> to vector<17x8xbf16>
    %cst_38 = arith.constant dense<0.000000e+00> : vector<17x17xf32>
    %155 = tpu.matmul %153, %154, %cst_38 {dimension_numbers = #tpu.dot_dimension_numbers<[1], [1], [0], [0], [0, 0, 1, 0], [], []>} : vector<17x8xbf16>, vector<17x8xbf16>, vector<17x17xf32> -> vector<17x17xf32>
    %cst_39 = arith.constant dense<0xFF800000> : vector<17xf32>
    %156 = vector.multi_reduction <maximumf>, %155, %cst_39 [1] : vector<17x17xf32> to vector<17xf32>
    %157 = vector.shape_cast %156 : vector<17xf32> to vector<17x1xf32>
    %158 = vector.broadcast %157 : vector<17x1xf32> to vector<17x17xf32>
    %159 = arith.subf %155, %158 : vector<17x17xf32>
    %160 = math.exp %159 : vector<17x17xf32>
    %cst_40 = arith.constant dense<0.000000e+00> : vector<17xf32>
    %161 = vector.multi_reduction <add>, %160, %cst_40 [1] : vector<17x17xf32> to vector<17xf32>
    %162 = vector.shape_cast %161 : vector<17xf32> to vector<17x1xf32>
    %163 = tpu.reciprocal %162 {approx = true} : vector<17x1xf32> -> vector<17x1xf32>
    %164 = vector.broadcast %163 : vector<17x1xf32> to vector<17x17xf32>
    %165 = arith.mulf %160, %164 : vector<17x17xf32>
    %166 = arith.truncf %165 : vector<17x17xf32> to vector<17x17xbf16>
    %167 = vector.extract_strided_slice %120 {offsets = [0, 16], sizes = [17, 8], strides = [1, 1]} : vector<17x32xbf16> to vector<17x8xbf16>
    %cst_41 = arith.constant dense<0.000000e+00> : vector<17x8xf32>
    %168 = tpu.matmul %166, %167, %cst_41 {dimension_numbers = #tpu.dot_dimension_numbers<[1], [0], [0], [1], [0, 0, 1, 1], [], []>} : vector<17x17xbf16>, vector<17x8xbf16>, vector<17x8xf32> -> vector<17x8xf32>
    %169 = vector.extract_strided_slice %118 {offsets = [0, 24], sizes = [17, 8], strides = [1, 1]} : vector<17x32xbf16> to vector<17x8xbf16>
    %170 = vector.extract_strided_slice %119 {offsets = [0, 24], sizes = [17, 8], strides = [1, 1]} : vector<17x32xbf16> to vector<17x8xbf16>
    %cst_42 = arith.constant dense<0.000000e+00> : vector<17x17xf32>
    %171 = tpu.matmul %169, %170, %cst_42 {dimension_numbers = #tpu.dot_dimension_numbers<[1], [1], [0], [0], [0, 0, 1, 0], [], []>} : vector<17x8xbf16>, vector<17x8xbf16>, vector<17x17xf32> -> vector<17x17xf32>
    %cst_43 = arith.constant dense<0xFF800000> : vector<17xf32>
    %172 = vector.multi_reduction <maximumf>, %171, %cst_43 [1] : vector<17x17xf32> to vector<17xf32>
    %173 = vector.shape_cast %172 : vector<17xf32> to vector<17x1xf32>
    %174 = vector.broadcast %173 : vector<17x1xf32> to vector<17x17xf32>
    %175 = arith.subf %171, %174 : vector<17x17xf32>
    %176 = math.exp %175 : vector<17x17xf32>
    %cst_44 = arith.constant dense<0.000000e+00> : vector<17xf32>
    %177 = vector.multi_reduction <add>, %176, %cst_44 [1] : vector<17x17xf32> to vector<17xf32>
    %178 = vector.shape_cast %177 : vector<17xf32> to vector<17x1xf32>
    %179 = tpu.reciprocal %178 {approx = true} : vector<17x1xf32> -> vector<17x1xf32>
    %180 = vector.broadcast %179 : vector<17x1xf32> to vector<17x17xf32>
    %181 = arith.mulf %176, %180 : vector<17x17xf32>
    %182 = arith.truncf %181 : vector<17x17xf32> to vector<17x17xbf16>
    %183 = vector.extract_strided_slice %120 {offsets = [0, 24], sizes = [17, 8], strides = [1, 1]} : vector<17x32xbf16> to vector<17x8xbf16>
    %cst_45 = arith.constant dense<0.000000e+00> : vector<17x8xf32>
    %184 = tpu.matmul %182, %183, %cst_45 {dimension_numbers = #tpu.dot_dimension_numbers<[1], [0], [0], [1], [0, 0, 1, 1], [], []>} : vector<17x17xbf16>, vector<17x8xbf16>, vector<17x8xf32> -> vector<17x8xf32>
    %185 = tpu.concatenate %136, %152, %168, %184 in 1 : vector<17x8xf32>, vector<17x8xf32>, vector<17x8xf32>, vector<17x8xf32> -> vector<17x32xf32>
    %186 = tpu.concatenate %117, %185 in 0 : vector<17x32xf32>, vector<17x32xf32> -> vector<34x32xf32>
    %187 = arith.truncf %186 : vector<34x32xf32> to vector<34x32xbf16>
    %c0_46 = arith.constant 0 : index
    %c0_47 = arith.constant 0 : index
    %c0_48 = arith.constant 0 : index
    %188 = vector.load %arg7[%c0_46, %c0_47, %c0_48] : memref<1x32x32xbf16, #tpu.memory_space<vmem>>, vector<1x32x32xbf16>
    %189 = vector.shape_cast %188 : vector<1x32x32xbf16> to vector<32x32xbf16>
    %cst_49 = arith.constant dense<0.000000e+00> : vector<34x32xf32>
    %190 = tpu.matmul %187, %189, %cst_49 {dimension_numbers = #tpu.dot_dimension_numbers<[1], [0], [0], [1], [0, 0, 1, 1], [], []>} : vector<34x32xbf16>, vector<32x32xbf16>, vector<34x32xf32> -> vector<34x32xf32>
    %191 = arith.addf %3, %190 : vector<34x32xf32>
    %192 = vector.broadcast %9 : vector<1x32xf32> to vector<34x32xf32>
    %193 = arith.addf %191, %192 : vector<34x32xf32>
    %cst_50 = arith.constant dense<0.000000e+00> : vector<34xf32>
    %194 = vector.multi_reduction <add>, %193, %cst_50 [1] : vector<34x32xf32> to vector<34xf32>
    %195 = vector.shape_cast %194 : vector<34xf32> to vector<34x1xf32>
    %cst_51 = arith.constant 3.200000e+01 : f32
    %196 = vector.broadcast %cst_51 : f32 to vector<34x1xf32>
    %197 = arith.divf %195, %196 : vector<34x1xf32>
    %198 = vector.broadcast %197 : vector<34x1xf32> to vector<34x32xf32>
    %199 = arith.subf %193, %198 : vector<34x32xf32>
    %200 = arith.mulf %199, %199 : vector<34x32xf32>
    %cst_52 = arith.constant dense<0.000000e+00> : vector<34xf32>
    %201 = vector.multi_reduction <add>, %200, %cst_52 [1] : vector<34x32xf32> to vector<34xf32>
    %202 = vector.shape_cast %201 : vector<34xf32> to vector<34x1xf32>
    %cst_53 = arith.constant 3.200000e+01 : f32
    %203 = vector.broadcast %cst_53 : f32 to vector<34x1xf32>
    %204 = arith.divf %202, %203 : vector<34x1xf32>
    %205 = vector.broadcast %197 : vector<34x1xf32> to vector<34x32xf32>
    %206 = arith.subf %193, %205 : vector<34x32xf32>
    %cst_54 = arith.constant 9.99999997E-7 : f32
    %207 = vector.broadcast %cst_54 : f32 to vector<34x1xf32>
    %208 = arith.addf %204, %207 : vector<34x1xf32>
    %209 = math.rsqrt %208 : vector<34x1xf32>
    %210 = vector.broadcast %209 : vector<34x1xf32> to vector<34x32xf32>
    %211 = arith.mulf %206, %210 : vector<34x32xf32>
    %212 = vector.broadcast %10 : vector<1x32xf32> to vector<34x32xf32>
    %213 = arith.mulf %211, %212 : vector<34x32xf32>
    %214 = vector.broadcast %11 : vector<1x32xf32> to vector<34x32xf32>
    %215 = arith.addf %213, %214 : vector<34x32xf32>
    %216 = arith.truncf %215 : vector<34x32xf32> to vector<34x32xbf16>
    %c0_55 = arith.constant 0 : index
    %c0_56 = arith.constant 0 : index
    %c0_57 = arith.constant 0 : index
    %217 = vector.load %arg8[%c0_55, %c0_56, %c0_57] : memref<1x32x64xbf16, #tpu.memory_space<vmem>>, vector<1x32x64xbf16>
    %218 = vector.shape_cast %217 : vector<1x32x64xbf16> to vector<32x64xbf16>
    %cst_58 = arith.constant dense<0.000000e+00> : vector<34x64xf32>
    %219 = tpu.matmul %216, %218, %cst_58 {dimension_numbers = #tpu.dot_dimension_numbers<[1], [0], [0], [1], [0, 0, 1, 1], [], []>} : vector<34x32xbf16>, vector<32x64xbf16>, vector<34x64xf32> -> vector<34x64xf32>
    %220 = vector.broadcast %12 : vector<1x64xf32> to vector<34x64xf32>
    %221 = arith.addf %219, %220 : vector<34x64xf32>
    %222 = arith.mulf %221, %221 : vector<34x64xf32>
    %223 = arith.mulf %221, %222 : vector<34x64xf32>
    %cst_59 = arith.constant 4.471500e-02 : f32
    %224 = vector.broadcast %cst_59 : f32 to vector<34x64xf32>
    %225 = arith.mulf %224, %223 : vector<34x64xf32>
    %226 = arith.addf %221, %225 : vector<34x64xf32>
    %cst_60 = arith.constant 0.797884583 : f32
    %227 = vector.broadcast %cst_60 : f32 to vector<34x64xf32>
    %228 = arith.mulf %227, %226 : vector<34x64xf32>
    %229 = math.tanh %228 : vector<34x64xf32>
    %cst_61 = arith.constant 1.000000e+00 : f32
    %230 = vector.broadcast %cst_61 : f32 to vector<34x64xf32>
    %231 = arith.addf %230, %229 : vector<34x64xf32>
    %cst_62 = arith.constant 5.000000e-01 : f32
    %232 = vector.broadcast %cst_62 : f32 to vector<34x64xf32>
    %233 = arith.mulf %232, %231 : vector<34x64xf32>
    %234 = arith.mulf %221, %233 : vector<34x64xf32>
    %235 = arith.truncf %234 : vector<34x64xf32> to vector<34x64xbf16>
    %c0_63 = arith.constant 0 : index
    %c0_64 = arith.constant 0 : index
    %c0_65 = arith.constant 0 : index
    %236 = vector.load %arg9[%c0_63, %c0_64, %c0_65] : memref<1x64x32xbf16, #tpu.memory_space<vmem>>, vector<1x64x32xbf16>
    %237 = vector.shape_cast %236 : vector<1x64x32xbf16> to vector<64x32xbf16>
    %cst_66 = arith.constant dense<0.000000e+00> : vector<34x32xf32>
    %238 = tpu.matmul %235, %237, %cst_66 {dimension_numbers = #tpu.dot_dimension_numbers<[1], [0], [0], [1], [0, 0, 1, 1], [], []>} : vector<34x64xbf16>, vector<64x32xbf16>, vector<34x32xf32> -> vector<34x32xf32>
    %239 = vector.broadcast %13 : vector<1x32xf32> to vector<34x32xf32>
    %240 = arith.addf %238, %239 : vector<34x32xf32>
    %241 = arith.addf %193, %240 : vector<34x32xf32>
    %c0_67 = arith.constant 0 : index
    %c0_68 = arith.constant 0 : index
    %242 = vector.load %arg15[%c0_67, %c0_68] : memref<34x32xf32, #tpu.memory_space<vmem>>, vector<34x32xf32>
    tpu.vector_store %arg15[%c0_67, %c0_68], %241 {strides = array<i32>} : memref<34x32xf32, #tpu.memory_space<vmem>>, vector<34x32xf32>,
    %c1_i32 = arith.constant 1 : i32
    %243 = arith.cmpi eq, %arg1, %c1_i32 : i32
    %244 = arith.extui %243 : i1 to i32
    %c0_i32_69 = arith.constant 0 : i32
    %245 = arith.cmpi ne, %244, %c0_i32_69 : i32
    scf.if %245 {
      %246 = vector.extract_strided_slice %241 {offsets = [0, 0], sizes = [1, 32], strides = [1, 1]} : vector<34x32xf32> to vector<1x32xf32>
      %247 = vector.extract_strided_slice %241 {offsets = [17, 0], sizes = [1, 32], strides = [1, 1]} : vector<34x32xf32> to vector<1x32xf32>
      %248 = tpu.concatenate %246, %247 in 0 : vector<1x32xf32>, vector<1x32xf32> -> vector<2x32xf32>
      %c0_70 = arith.constant 0 : index
      %c0_71 = arith.constant 0 : index
      %249 = vector.load %arg10[%c0_70, %c0_71] : memref<1x32xf32, #tpu.memory_space<vmem>>, vector<1x32xf32>
      %c0_72 = arith.constant 0 : index
      %c0_73 = arith.constant 0 : index
      %250 = vector.load %arg11[%c0_72, %c0_73] : memref<1x32xf32, #tpu.memory_space<vmem>>, vector<1x32xf32>
      %cst_74 = arith.constant dense<0.000000e+00> : vector<2xf32>
      %251 = vector.multi_reduction <add>, %248, %cst_74 [1] : vector<2x32xf32> to vector<2xf32>
      %252 = vector.shape_cast %251 : vector<2xf32> to vector<2x1xf32>
      %cst_75 = arith.constant 3.200000e+01 : f32
      %253 = vector.broadcast %cst_75 : f32 to vector<2x1xf32>
      %254 = arith.divf %252, %253 : vector<2x1xf32>
      %255 = vector.broadcast %254 : vector<2x1xf32> to vector<2x32xf32>
      %256 = arith.subf %248, %255 : vector<2x32xf32>
      %257 = arith.mulf %256, %256 : vector<2x32xf32>
      %cst_76 = arith.constant dense<0.000000e+00> : vector<2xf32>
      %258 = vector.multi_reduction <add>, %257, %cst_76 [1] : vector<2x32xf32> to vector<2xf32>
      %259 = vector.shape_cast %258 : vector<2xf32> to vector<2x1xf32>
      %cst_77 = arith.constant 3.200000e+01 : f32
      %260 = vector.broadcast %cst_77 : f32 to vector<2x1xf32>
      %261 = arith.divf %259, %260 : vector<2x1xf32>
      %262 = vector.broadcast %254 : vector<2x1xf32> to vector<2x32xf32>
      %263 = arith.subf %248, %262 : vector<2x32xf32>
      %cst_78 = arith.constant 9.99999997E-7 : f32
      %264 = vector.broadcast %cst_78 : f32 to vector<2x1xf32>
      %265 = arith.addf %261, %264 : vector<2x1xf32>
      %266 = math.rsqrt %265 : vector<2x1xf32>
      %267 = vector.broadcast %266 : vector<2x1xf32> to vector<2x32xf32>
      %268 = arith.mulf %263, %267 : vector<2x32xf32>
      %269 = vector.broadcast %249 : vector<1x32xf32> to vector<2x32xf32>
      %270 = arith.mulf %268, %269 : vector<2x32xf32>
      %271 = vector.broadcast %250 : vector<1x32xf32> to vector<2x32xf32>
      %272 = arith.addf %270, %271 : vector<2x32xf32>
      %273 = arith.truncf %272 : vector<2x32xf32> to vector<2x32xbf16>
      %c0_79 = arith.constant 0 : index
      %c0_80 = arith.constant 0 : index
      %274 = vector.load %arg12[%c0_79, %c0_80] : memref<32x128xbf16, #tpu.memory_space<vmem>>, vector<32x128xbf16>
      %cst_81 = arith.constant dense<0.000000e+00> : vector<2x128xf32>
      %275 = tpu.matmul %273, %274, %cst_81 {dimension_numbers = #tpu.dot_dimension_numbers<[1], [0], [0], [1], [0, 0, 1, 1], [], []>} : vector<2x32xbf16>, vector<32x128xbf16>, vector<2x128xf32> -> vector<2x128xf32>
      %c0_82 = arith.constant 0 : index
      %c0_83 = arith.constant 0 : index
      %276 = vector.load %arg13[%c0_82, %c0_83] : memref<1x128xf32, #tpu.memory_space<vmem>>, vector<1x128xf32>
      %277 = vector.broadcast %276 : vector<1x128xf32> to vector<2x128xf32>
      %278 = arith.addf %275, %277 : vector<2x128xf32>
      %c0_84 = arith.constant 0 : index
      %c0_85 = arith.constant 0 : index
      %c0_86 = arith.constant 0 : index
      %279 = vector.load %arg14[%c0_84, %c0_85, %c0_86] : memref<1x2x128xf32, #tpu.memory_space<vmem>>, vector<1x2x128xf32>
      %280 = vector.shape_cast %279 : vector<1x2x128xf32> to vector<2x128xf32>
      %281 = vector.shape_cast %278 : vector<2x128xf32> to vector<1x2x128xf32>
      tpu.vector_store %arg14[%c0_84, %c0_85, %c0_86], %281 {strides = array<i32>} : memref<1x2x128xf32, #tpu.memory_space<vmem>>, vector<1x2x128xf32>,
    } else {
    }
    return
  }
  func.func @transform_0(%arg0: i32, %arg1: i32) -> (i32, i32, i32) {
    %c0_i32 = arith.constant 0 : i32
    %c0_i32_0 = arith.constant 0 : i32
    %c0_i32_1 = arith.constant 0 : i32
    return %arg0, %c0_i32, %c0_i32_0 : i32, i32, i32
  }
  func.func @transform_1(%arg0: i32, %arg1: i32) -> (i32, i32) {
    %c0_i32 = arith.constant 0 : i32
    %c0_i32_0 = arith.constant 0 : i32
    %c0_i32_1 = arith.constant 0 : i32
    return %c0_i32, %c0_i32_0 : i32, i32
  }
  func.func @transform_2(%arg0: i32, %arg1: i32) -> (i32, i32) {
    %c0_i32 = arith.constant 0 : i32
    %c0_i32_0 = arith.constant 0 : i32
    %c0_i32_1 = arith.constant 0 : i32
    return %c0_i32, %c0_i32_0 : i32, i32
  }
  func.func @transform_3(%arg0: i32, %arg1: i32) -> (i32, i32, i32) {
    %c0_i32 = arith.constant 0 : i32
    %c0_i32_0 = arith.constant 0 : i32
    %c0_i32_1 = arith.constant 0 : i32
    return %arg1, %c0_i32, %c0_i32_0 : i32, i32, i32
  }
  func.func @transform_4(%arg0: i32, %arg1: i32) -> (i32, i32, i32) {
    %c0_i32 = arith.constant 0 : i32
    %c0_i32_0 = arith.constant 0 : i32
    %c0_i32_1 = arith.constant 0 : i32
    return %arg1, %c0_i32, %c0_i32_0 : i32, i32, i32
  }
  func.func @transform_5(%arg0: i32, %arg1: i32) -> (i32, i32, i32) {
    %c0_i32 = arith.constant 0 : i32
    %c0_i32_0 = arith.constant 0 : i32
    %c0_i32_1 = arith.constant 0 : i32
    return %arg1, %c0_i32, %c0_i32_0 : i32, i32, i32
  }
  func.func @transform_6(%arg0: i32, %arg1: i32) -> (i32, i32, i32) {
    %c0_i32 = arith.constant 0 : i32
    %c0_i32_0 = arith.constant 0 : i32
    %c0_i32_1 = arith.constant 0 : i32
    return %arg1, %c0_i32, %c0_i32_0 : i32, i32, i32
  }
  func.func @transform_7(%arg0: i32, %arg1: i32) -> (i32, i32, i32) {
    %c0_i32 = arith.constant 0 : i32
    %c0_i32_0 = arith.constant 0 : i32
    %c0_i32_1 = arith.constant 0 : i32
    return %arg1, %c0_i32, %c0_i32_0 : i32, i32, i32
  }
  func.func @transform_8(%arg0: i32, %arg1: i32) -> (i32, i32) {
    %c0_i32 = arith.constant 0 : i32
    %c0_i32_0 = arith.constant 0 : i32
    %c0_i32_1 = arith.constant 0 : i32
    return %c0_i32, %c0_i32_0 : i32, i32
  }
  func.func @transform_9(%arg0: i32, %arg1: i32) -> (i32, i32) {
    %c0_i32 = arith.constant 0 : i32
    %c0_i32_0 = arith.constant 0 : i32
    %c0_i32_1 = arith.constant 0 : i32
    return %c0_i32, %c0_i32_0 : i32, i32
  }
  func.func @transform_10(%arg0: i32, %arg1: i32) -> (i32, i32) {
    %c0_i32 = arith.constant 0 : i32
    %c0_i32_0 = arith.constant 0 : i32
    %c0_i32_1 = arith.constant 0 : i32
    return %c0_i32, %c0_i32_0 : i32, i32
  }
  func.func @transform_11(%arg0: i32, %arg1: i32) -> (i32, i32) {
    %c0_i32 = arith.constant 0 : i32
    %c0_i32_0 = arith.constant 0 : i32
    %c0_i32_1 = arith.constant 0 : i32
    return %c0_i32, %c0_i32_0 : i32, i32
  }
  func.func @transform_12(%arg0: i32, %arg1: i32) -> (i32, i32, i32) {
    %c0_i32 = arith.constant 0 : i32
    %c0_i32_0 = arith.constant 0 : i32
    %c0_i32_1 = arith.constant 0 : i32
    return %arg0, %c0_i32, %c0_i32_0 : i32, i32, i32
  }
}

</mosaic_0001>

<llo_original>
// kernel: tpu_custom_call.1
$region0: #{tpu_custom_call.1}
  #allocation0 [shape = 'u32[]', space=smem, size = 0x4, offset = 0x4, fixed_abs, tag = 'smem constant byte address 0x4 - core index']
  #allocation1 [shape = 'u32[144,128]{1,0:T(1,128)}', space=vmem, size = 0x12000, scoped, tag = 'internal scratch']
  #allocation2 [shape = 'f32[34,32]{1,0:T(8,128)}', space=vmem, size = 0x5000, scoped, tag = 'scratch operand']
  %s0 = inlined_call_operand.vmem [shape: bf16[1,34,48], index: 0, kind: input, shape index: {}]
  %s1 = inlined_call_operand.vmem [shape: bf16[48,32], index: 1, kind: input, shape index: {}]
  %s2 = inlined_call_operand.vmem [shape: f32[34,32], index: 2, kind: input, shape index: {}]
  %s3 = inlined_call_operand.vmem [shape: f32[2,8,96], index: 3, kind: input, shape index: {}]
  %s4 = inlined_call_operand.vmem [shape: bf16[2,32,96], index: 4, kind: input, shape index: {}]
  %s5 = inlined_call_operand.vmem [shape: bf16[2,32,32], index: 5, kind: input, shape index: {}]
  %s6 = inlined_call_operand.vmem [shape: bf16[2,32,64], index: 6, kind: input, shape index: {}]
  %s7 = inlined_call_operand.vmem [shape: bf16[2,64,32], index: 7, kind: input, shape index: {}]
  %s8 = inlined_call_operand.vmem [shape: f32[1,32], index: 8, kind: input, shape index: {}]
  %s9 = inlined_call_operand.vmem [shape: f32[1,32], index: 9, kind: input, shape index: {}]
  %s10 = inlined_call_operand.vmem [shape: bf16[32,128], index: 10, kind: input, shape index: {}]
  %s11 = inlined_call_operand.vmem [shape: f32[1,128], index: 11, kind: input, shape index: {}]
  %s12 = inlined_call_operand.hbm [shape: f32[1,2,128], index: 12, kind: output, shape index: {}]
  %s13 = sld [smem:[#allocation0]]
  $region89: #{tpu_custom_call.1} parent=0
    _
  %s15 = ssub.s32 1, %s13
  %s16 = scalar_select 0, %s15, %s13
  $region1: #{tpu_custom_call.1} parent=0
    #allocation3 [shape = 'u8[1024]{0}', space=vmem, size = 0x400, scoped, tag = 'output window, operand 0, single buffered']
    #allocation4 [shape = 's32[2]{0}', space=sflag, size = 0x8, scoped, tag = 'scoped memory for tpu_custom_call.1']
    %17 = vsyncpa [#allocation4], 0
    loop: start=0, step=1, limit=4
    $region2: #{tpu_custom_call.1} parent=1 // loop_pre_header
      _
    $region3: #{tpu_custom_call.1} parent=1 // loop_header
      %s19 = sphi 0, %s23
      %p20 = scmp.ge.s32.totalorder %s19, 4
      %s26 = sphi 0, %s38
      %s27 = sphi 0, %s34
      %s28 = sphi 0, %s26
      %s29 = sphi 0, %s27
      %s30 = sphi 0, %s28
      %s31 = sphi 0, %s29
      %s41 = sphi 0, %s43
      %s44 = sphi 0, %s41
      %s45 = sphi 0, %s44
      %s61 = sphi 0, %s45
      %s65 = sphi 0, %s65
      %s67 = sphi 0, %s65
      %s68 = sphi 0, %s67
      %s82 = sphi 0, %s68
      %s86 = sphi 0, %s86
      %s88 = sphi 0, %s86
      %s89 = sphi 0, %s88
      %s103 = sphi 0, %s89
      %s109 = sphi 0, %s111
      %s112 = sphi 0, %s109
      %s113 = sphi 0, %s112
      %s129 = sphi 0, %s113
      %s135 = sphi 0, %s137
      %s138 = sphi 0, %s135
      %s139 = sphi 0, %s138
      %s155 = sphi 0, %s139
      %s161 = sphi 0, %s163
      %s164 = sphi 0, %s161
      %s165 = sphi 0, %s164
      %s181 = sphi 0, %s165
      %s187 = sphi 0, %s189
      %s190 = sphi 0, %s187
      %s191 = sphi 0, %s190
      %s207 = sphi 0, %s191
      %s213 = sphi 0, %s215
      %s216 = sphi 0, %s213
      %s217 = sphi 0, %s216
      %s233 = sphi 0, %s217
      %s237 = sphi 0, %s237
      %s239 = sphi 0, %s237
      %s240 = sphi 0, %s239
      %s254 = sphi 0, %s240
      %s258 = sphi 0, %s258
      %s260 = sphi 0, %s258
      %s261 = sphi 0, %s260
      %s275 = sphi 0, %s261
      %s279 = sphi 0, %s279
      %s281 = sphi 0, %s279
      %s282 = sphi 0, %s281
      %s296 = sphi 0, %s282
      %s300 = sphi 0, %s300
      %s302 = sphi 0, %s300
      %s303 = sphi 0, %s302
      %s317 = sphi 0, %s303
      %s323 = sphi 0, %s325
      %s326 = sphi 0, %s323
      %s327 = sphi 0, %s326
      %s343 = sphi 0, %s327
    $region4: #{tpu_custom_call.1} parent=1 // loop_header_branch
      %22 = sbr.rel (%p20) target = $region8
    $region5: #{tpu_custom_call.1} parent=1 // loop_body
      %s24 = ssub.s32 %s19, 1
      %s25 = ssub.s32 %s19, 2
      %s32 = sadd.s32 1, %s27
      %p33 = scmp.ge.s32.totalorder %s32, 2
      %s34 = scalar_select %p33, 0, %s32
      %s35 = sadd.s32 1, %s26
      %s36 = scalar_select %p33, %s35, %s26
      %p37 = scmp.ge.s32.totalorder %s36, 1
      %s38 = scalar_select %p37, 0, %s36
      %s39 = ssub.s32 %s26, %s38
      %p40 = scmp.eq.s32.totalorder %s39, 0
      %s42 = sadd.s32 %s41, 1
      %s43 = scalar_select %p40, %s41, %s42
      %p46 = pneg %p40
      %p47 = scmp.eq.s32.totalorder %s19, 1
      %p48 = por %p46, %p47
      %p49 = scmp.ne.s32.totalorder %s41, %s44
      %p50 = scmp.eq.s32.totalorder %s19, 0
      %p51 = por %p49, %p50
      %p52 = scmp.ne.s32.totalorder %s41, %s44
      %p53 = scmp.eq.s32.totalorder %s24, 1
      %p54 = por %p52, %p53
      %p55 = scmp.ne.s32.totalorder %s44, %s45
      %p56 = scmp.eq.s32.totalorder %s24, 0
      %p57 = por %p55, %p56
      %p58 = scmp.ne.s32.totalorder %s44, %s45
      %p59 = scmp.eq.s32.totalorder %s25, 1
      %p60 = por %p58, %p59
      %p62 = scmp.ne.s32.totalorder %s45, %s61
      %p63 = scmp.eq.s32.totalorder %s25, 0
      %p64 = por %p62, %p63
      %s66 = sadd.s32 %s65, 1
      %p69 = scmp.eq.s32.totalorder %s19, 1
      %p70 = scmp.ne.s32.totalorder %s65, %s67
      %p71 = scmp.eq.s32.totalorder %s19, 0
      %p72 = por %p70, %p71
      %p73 = scmp.ne.s32.totalorder %s65, %s67
      %p74 = scmp.eq.s32.totalorder %s24, 1
      %p75 = por %p73, %p74
      %p76 = scmp.ne.s32.totalorder %s67, %s68
      %p77 = scmp.eq.s32.totalorder %s24, 0
      %p78 = por %p76, %p77
      %p79 = scmp.ne.s32.totalorder %s67, %s68
      %p80 = scmp.eq.s32.totalorder %s25, 1
      %p81 = por %p79, %p80
      %p83 = scmp.ne.s32.totalorder %s68, %s82
      %p84 = scmp.eq.s32.totalorder %s25, 0
      %p85 = por %p83, %p84
      %s87 = sadd.s32 %s86, 1
      %p90 = scmp.eq.s32.totalorder %s19, 1
      %p91 = scmp.ne.s32.totalorder %s86, %s88
      %p92 = scmp.eq.s32.totalorder %s19, 0
      %p93 = por %p91, %p92
      %p94 = scmp.ne.s32.totalorder %s86, %s88
      %p95 = scmp.eq.s32.totalorder %s24, 1
      %p96 = por %p94, %p95
      %p97 = scmp.ne.s32.totalorder %s88, %s89
      %p98 = scmp.eq.s32.totalorder %s24, 0
      %p99 = por %p97, %p98
      %p100 = scmp.ne.s32.totalorder %s88, %s89
      %p101 = scmp.eq.s32.totalorder %s25, 1
      %p102 = por %p100, %p101
      %p104 = scmp.ne.s32.totalorder %s89, %s103
      %p105 = scmp.eq.s32.totalorder %s25, 0
      %p106 = por %p104, %p105
      %s107 = ssub.s32 %s27, %s34
      %p108 = scmp.eq.s32.totalorder %s107, 0
      %s110 = sadd.s32 %s109, 1
      %s111 = scalar_select %p108, %s109, %s110
      %p114 = pneg %p108
      %p115 = scmp.eq.s32.totalorder %s19, 1
      %p116 = por %p114, %p115
      %p117 = scmp.ne.s32.totalorder %s109, %s112
      %p118 = scmp.eq.s32.totalorder %s19, 0
      %p119 = por %p117, %p118
      %p120 = scmp.ne.s32.totalorder %s109, %s112
      %p121 = scmp.eq.s32.totalorder %s24, 1
      %p122 = por %p120, %p121
      %p123 = scmp.ne.s32.totalorder %s112, %s113
      %p124 = scmp.eq.s32.totalorder %s24, 0
      %p125 = por %p123, %p124
      %p126 = scmp.ne.s32.totalorder %s112, %s113
      %p127 = scmp.eq.s32.totalorder %s25, 1
      %p128 = por %p126, %p127
      %p130 = scmp.ne.s32.totalorder %s113, %s129
      %p131 = scmp.eq.s32.totalorder %s25, 0
      %p132 = por %p130, %p131
      %s133 = ssub.s32 %s27, %s34
      %p134 = scmp.eq.s32.totalorder %s133, 0
      %s136 = sadd.s32 %s135, 1
      %s137 = scalar_select %p134, %s135, %s136
      %p140 = pneg %p134
      %p141 = scmp.eq.s32.totalorder %s19, 1
      %p142 = por %p140, %p141
      %p143 = scmp.ne.s32.totalorder %s135, %s138
      %p144 = scmp.eq.s32.totalorder %s19, 0
      %p145 = por %p143, %p144
      %p146 = scmp.ne.s32.totalorder %s135, %s138
      %p147 = scmp.eq.s32.totalorder %s24, 1
      %p148 = por %p146, %p147
      %p149 = scmp.ne.s32.totalorder %s138, %s139
      %p150 = scmp.eq.s32.totalorder %s24, 0
      %p151 = por %p149, %p150
      %p152 = scmp.ne.s32.totalorder %s138, %s139
      %p153 = scmp.eq.s32.totalorder %s25, 1
      %p154 = por %p152, %p153
      %p156 = scmp.ne.s32.totalorder %s139, %s155
      %p157 = scmp.eq.s32.totalorder %s25, 0
      %p158 = por %p156, %p157
      %s159 = ssub.s32 %s27, %s34
      %p160 = scmp.eq.s32.totalorder %s159, 0
      %s162 = sadd.s32 %s161, 1
      %s163 = scalar_select %p160, %s161, %s162
      %p166 = pneg %p160
      %p167 = scmp.eq.s32.totalorder %s19, 1
      %p168 = por %p166, %p167
      %p169 = scmp.ne.s32.totalorder %s161, %s164
      %p170 = scmp.eq.s32.totalorder %s19, 0
      %p171 = por %p169, %p170
      %p172 = scmp.ne.s32.totalorder %s161, %s164
      %p173 = scmp.eq.s32.totalorder %s24, 1
      %p174 = por %p172, %p173
      %p175 = scmp.ne.s32.totalorder %s164, %s165
      %p176 = scmp.eq.s32.totalorder %s24, 0
      %p177 = por %p175, %p176
      %p178 = scmp.ne.s32.totalorder %s164, %s165
      %p179 = scmp.eq.s32.totalorder %s25, 1
      %p180 = por %p178, %p179
      %p182 = scmp.ne.s32.totalorder %s165, %s181
      %p183 = scmp.eq.s32.totalorder %s25, 0
      %p184 = por %p182, %p183
      %s185 = ssub.s32 %s27, %s34
      %p186 = scmp.eq.s32.totalorder %s185, 0
      %s188 = sadd.s32 %s187, 1
      %s189 = scalar_select %p186, %s187, %s188
      %p192 = pneg %p186
      %p193 = scmp.eq.s32.totalorder %s19, 1
      %p194 = por %p192, %p193
      %p195 = scmp.ne.s32.totalorder %s187, %s190
      %p196 = scmp.eq.s32.totalorder %s19, 0
      %p197 = por %p195, %p196
      %p198 = scmp.ne.s32.totalorder %s187, %s190
      %p199 = scmp.eq.s32.totalorder %s24, 1
      %p200 = por %p198, %p199
      %p201 = scmp.ne.s32.totalorder %s190, %s191
      %p202 = scmp.eq.s32.totalorder %s24, 0
      %p203 = por %p201, %p202
      %p204 = scmp.ne.s32.totalorder %s190, %s191
      %p205 = scmp.eq.s32.totalorder %s25, 1
      %p206 = por %p204, %p205
      %p208 = scmp.ne.s32.totalorder %s191, %s207
      %p209 = scmp.eq.s32.totalorder %s25, 0
      %p210 = por %p208, %p209
      %s211 = ssub.s32 %s27, %s34
      %p212 = scmp.eq.s32.totalorder %s211, 0
      %s214 = sadd.s32 %s213, 1
      %s215 = scalar_select %p212, %s213, %s214
      %p218 = pneg %p212
      %p219 = scmp.eq.s32.totalorder %s19, 1
      %p220 = por %p218, %p219
      %p221 = scmp.ne.s32.totalorder %s213, %s216
      %p222 = scmp.eq.s32.totalorder %s19, 0
      %p223 = por %p221, %p222
      %p224 = scmp.ne.s32.totalorder %s213, %s216
      %p225 = scmp.eq.s32.totalorder %s24, 1
      %p226 = por %p224, %p225
      %p227 = scmp.ne.s32.totalorder %s216, %s217
      %p228 = scmp.eq.s32.totalorder %s24, 0
      %p229 = por %p227, %p228
      %p230 = scmp.ne.s32.totalorder %s216, %s217
      %p231 = scmp.eq.s32.totalorder %s25, 1
      %p232 = por %p230, %p231
      %p234 = scmp.ne.s32.totalorder %s217, %s233
      %p235 = scmp.eq.s32.totalorder %s25, 0
      %p236 = por %p234, %p235
      %s238 = sadd.s32 %s237, 1
      %p241 = scmp.eq.s32.totalorder %s19, 1
      %p242 = scmp.ne.s32.totalorder %s237, %s239
      %p243 = scmp.eq.s32.totalorder %s19, 0
      %p244 = por %p242, %p243
      %p245 = scmp.ne.s32.totalorder %s237, %s239
      %p246 = scmp.eq.s32.totalorder %s24, 1
      %p247 = por %p245, %p246
      %p248 = scmp.ne.s32.totalorder %s239, %s240
      %p249 = scmp.eq.s32.totalorder %s24, 0
      %p250 = por %p248, %p249
      %p251 = scmp.ne.s32.totalorder %s239, %s240
      %p252 = scmp.eq.s32.totalorder %s25, 1
      %p253 = por %p251, %p252
      %p255 = scmp.ne.s32.totalorder %s240, %s254
      %p256 = scmp.eq.s32.totalorder %s25, 0
      %p257 = por %p255, %p256
      %s259 = sadd.s32 %s258, 1
      %p262 = scmp.eq.s32.totalorder %s19, 1
      %p263 = scmp.ne.s32.totalorder %s258, %s260
      %p264 = scmp.eq.s32.totalorder %s19, 0
      %p265 = por %p263, %p264
      %p266 = scmp.ne.s32.totalorder %s258, %s260
      %p267 = scmp.eq.s32.totalorder %s24, 1
      %p268 = por %p266, %p267
      %p269 = scmp.ne.s32.totalorder %s260, %s261
      %p270 = scmp.eq.s32.totalorder %s24, 0
      %p271 = por %p269, %p270
      %p272 = scmp.ne.s32.totalorder %s260, %s261
      %p273 = scmp.eq.s32.totalorder %s25, 1
      %p274 = por %p272, %p273
      %p276 = scmp.ne.s32.totalorder %s261, %s275
      %p277 = scmp.eq.s32.totalorder %s25, 0
      %p278 = por %p276, %p277
      %s280 = sadd.s32 %s279, 1
      %p283 = scmp.eq.s32.totalorder %s19, 1
      %p284 = scmp.ne.s32.totalorder %s279, %s281
      %p285 = scmp.eq.s32.totalorder %s19, 0
      %p286 = por %p284, %p285
      %p287 = scmp.ne.s32.totalorder %s279, %s281
      %p288 = scmp.eq.s32.totalorder %s24, 1
      %p289 = por %p287, %p288
      %p290 = scmp.ne.s32.totalorder %s281, %s282
      %p291 = scmp.eq.s32.totalorder %s24, 0
      %p292 = por %p290, %p291
      %p293 = scmp.ne.s32.totalorder %s281, %s282
      %p294 = scmp.eq.s32.totalorder %s25, 1
      %p295 = por %p293, %p294
      %p297 = scmp.ne.s32.totalorder %s282, %s296
      %p298 = scmp.eq.s32.totalorder %s25, 0
      %p299 = por %p297, %p298
      %s301 = sadd.s32 %s300, 1
      %p304 = scmp.eq.s32.totalorder %s19, 1
      %p305 = scmp.ne.s32.totalorder %s300, %s302
      %p306 = scmp.eq.s32.totalorder %s19, 0
      %p307 = por %p305, %p306
      %p308 = scmp.ne.s32.totalorder %s300, %s302
      %p309 = scmp.eq.s32.totalorder %s24, 1
      %p310 = por %p308, %p309
      %p311 = scmp.ne.s32.totalorder %s302, %s303
      %p312 = scmp.eq.s32.totalorder %s24, 0
      %p313 = por %p311, %p312
      %p314 = scmp.ne.s32.totalorder %s302, %s303
      %p315 = scmp.eq.s32.totalorder %s25, 1
      %p316 = por %p314, %p315
      %p318 = scmp.ne.s32.totalorder %s303, %s317
      %p319 = scmp.eq.s32.totalorder %s25, 0
      %p320 = por %p318, %p319
      %s321 = ssub.s32 %s26, %s38
      %p322 = scmp.eq.s32.totalorder %s321, 0
      %s324 = sadd.s32 %s323, 1
      %s325 = scalar_select %p322, %s323, %s324
      %p328 = pneg %p322
      %p329 = scmp.eq.s32.totalorder %s19, 1
      %p330 = por %p328, %p329
      %p331 = scmp.ne.s32.totalorder %s323, %s326
      %p332 = scmp.eq.s32.totalorder %s19, 0
      %p333 = por %p331, %p332
      %p334 = scmp.ne.s32.totalorder %s323, %s326
      %p335 = scmp.eq.s32.totalorder %s24, 1
      %p336 = por %p334, %p335
      %p337 = scmp.ne.s32.totalorder %s326, %s327
      %p338 = scmp.eq.s32.totalorder %s24, 0
      %p339 = por %p337, %p338
      %p340 = scmp.ne.s32.totalorder %s326, %s327
      %p341 = scmp.eq.s32.totalorder %s25, 1
      %p342 = por %p340, %p341
      %p344 = scmp.ne.s32.totalorder %s327, %s343
      %p345 = scmp.eq.s32.totalorder %s25, 0
      %p346 = por %p344, %p345
      %p347 = scmp.le.s32.totalorder 1, %s19
      %p348 = scmp.lt.s32.totalorder %s19, 3
      %p349 = pnand %p347, %p348
      %p350 = pneg %p349
      // Predicated region
      $region9: #{tpu_custom_call.1} parent=5 // pred_check
        _
      $region10: #{tpu_custom_call.1} parent=5 // pred_check_branch
        %352 = sbr.rel (%p349) target = $region12
      $region11: #{tpu_custom_call.1} parent=5 // pred_region
        %s353 = ssub.s32 %s19, 1
        // Predicated region
        $region13: #{tpu_custom_call.1} parent=11 // pred_check
          %p354 = pneg %p57
        $region14: #{tpu_custom_call.1} parent=11 // pred_check_branch
          %356 = sbr.rel (%p354) target = $region16
        $region15: #{tpu_custom_call.1} parent=11 // pred_region
          %p357 = scmp.lt.s32.totalorder %s28, 0
          %s358 = scalar_select %p357, %s28, 0
          %s359 = smul.addr %s358, 5
          %s360 = smul.addr %s359, 4
          %s361 = scalar_lea.vmem %s0, %s360
        $region16: #{tpu_custom_call.1} parent=11 // pred_fallthru
          _
        // Predicated region
        $region17: #{tpu_custom_call.1} parent=11 // pred_check
          %p362 = pneg %p78
        $region18: #{tpu_custom_call.1} parent=11 // pred_check_branch
          %364 = sbr.rel (%p362) target = $region20
        $region19: #{tpu_custom_call.1} parent=11 // pred_region
          _
        $region20: #{tpu_custom_call.1} parent=11 // pred_fallthru
          _
        // Predicated region
        $region21: #{tpu_custom_call.1} parent=11 // pred_check
          %p365 = pneg %p99
        $region22: #{tpu_custom_call.1} parent=11 // pred_check_branch
          %367 = sbr.rel (%p365) target = $region24
        $region23: #{tpu_custom_call.1} parent=11 // pred_region
          _
        $region24: #{tpu_custom_call.1} parent=11 // pred_fallthru
          _
        // Predicated region
        $region25: #{tpu_custom_call.1} parent=11 // pred_check
          %p368 = pneg %p250
        $region26: #{tpu_custom_call.1} parent=11 // pred_check_branch
          %370 = sbr.rel (%p368) target = $region28
        $region27: #{tpu_custom_call.1} parent=11 // pred_region
          _
        $region28: #{tpu_custom_call.1} parent=11 // pred_fallthru
          _
        // Predicated region
        $region29: #{tpu_custom_call.1} parent=11 // pred_check
          %p371 = pneg %p271
        $region30: #{tpu_custom_call.1} parent=11 // pred_check_branch
          %373 = sbr.rel (%p371) target = $region32
        $region31: #{tpu_custom_call.1} parent=11 // pred_region
          _
        $region32: #{tpu_custom_call.1} parent=11 // pred_fallthru
          _
        // Predicated region
        $region33: #{tpu_custom_call.1} parent=11 // pred_check
          %p374 = pneg %p292
        $region34: #{tpu_custom_call.1} parent=11 // pred_check_branch
          %376 = sbr.rel (%p374) target = $region36
        $region35: #{tpu_custom_call.1} parent=11 // pred_region
          _
        $region36: #{tpu_custom_call.1} parent=11 // pred_fallthru
          _
        // Predicated region
        $region37: #{tpu_custom_call.1} parent=11 // pred_check
          %p377 = pneg %p313
        $region38: #{tpu_custom_call.1} parent=11 // pred_check_branch
          %379 = sbr.rel (%p377) target = $region40
        $region39: #{tpu_custom_call.1} parent=11 // pred_region
          _
        $region40: #{tpu_custom_call.1} parent=11 // pred_fallthru
          _
      $region12: #{tpu_custom_call.1} parent=5 // pred_fallthru
        _
      %p380 = scmp.lt.s32.totalorder %s19, 2
      // Predicated region
      $region41: #{tpu_custom_call.1} parent=5 // pred_check
        %p381 = pneg %p380
      $region42: #{tpu_custom_call.1} parent=5 // pred_check_branch
        %383 = sbr.rel (%p381) target = $region44
      $region43: #{tpu_custom_call.1} parent=5 // pred_region
        // Predicated region
        $region45: #{tpu_custom_call.1} parent=43 // pred_check
          %p384 = pneg %p119
        $region46: #{tpu_custom_call.1} parent=43 // pred_check_branch
          %386 = sbr.rel (%p384) target = $region48
        $region47: #{tpu_custom_call.1} parent=43 // pred_region
          %p387 = scmp.lt.s32.totalorder %s27, 1
          %s388 = scalar_select %p387, %s27, 1
          %s389 = smul.addr %s388, 8
          %s390 = scalar_lea.vmem %s3, %s389
        $region48: #{tpu_custom_call.1} parent=43 // pred_fallthru
          _
        // Predicated region
        $region49: #{tpu_custom_call.1} parent=43 // pred_check
          %p391 = pneg %p145
        $region50: #{tpu_custom_call.1} parent=43 // pred_check_branch
          %393 = sbr.rel (%p391) target = $region52
        $region51: #{tpu_custom_call.1} parent=43 // pred_region
          %p394 = scmp.lt.s32.totalorder %s27, 1
          %s395 = scalar_select %p394, %s27, 1
          %s396 = smul.addr %s395, 4
          %s397 = smul.addr %s396, 4
          %s398 = scalar_lea.vmem %s4, %s397
        $region52: #{tpu_custom_call.1} parent=43 // pred_fallthru
          _
        // Predicated region
        $region53: #{tpu_custom_call.1} parent=43 // pred_check
          %p399 = pneg %p171
        $region54: #{tpu_custom_call.1} parent=43 // pred_check_branch
          %401 = sbr.rel (%p399) target = $region56
        $region55: #{tpu_custom_call.1} parent=43 // pred_region
          %p402 = scmp.lt.s32.totalorder %s27, 1
          %s403 = scalar_select %p402, %s27, 1
          %s404 = smul.addr %s403, 4
          %s405 = smul.addr %s404, 4
          %s406 = scalar_lea.vmem %s5, %s405
        $region56: #{tpu_custom_call.1} parent=43 // pred_fallthru
          _
        // Predicated region
        $region57: #{tpu_custom_call.1} parent=43 // pred_check
          %p407 = pneg %p197
        $region58: #{tpu_custom_call.1} parent=43 // pred_check_branch
          %409 = sbr.rel (%p407) target = $region60
        $region59: #{tpu_custom_call.1} parent=43 // pred_region
          %p410 = scmp.lt.s32.totalorder %s27, 1
          %s411 = scalar_select %p410, %s27, 1
          %s412 = smul.addr %s411, 4
          %s413 = smul.addr %s412, 4
          %s414 = scalar_lea.vmem %s6, %s413
        $region60: #{tpu_custom_call.1} parent=43 // pred_fallthru
          _
        // Predicated region
        $region61: #{tpu_custom_call.1} parent=43 // pred_check
          %p415 = pneg %p223
        $region62: #{tpu_custom_call.1} parent=43 // pred_check_branch
          %417 = sbr.rel (%p415) target = $region64
        $region63: #{tpu_custom_call.1} parent=43 // pred_region
          %p418 = scmp.lt.s32.totalorder %s27, 1
          %s419 = scalar_select %p418, %s27, 1
          %s420 = smul.addr %s419, 8
          %s421 = smul.addr %s420, 4
          %s422 = scalar_lea.vmem %s7, %s421
        $region64: #{tpu_custom_call.1} parent=43 // pred_fallthru
          _
      $region44: #{tpu_custom_call.1} parent=5 // pred_fallthru
        _
      %p423 = scmp.le.s32.totalorder 1, %s19
      %p424 = scmp.lt.s32.totalorder %s19, 3
      %p425 = pnand %p423, %p424
      %p426 = pneg %p425
      // Predicated region
      $region65: #{tpu_custom_call.1} parent=5 // pred_check
        _
      $region66: #{tpu_custom_call.1} parent=5 // pred_check_branch
        %428 = sbr.rel (%p425) target = $region68
      $region67: #{tpu_custom_call.1} parent=5 // pred_region
        %s429 = ssub.s32 %s19, 1
        %p430 = scmp.lt.s32.totalorder %s28, 0
        %s431 = scalar_select %p430, %s28, 0
        %s432 = smul.addr %s431, 5
        %s433 = smul.addr %s432, 4
        %s434 = scalar_lea.vmem %s0, %s433
        %p435 = pneg %p57
        %p436 = pneg %p54
        %p437 = pneg %p78
        %p438 = pneg %p75
        %p439 = pneg %p99
        %p440 = pneg %p96
        %p441 = scmp.lt.s32.totalorder %s29, 1
        %s442 = scalar_select %p441, %s29, 1
        %s443 = smul.addr %s442, 8
        %s444 = scalar_lea.vmem %s3, %s443
        %p445 = pneg %p125
        %p446 = pneg %p122
        %p447 = scmp.lt.s32.totalorder %s29, 1
        %s448 = scalar_select %p447, %s29, 1
        %s449 = smul.addr %s448, 4
        %s450 = smul.addr %s449, 4
        %s451 = scalar_lea.vmem %s4, %s450
        %p452 = pneg %p151
        %p453 = pneg %p148
        %p454 = scmp.lt.s32.totalorder %s29, 1
        %s455 = scalar_select %p454, %s29, 1
        %s456 = smul.addr %s455, 4
        %s457 = smul.addr %s456, 4
        %s458 = scalar_lea.vmem %s5, %s457
        %p459 = pneg %p177
        %p460 = pneg %p174
        %p461 = scmp.lt.s32.totalorder %s29, 1
        %s462 = scalar_select %p461, %s29, 1
        %s463 = smul.addr %s462, 4
        %s464 = smul.addr %s463, 4
        %s465 = scalar_lea.vmem %s6, %s464
        %p466 = pneg %p203
        %p467 = pneg %p200
        %p468 = scmp.lt.s32.totalorder %s29, 1
        %s469 = scalar_select %p468, %s29, 1
        %s470 = smul.addr %s469, 8
        %s471 = smul.addr %s470, 4
        %s472 = scalar_lea.vmem %s7, %s471
        %p473 = pneg %p229
        %p474 = pneg %p226
        %p475 = pneg %p250
        %p476 = pneg %p247
        %p477 = pneg %p271
        %p478 = pneg %p268
        %p479 = pneg %p292
        %p480 = pneg %p289
        %p481 = pneg %p313
        %p482 = pneg %p310
        %p483 = pneg %p339
        %p484 = pneg %p336
        %p485 = scmp.lt.s32.totalorder %s28, 0
        %s486 = scalar_select %p485, %s28, 0
        %s487 = smul.addr %s486, 5
        %s488 = smul.addr %s487, 4
        %s489 = scalar_lea.vmem %s0, %s488
        %p490 = scmp.lt.s32.totalorder %s29, 1
        %s491 = scalar_select %p490, %s29, 1
        %s492 = smul.addr %s491, 8
        %s493 = scalar_lea.vmem %s3, %s492
        %p494 = scmp.lt.s32.totalorder %s29, 1
        %s495 = scalar_select %p494, %s29, 1
        %s496 = smul.addr %s495, 4
        %s497 = smul.addr %s496, 4
        %s498 = scalar_lea.vmem %s4, %s497
        %p499 = scmp.lt.s32.totalorder %s29, 1
        %s500 = scalar_select %p499, %s29, 1
        %s501 = smul.addr %s500, 4
        %s502 = smul.addr %s501, 4
        %s503 = scalar_lea.vmem %s5, %s502
        %p504 = scmp.lt.s32.totalorder %s29, 1
        %s505 = scalar_select %p504, %s29, 1
        %s506 = smul.addr %s505, 4
        %s507 = smul.addr %s506, 4
        %s508 = scalar_lea.vmem %s6, %s507
        %p509 = scmp.lt.s32.totalorder %s29, 1
        %s510 = scalar_select %p509, %s29, 1
        %s511 = smul.addr %s510, 8
        %s512 = smul.addr %s511, 4
        %s513 = scalar_lea.vmem %s7, %s512
        %p515 = scmp.eq.s32.totalorder %s29, 0
        // Predicated region
        $region69: #{tpu_custom_call.1} parent=67 // pred_check
          %p516 = pneg %p515
        $region70: #{tpu_custom_call.1} parent=67 // pred_check_branch
          %518 = sbr.rel (%p516) target = $region72
        $region71: #{tpu_custom_call.1} parent=67 // pred_region
          %v519 = vld [vmem:[%s489] sm:$0xf]
          %v520 = vld [vmem:[%s489 + $0x4] sm:$0xf]
          %v521 = vld [vmem:[%s489 + $0x8] sm:$0xf]
          %v522 = vld [vmem:[%s489 + $0xc] sm:$0xf]
          %v523 = vld [vmem:[%s489 + $0x10] sm:$0x1]
          %v524 = vld [vmem:[%s1] sm:$0xf]
          %v525 = vld [vmem:[%s1 + $0x4] sm:$0xf]
          %v526 = vld [vmem:[%s1 + $0x8] sm:$0xf]
          %v527 = vld [vmem:[%s1 + $0xc] sm:$0xf]
          %v528 = vld [vmem:[%s1 + $0x10] sm:$0xf]
          %v529 = vld [vmem:[%s1 + $0x14] sm:$0xf]
          %v530 = vld [vmem:[%s2] sm:$0xff]
          %v531 = vld [vmem:[%s2 + $0x8] sm:$0xff]
          %v532 = vld [vmem:[%s2 + $0x10] sm:$0xff]
          %v533 = vld [vmem:[%s2 + $0x18] sm:$0xff]
          %v534 = vld [vmem:[%s2 + $0x20] sm:$0x3]
          %v540 = vunpack.c.l.b16 %v519
          %v541 = vunpack.c.l.b16 %v520
          %v542 = vunpack.c.l.b16 %v521
          %v543 = vunpack.c.l.b16 %v522
          %v544 = vunpack.c.l.b16 %v523
          %v545 = vpack.c.b16 %v541, %v540
          %v546 = vpack.c.b16 %v543, %v542
          %v547 = vpack.c.b16 %v544, %v544
          %v554 = vunpack.c.l.b16 %v524
          %v555 = vunpack.c.l.b16 %v525
          %v556 = vunpack.c.l.b16 %v526
          %v557 = vunpack.c.l.b16 %v527
          %v558 = vunpack.c.l.b16 %v528
          %v559 = vunpack.c.l.b16 %v529
          %v560 = vpack.c.b16 %v555, %v554
          %v561 = vpack.c.b16 %v557, %v556
          %v562 = vpack.c.b16 %v559, %v558
          %vm566 = vcmask 392192
          %v568 = vsel %vm566, %v545, 0
          %v571 = vsel %vm566, %v546, 0
          %v574 = vsel %vm566, %v547, 0
          %576 = vmatprep.subr.bf16.mxu0 0
          %577 = vmatpush1.bf16.msra.mxu0 0
          %578 = vmatprep.subr.bf16.mxu0 0
          %579 = vmatpush1.bf16.msra.mxu0 0
          %580 = vmatprep.subr.bf16.mxu0 0
          %581 = vmatpush1.bf16.msra.mxu0 0
          %582 = vmatprep.subr.bf16.mxu0 0
          %583 = vmatpush1.bf16.msra.mxu0 0
          %584 = vmatprep.subr.bf16.mxu0 0
          %585 = vmatpush1.bf16.msra.mxu0 0
          %586 = vmatprep.subr.bf16.mxu0 0
          %587 = vmatpush1.bf16.msra.mxu0 %v562
          %588 = vmatprep.subr.bf16.mxu0 0
          %589 = vmatpush1.bf16.msra.mxu0 %v561
          %590 = vmatprep.subr.bf16.mxu0 0
          %591 = vmatpush1.bf16.msra.mxu0 %v560
          %592 = vmatprep.subr.bf16.mxu0 0
          %593 = vmatpush2.bf16.msra.mxu0 0
          %594 = vmatprep.subr.bf16.mxu0 0
          %595 = vmatpush2.bf16.msra.mxu0 0
          %596 = vmatprep.subr.bf16.mxu0 0
          %597 = vmatpush2.bf16.msra.mxu0 0
          %598 = vmatprep.subr.bf16.mxu0 0
          %599 = vmatpush2.bf16.msra.mxu0 0
          %600 = vmatprep.subr.bf16.mxu0 0
          %601 = vmatpush2.bf16.msra.mxu0 0
          %602 = vmatprep.subr.bf16.mxu0 0
          %603 = vmatpush2.bf16.msra.mxu0 0
          %604 = vmatprep.subr.bf16.mxu0 0
          %605 = vmatpush2.bf16.msra.mxu0 0
          %606 = vmatprep.subr.bf16.mxu0 0
          %607 = vmatpush2.bf16.msra.mxu0 0
          %608 = vmatprep.mubr.bf16.mxu0 0
          %609 = vmatmul.mubr.bf16.gmra.mxu0 %v568
          %v610 = vpop.f32.mrf.mxu0
          %v611 = vadd.f32 %v530, %v610
          %v612 = vpop.f32.mrf.mxu0
          %v613 = vpop.f32.mrf.mxu0
          %v614 = vadd.f32 %v531, %v613
          %v615 = vpop.f32.mrf.mxu0
          %616 = vmatprep.mubr.bf16.mxu0 0
          %617 = vmatmul.mubr.bf16.gmra.mxu0 %v571
          %v618 = vpop.f32.mrf.mxu0
          %v619 = vadd.f32 %v532, %v618
          %v620 = vpop.f32.mrf.mxu0
          %v621 = vpop.f32.mrf.mxu0
          %v622 = vadd.f32 %v533, %v621
          %v623 = vpop.f32.mrf.mxu0
          %624 = vmatprep.mubr.bf16.mxu0 0
          %625 = vmatmul.mubr.bf16.gmra.mxu0 %v574
          %v626 = vpop.f32.mrf.mxu0
          %v627 = vadd.f32 %v534, %v626
          %v628 = vpop.f32.mrf.mxu0
          %v629 = vpop.f32.mrf.mxu0
          %v630 = vpop.f32.mrf.mxu0
          %631 = vdwg.mxu0
          %vm632 = vcmask 261120
          %633 = vst.msk [vmem:[#allocation2] sm:$0xff] %vm632, %v611
          %634 = vst.msk [vmem:[#allocation2 + $0x8] sm:$0xff] %vm632, %v614
          %635 = vst.msk [vmem:[#allocation2 + $0x10] sm:$0xff] %vm632, %v619
          %636 = vst.msk [vmem:[#allocation2 + $0x18] sm:$0xff] %vm632, %v622
          %vm637 = vcmask 254976
          %638 = vst.msk [vmem:[#allocation2 + $0x20] sm:$0x3] %vm637, %v627
        $region72: #{tpu_custom_call.1} parent=67 // pred_fallthru
          _
        %v639 = vld [vmem:[#allocation2] sm:$0xff]
        %v640 = vld [vmem:[#allocation2 + $0x8] sm:$0xff]
        %v641 = vld [vmem:[#allocation2 + $0x10] sm:$0xff]
        %v642 = vld [vmem:[#allocation2 + $0x18] sm:$0xff]
        %v643 = vld [vmem:[#allocation2 + $0x20] sm:$0x3]
        %v644 = vld [vmem:[%s493] sm:$0xff]
        %vm645 = vcmask 261120
        %v646 = vsel %vm645, %v639, 0.0
        %647 = vadd.xlane.f32.xlu0 %v646
        %v648 = vpop.xlane.xlu0 %647
        %v649 = vsel %vm645, %v640, 0.0
        %650 = vadd.xlane.f32.xlu0 %v649
        %v651 = vpop.xlane.xlu0 %650
        %v652 = vsel %vm645, %v641, 0.0
        %653 = vadd.xlane.f32.xlu0 %v652
        %v654 = vpop.xlane.xlu0 %653
        %v655 = vsel %vm645, %v642, 0.0
        %656 = vadd.xlane.f32.xlu0 %v655
        %v657 = vpop.xlane.xlu0 %656
        %vm658 = vcmask 254976
        %v659 = vsel %vm658, %v643, 0.0
        %660 = vadd.xlane.f32.xlu0 %v659
        %v661 = vpop.xlane.xlu0 %660
        %v662 = vrcp.pop 32.0
        %v663 = vmul.f32 %v648, %v662
        %v664 = vmul.f32 %v651, %v662
        %v665 = vmul.f32 %v654, %v662
        %v666 = vmul.f32 %v657, %v662
        %v667 = vmul.f32 %v661, %v662
        %v668 = vsub.f32 %v639, %v663
        %v669 = vsub.f32 %v640, %v664
        %v670 = vsub.f32 %v641, %v665
        %v671 = vsub.f32 %v642, %v666
        %v672 = vsub.f32 %v643, %v667
        %v673 = vmul.f32 %v668, %v668
        %v674 = vmul.f32 %v669, %v669
        %v675 = vmul.f32 %v670, %v670
        %v676 = vmul.f32 %v671, %v671
        %v677 = vmul.f32 %v672, %v672
        %v678 = vsel %vm645, %v673, 0.0
        %679 = vadd.xlane.f32.xlu0 %v678
        %v680 = vpop.xlane.xlu0 %679
        %v681 = vsel %vm645, %v674, 0.0
        %682 = vadd.xlane.f32.xlu0 %v681
        %v683 = vpop.xlane.xlu0 %682
        %v684 = vsel %vm645, %v675, 0.0
        %685 = vadd.xlane.f32.xlu0 %v684
        %v686 = vpop.xlane.xlu0 %685
        %v687 = vsel %vm645, %v676, 0.0
        %688 = vadd.xlane.f32.xlu0 %v687
        %v689 = vpop.xlane.xlu0 %688
        %v690 = vsel %vm658, %v677, 0.0
        %691 = vadd.xlane.f32.xlu0 %v690
        %v692 = vpop.xlane.xlu0 %691
        %v693 = vmul.f32 %v680, %v662
        %v694 = vmul.f32 %v683, %v662
        %v695 = vmul.f32 %v686, %v662
        %v696 = vmul.f32 %v689, %v662
        %v697 = vmul.f32 %v692, %v662
        %v698 = vadd.f32 %v693, 1e-06
        %v699 = vadd.f32 %v694, 1e-06
        %v700 = vadd.f32 %v695, 1e-06
        %v701 = vadd.f32 %v696, 1e-06
        %v702 = vadd.f32 %v697, 1e-06
        %v703 = vrsqrt.pop %v698
        %v704 = vrsqrt.pop %v699
        %v705 = vrsqrt.pop %v700
        %v706 = vrsqrt.pop %v701
        %v707 = vrsqrt.pop %v702
        %v708 = vmul.f32 %v668, %v703
        %v709 = vmul.f32 %v669, %v704
        %v710 = vmul.f32 %v670, %v705
        %v711 = vmul.f32 %v671, %v706
        %v712 = vmul.f32 %v672, %v707
        %v713 = vlaneseq
        %v714 = vshrl.u32 %v713, 7
        %v715 = vsub.s32 0, %v714
        %v716 = vrot.slane %v644, %v715
        %v717 = vmul.f32 %v708, %v716
        %v718 = vmul.f32 %v709, %v716
        %v719 = vmul.f32 %v710, %v716
        %v720 = vmul.f32 %v711, %v716
        %v721 = vmul.f32 %v712, %v716
        %v722 = vlaneseq
        %v723 = vshrl.u32 %v722, 7
        %v724 = vsub.s32 1, %v723
        %v725 = vrot.slane %v644, %v724
        %v726 = vadd.f32 %v717, %v725
        %v727 = vadd.f32 %v718, %v725
        %v728 = vadd.f32 %v719, %v725
        %v729 = vadd.f32 %v720, %v725
        %v730 = vadd.f32 %v721, %v725
        %v731 = vpack.c.bf16 %v727, %v726
        %v732 = vpack.c.bf16 %v729, %v728
        %v733 = vpack.c.bf16 %v730, %v730
        %v734 = vld [vmem:[%s498] sm:$0xf]
        %v735 = vld [vmem:[%s498 + $0x4] sm:$0xf]
        %v736 = vld [vmem:[%s498 + $0x8] sm:$0xf]
        %v737 = vld [vmem:[%s498 + $0xc] sm:$0xf]
        %v738 = vlaneseq
        %v739 = vshrl.u32 %v738, 7
        %v740 = vsub.s32 2, %v739
        %v741 = vrot.slane %v644, %v740
        %v746 = vunpack.c.l.b16 %v734
        %v747 = vunpack.c.l.b16 %v735
        %v748 = vunpack.c.l.b16 %v736
        %v749 = vunpack.c.l.b16 %v737
        %v750 = vpack.c.b16 %v747, %v746
        %v751 = vpack.c.b16 %v749, %v748
        %v755 = vsel %vm645, %v731, 0
        %v758 = vsel %vm645, %v732, 0
        %v761 = vsel %vm645, %v733, 0
        %763 = vmatprep.subr.bf16.mxu0 0
        %764 = vmatpush1.bf16.msra.mxu0 0
        %765 = vmatprep.subr.bf16.mxu0 0
        %766 = vmatpush1.bf16.msra.mxu0 0
        %767 = vmatprep.subr.bf16.mxu0 0
        %768 = vmatpush1.bf16.msra.mxu0 0
        %769 = vmatprep.subr.bf16.mxu0 0
        %770 = vmatpush1.bf16.msra.mxu0 0
        %771 = vmatprep.subr.bf16.mxu0 0
        %772 = vmatpush1.bf16.msra.mxu0 0
        %773 = vmatprep.subr.bf16.mxu0 0
        %774 = vmatpush1.bf16.msra.mxu0 0
        %775 = vmatprep.subr.bf16.mxu0 0
        %776 = vmatpush1.bf16.msra.mxu0 %v751
        %777 = vmatprep.subr.bf16.mxu0 0
        %778 = vmatpush1.bf16.msra.mxu0 %v750
        %779 = vmatprep.subr.bf16.mxu0 0
        %780 = vmatpush2.bf16.msra.mxu0 0
        %781 = vmatprep.subr.bf16.mxu0 0
        %782 = vmatpush2.bf16.msra.mxu0 0
        %783 = vmatprep.subr.bf16.mxu0 0
        %784 = vmatpush2.bf16.msra.mxu0 0
        %785 = vmatprep.subr.bf16.mxu0 0
        %786 = vmatpush2.bf16.msra.mxu0 0
        %787 = vmatprep.subr.bf16.mxu0 0
        %788 = vmatpush2.bf16.msra.mxu0 0
        %789 = vmatprep.subr.bf16.mxu0 0
        %790 = vmatpush2.bf16.msra.mxu0 0
        %791 = vmatprep.subr.bf16.mxu0 0
        %792 = vmatpush2.bf16.msra.mxu0 0
        %793 = vmatprep.subr.bf16.mxu0 0
        %794 = vmatpush2.bf16.msra.mxu0 0
        %795 = vmatprep.mubr.bf16.mxu0 0
        %796 = vmatmul.mubr.bf16.gmra.mxu0 %v755
        %v797 = vpop.f32.mrf.mxu0
        %v798 = vadd.f32 %v741, %v797
        %v799 = vpop.f32.mrf.mxu0
        %v800 = vpop.f32.mrf.mxu0
        %v801 = vadd.f32 %v741, %v800
        %v802 = vpop.f32.mrf.mxu0
        %803 = vmatprep.mubr.bf16.mxu0 0
        %804 = vmatmul.mubr.bf16.gmra.mxu0 %v758
        %v805 = vpop.f32.mrf.mxu0
        %v806 = vadd.f32 %v741, %v805
        %v807 = vpop.f32.mrf.mxu0
        %v808 = vpop.f32.mrf.mxu0
        %v809 = vadd.f32 %v741, %v808
        %v810 = vpop.f32.mrf.mxu0
        %811 = vmatprep.mubr.bf16.mxu0 0
        %812 = vmatmul.mubr.bf16.gmra.mxu0 %v761
        %v813 = vpop.f32.mrf.mxu0
        %v814 = vadd.f32 %v741, %v813
        %v815 = vpop.f32.mrf.mxu0
        %v816 = vpop.f32.mrf.mxu0
        %v817 = vpop.f32.mrf.mxu0
        %818 = vdwg.mxu0
        %v819 = vmul.f32 %v798, 0.35355338
        %v820 = vmul.f32 %v801, 0.35355338
        %v821 = vmul.f32 %v806, 0.35355338
        %v822 = vmul.f32 %v809, 0.35355338
        %v823 = vmul.f32 %v814, 0.35355338
        %v824 = vpack.c.bf16 %v820, %v819
        %v825 = vpack.c.bf16 %v822, %v821
        %v826 = vpack.c.bf16 %v823, %v823
        %v827 = vpack.c.bf16 %v801, %v798
        %v828 = vpack.c.bf16 %v809, %v806
        %v829 = vpack.c.bf16 %v814, %v814
        %832 = vrot.lane.b32.xlu0 %v827, 96
        %v833 = vpop.permute.xlu0 %832
        %834 = vrot.lane.b32.xlu0 %v828, 96
        %v835 = vpop.permute.xlu0 %834
        %vm836 = vcmask 64512
        %v838 = vsel %vm836, %v824, 0
        %v841 = vsel %vm836, %v825, 0
        %v844 = vsel %vm836, %v833, 0
        %v847 = vsel %vm836, %v835, 0
        %849 = vmatprep.subr.bf16.mxu0 0
        %850 = vmatpush1.bf16.xpose.msra.mxu0 0
        %851 = vmatprep.subr.bf16.mxu0 0
        %852 = vmatpush1.bf16.xpose.msra.mxu0 0
        %853 = vmatprep.subr.bf16.mxu0 0
        %854 = vmatpush1.bf16.xpose.msra.mxu0 0
        %855 = vmatprep.subr.bf16.mxu0 0
        %856 = vmatpush1.bf16.xpose.msra.mxu0 0
        %857 = vmatprep.subr.bf16.mxu0 0
        %858 = vmatpush1.bf16.xpose.msra.mxu0 0
        %859 = vmatprep.subr.bf16.mxu0 0
        %860 = vmatpush1.bf16.xpose.msra.mxu0 0
        %861 = vmatprep.subr.bf16.mxu0 0
        %862 = vmatpush1.bf16.xpose.msra.mxu0 %v847
        %863 = vmatprep.subr.bf16.mxu0 0
        %864 = vmatpush1.bf16.xpose.msra.mxu0 %v844
        %865 = vmatprep.subr.bf16.mxu0 0
        %866 = vmatpush2.bf16.xpose.msra.mxu0 0
        %867 = vmatprep.subr.bf16.mxu0 0
        %868 = vmatpush2.bf16.xpose.msra.mxu0 0
        %869 = vmatprep.subr.bf16.mxu0 0
        %870 = vmatpush2.bf16.xpose.msra.mxu0 0
        %871 = vmatprep.subr.bf16.mxu0 0
        %872 = vmatpush2.bf16.xpose.msra.mxu0 0
        %873 = vmatprep.subr.bf16.mxu0 0
        %874 = vmatpush2.bf16.xpose.msra.mxu0 0
        %875 = vmatprep.subr.bf16.mxu0 0
        %876 = vmatpush2.bf16.xpose.msra.mxu0 0
        %877 = vmatprep.subr.bf16.mxu0 0
        %878 = vmatpush2.bf16.xpose.msra.mxu0 0
        %879 = vmatprep.subr.bf16.mxu0 0
        %880 = vmatpush2.bf16.xpose.msra.mxu0 0
        %881 = vmatprep.mubr.bf16.mxu0 0
        %882 = vmatmul.mubr.bf16.gmra.mxu0 %v838
        %v883 = vpop.f32.mrf.mxu0
        %v884 = vadd.f32 0.0, %v883
        %v885 = vpop.f32.mrf.mxu0
        %v886 = vpop.f32.mrf.mxu0
        %v887 = vadd.f32 0.0, %v886
        %v888 = vpop.f32.mrf.mxu0
        %889 = vmatprep.mubr.bf16.mxu0 0
        %890 = vmatmul.mubr.bf16.gmra.mxu0 %v841
        %v891 = vpop.f32.mrf.mxu0
        %v892 = vadd.f32 0.0, %v891
        %v893 = vpop.f32.mrf.mxu0
        %v894 = vpop.f32.mrf.mxu0
        %v895 = vpop.f32.mrf.mxu0
        %896 = vdwg.mxu0
        %vm897 = vcmask 138240
        %v898 = vsel %vm897, %v884, -inf
        %899 = vmax.xlane.f32.xlu0 %v898
        %v900 = vpop.xlane.xlu0 %899
        %v901 = vsel %vm897, %v887, -inf
        %902 = vmax.xlane.f32.xlu0 %v901
        %v903 = vpop.xlane.xlu0 %902
        %vm904 = vcmask 131072
        %v905 = vsel %vm904, %v892, -inf
        %906 = vmax.xlane.f32.xlu0 %v905
        %v907 = vpop.xlane.xlu0 %906
        %v908 = vsub.f32 %v884, %v900
        %v909 = vsub.f32 %v887, %v903
        %v910 = vsub.f32 %v892, %v907
        %v911 = vmul.f32 %v908, 1.442695
        %v912 = vpow.pop %v911
        %v913 = vmul.f32 %v909, 1.442695
        %v914 = vpow.pop %v913
        %v915 = vmul.f32 %v910, 1.442695
        %v916 = vpow.pop %v915
        %v917 = vsel %vm897, %v912, 0.0
        %918 = vadd.xlane.f32.xlu0 %v917
        %v919 = vpop.xlane.xlu0 %918
        %v920 = vsel %vm897, %v914, 0.0
        %921 = vadd.xlane.f32.xlu0 %v920
        %v922 = vpop.xlane.xlu0 %921
        %v923 = vsel %vm904, %v916, 0.0
        %924 = vadd.xlane.f32.xlu0 %v923
        %v925 = vpop.xlane.xlu0 %924
        %v926 = vrcp.pop %v919
        %v927 = vrcp.pop %v922
        %v928 = vrcp.pop %v925
        %v929 = vmul.f32 %v912, %v926
        %v930 = vmul.f32 %v914, %v927
        %v931 = vmul.f32 %v916, %v928
        %v932 = vpack.c.bf16 %v930, %v929
        %v933 = vpack.c.bf16 %v931, %v931
        %934 = vrot.lane.b32.xlu0 %v827, 64
        %v935 = vpop.permute.xlu0 %934
        %936 = vrot.lane.b32.xlu0 %v828, 64
        %v937 = vpop.permute.xlu0 %936
        %v940 = vsel %vm897, %v932, 0
        %v943 = vsel %vm897, %v933, 0
        %vm945 = vcmask 1040384
        %v946 = vsel 0, 4294967295, 65535
        %v947 = vsel %vm945, %v946, 0
        %v949 = vand.u32 %v937, %v947
        %951 = vmatprep.subr.bf16.mxu0 0
        %952 = vmatpush1.bf16.msra.mxu0 0
        %953 = vmatprep.subr.bf16.mxu0 0
        %954 = vmatpush1.bf16.msra.mxu0 0
        %955 = vmatprep.subr.bf16.mxu0 0
        %956 = vmatpush1.bf16.msra.mxu0 0
        %957 = vmatprep.subr.bf16.mxu0 0
        %958 = vmatpush1.bf16.msra.mxu0 0
        %959 = vmatprep.subr.bf16.mxu0 0
        %960 = vmatpush1.bf16.msra.mxu0 0
        %961 = vmatprep.subr.bf16.mxu0 0
        %962 = vmatpush1.bf16.msra.mxu0 0
        %963 = vmatprep.subr.bf16.mxu0 0
        %964 = vmatpush1.bf16.msra.mxu0 %v949
        %965 = vmatprep.subr.bf16.mxu0 0
        %966 = vmatpush1.bf16.msra.mxu0 %v935
        %967 = vmatprep.subr.bf16.mxu0 0
        %968 = vmatpush2.bf16.msra.mxu0 0
        %969 = vmatprep.subr.bf16.mxu0 0
        %970 = vmatpush2.bf16.msra.mxu0 0
        %971 = vmatprep.subr.bf16.mxu0 0
        %972 = vmatpush2.bf16.msra.mxu0 0
        %973 = vmatprep.subr.bf16.mxu0 0
        %974 = vmatpush2.bf16.msra.mxu0 0
        %975 = vmatprep.subr.bf16.mxu0 0
        %976 = vmatpush2.bf16.msra.mxu0 0
        %977 = vmatprep.subr.bf16.mxu0 0
        %978 = vmatpush2.bf16.msra.mxu0 0
        %979 = vmatprep.subr.bf16.mxu0 0
        %980 = vmatpush2.bf16.msra.mxu0 0
        %981 = vmatprep.subr.bf16.mxu0 0
        %982 = vmatpush2.bf16.msra.mxu0 0
        %983 = vmatprep.mubr.bf16.mxu0 0
        %984 = vmatmul.mubr.bf16.gmra.mxu0 %v940
        %v985 = vpop.f32.mrf.mxu0
        %v986 = vadd.f32 0.0, %v985
        %v987 = vpop.f32.mrf.mxu0
        %v988 = vpop.f32.mrf.mxu0
        %v989 = vadd.f32 0.0, %v988
        %v990 = vpop.f32.mrf.mxu0
        %991 = vmatprep.mubr.bf16.mxu0 0
        %992 = vmatmul.mubr.bf16.gmra.mxu0 %v943
        %v993 = vpop.f32.mrf.mxu0
        %v994 = vadd.f32 0.0, %v993
        %v995 = vpop.f32.mrf.mxu0
        %v996 = vpop.f32.mrf.mxu0
        %v997 = vpop.f32.mrf.mxu0
        %998 = vdwg.mxu0
        %1001 = vrot.lane.b32.xlu0 %v824, 120
        %v1002 = vpop.permute.xlu0 %1001
        %1003 = vrot.lane.b32.xlu0 %v825, 120
        %v1004 = vpop.permute.xlu0 %1003
        %1005 = vrot.lane.b32.xlu0 %v827, 88
        %v1006 = vpop.permute.xlu0 %1005
        %1007 = vrot.lane.b32.xlu0 %v828, 88
        %v1008 = vpop.permute.xlu0 %1007
        %v1010 = vsel %vm836, %v1002, 0
        %v1013 = vsel %vm836, %v1004, 0
        %v1016 = vsel %vm836, %v1006, 0
        %v1019 = vsel %vm836, %v1008, 0
        %1021 = vmatprep.subr.bf16.mxu0 0
        %1022 = vmatpush1.bf16.xpose.msra.mxu0 0
        %1023 = vmatprep.subr.bf16.mxu0 0
        %1024 = vmatpush1.bf16.xpose.msra.mxu0 0
        %1025 = vmatprep.subr.bf16.mxu0 0
        %1026 = vmatpush1.bf16.xpose.msra.mxu0 0
        %1027 = vmatprep.subr.bf16.mxu0 0
        %1028 = vmatpush1.bf16.xpose.msra.mxu0 0
        %1029 = vmatprep.subr.bf16.mxu0 0
        %1030 = vmatpush1.bf16.xpose.msra.mxu0 0
        %1031 = vmatprep.subr.bf16.mxu0 0
        %1032 = vmatpush1.bf16.xpose.msra.mxu0 0
        %1033 = vmatprep.subr.bf16.mxu0 0
        %1034 = vmatpush1.bf16.xpose.msra.mxu0 %v1019
        %1035 = vmatprep.subr.bf16.mxu0 0
        %1036 = vmatpush1.bf16.xpose.msra.mxu0 %v1016
        %1037 = vmatprep.subr.bf16.mxu0 0
        %1038 = vmatpush2.bf16.xpose.msra.mxu0 0
        %1039 = vmatprep.subr.bf16.mxu0 0
        %1040 = vmatpush2.bf16.xpose.msra.mxu0 0
        %1041 = vmatprep.subr.bf16.mxu0 0
        %1042 = vmatpush2.bf16.xpose.msra.mxu0 0
        %1043 = vmatprep.subr.bf16.mxu0 0
        %1044 = vmatpush2.bf16.xpose.msra.mxu0 0
        %1045 = vmatprep.subr.bf16.mxu0 0
        %1046 = vmatpush2.bf16.xpose.msra.mxu0 0
        %1047 = vmatprep.subr.bf16.mxu0 0
        %1048 = vmatpush2.bf16.xpose.msra.mxu0 0
        %1049 = vmatprep.subr.bf16.mxu0 0
        %1050 = vmatpush2.bf16.xpose.msra.mxu0 0
        %1051 = vmatprep.subr.bf16.mxu0 0
        %1052 = vmatpush2.bf16.xpose.msra.mxu0 0
        %1053 = vmatprep.mubr.bf16.mxu0 0
        %1054 = vmatmul.mubr.bf16.gmra.mxu0 %v1010
        %v1055 = vpop.f32.mrf.mxu0
        %v1056 = vadd.f32 0.0, %v1055
        %v1057 = vpop.f32.mrf.mxu0
        %v1058 = vpop.f32.mrf.mxu0
        %v1059 = vadd.f32 0.0, %v1058
        %v1060 = vpop.f32.mrf.mxu0
        %1061 = vmatprep.mubr.bf16.mxu0 0
        %1062 = vmatmul.mubr.bf16.gmra.mxu0 %v1013
        %v1063 = vpop.f32.mrf.mxu0
        %v1064 = vadd.f32 0.0, %v1063
        %v1065 = vpop.f32.mrf.mxu0
        %v1066 = vpop.f32.mrf.mxu0
        %v1067 = vpop.f32.mrf.mxu0
        %1068 = vdwg.mxu0
        %v1069 = vsel %vm897, %v1056, -inf
        %1070 = vmax.xlane.f32.xlu0 %v1069
        %v1071 = vpop.xlane.xlu0 %1070
        %v1072 = vsel %vm897, %v1059, -inf
        %1073 = vmax.xlane.f32.xlu0 %v1072
        %v1074 = vpop.xlane.xlu0 %1073
        %v1075 = vsel %vm904, %v1064, -inf
        %1076 = vmax.xlane.f32.xlu0 %v1075
        %v1077 = vpop.xlane.xlu0 %1076
        %v1078 = vsub.f32 %v1056, %v1071
        %v1079 = vsub.f32 %v1059, %v1074
        %v1080 = vsub.f32 %v1064, %v1077
        %v1081 = vmul.f32 %v1078, 1.442695
        %v1082 = vpow.pop %v1081
        %v1083 = vmul.f32 %v1079, 1.442695
        %v1084 = vpow.pop %v1083
        %v1085 = vmul.f32 %v1080, 1.442695
        %v1086 = vpow.pop %v1085
        %v1087 = vsel %vm897, %v1082, 0.0
        %1088 = vadd.xlane.f32.xlu0 %v1087
        %v1089 = vpop.xlane.xlu0 %1088
        %v1090 = vsel %vm897, %v1084, 0.0
        %1091 = vadd.xlane.f32.xlu0 %v1090
        %v1092 = vpop.xlane.xlu0 %1091
        %v1093 = vsel %vm904, %v1086, 0.0
        %1094 = vadd.xlane.f32.xlu0 %v1093
        %v1095 = vpop.xlane.xlu0 %1094
        %v1096 = vrcp.pop %v1089
        %v1097 = vrcp.pop %v1092
        %v1098 = vrcp.pop %v1095
        %v1099 = vmul.f32 %v1082, %v1096
        %v1100 = vmul.f32 %v1084, %v1097
        %v1101 = vmul.f32 %v1086, %v1098
        %v1102 = vpack.c.bf16 %v1100, %v1099
        %v1103 = vpack.c.bf16 %v1101, %v1101
        %1104 = vrot.lane.b32.xlu0 %v827, 56
        %v1105 = vpop.permute.xlu0 %1104
        %1106 = vrot.lane.b32.xlu0 %v828, 56
        %v1107 = vpop.permute.xlu0 %1106
        %v1110 = vsel %vm897, %v1102, 0
        %v1113 = vsel %vm897, %v1103, 0
        %v1116 = vand.u32 %v1107, %v947
        %1118 = vmatprep.subr.bf16.mxu0 0
        %1119 = vmatpush1.bf16.msra.mxu0 0
        %1120 = vmatprep.subr.bf16.mxu0 0
        %1121 = vmatpush1.bf16.msra.mxu0 0
        %1122 = vmatprep.subr.bf16.mxu0 0
        %1123 = vmatpush1.bf16.msra.mxu0 0
        %1124 = vmatprep.subr.bf16.mxu0 0
        %1125 = vmatpush1.bf16.msra.mxu0 0
        %1126 = vmatprep.subr.bf16.mxu0 0
        %1127 = vmatpush1.bf16.msra.mxu0 0
        %1128 = vmatprep.subr.bf16.mxu0 0
        %1129 = vmatpush1.bf16.msra.mxu0 0
        %1130 = vmatprep.subr.bf16.mxu0 0
        %1131 = vmatpush1.bf16.msra.mxu0 %v1116
        %1132 = vmatprep.subr.bf16.mxu0 0
        %1133 = vmatpush1.bf16.msra.mxu0 %v1105
        %1134 = vmatprep.subr.bf16.mxu0 0
        %1135 = vmatpush2.bf16.msra.mxu0 0
        %1136 = vmatprep.subr.bf16.mxu0 0
        %1137 = vmatpush2.bf16.msra.mxu0 0
        %1138 = vmatprep.subr.bf16.mxu0 0
        %1139 = vmatpush2.bf16.msra.mxu0 0
        %1140 = vmatprep.subr.bf16.mxu0 0
        %1141 = vmatpush2.bf16.msra.mxu0 0
        %1142 = vmatprep.subr.bf16.mxu0 0
        %1143 = vmatpush2.bf16.msra.mxu0 0
        %1144 = vmatprep.subr.bf16.mxu0 0
        %1145 = vmatpush2.bf16.msra.mxu0 0
        %1146 = vmatprep.subr.bf16.mxu0 0
        %1147 = vmatpush2.bf16.msra.mxu0 0
        %1148 = vmatprep.subr.bf16.mxu0 0
        %1149 = vmatpush2.bf16.msra.mxu0 0
        %1150 = vmatprep.mubr.bf16.mxu0 0
        %1151 = vmatmul.mubr.bf16.gmra.mxu0 %v1110
        %v1152 = vpop.f32.mrf.mxu0
        %v1153 = vadd.f32 0.0, %v1152
        %v1154 = vpop.f32.mrf.mxu0
        %v1155 = vpop.f32.mrf.mxu0
        %v1156 = vadd.f32 0.0, %v1155
        %v1157 = vpop.f32.mrf.mxu0
        %1158 = vmatprep.mubr.bf16.mxu0 0
        %1159 = vmatmul.mubr.bf16.gmra.mxu0 %v1113
        %v1160 = vpop.f32.mrf.mxu0
        %v1161 = vadd.f32 0.0, %v1160
        %v1162 = vpop.f32.mrf.mxu0
        %v1163 = vpop.f32.mrf.mxu0
        %v1164 = vpop.f32.mrf.mxu0
        %1165 = vdwg.mxu0
        %1166 = vrot.lane.b32.xlu0 %v824, 112
        %v1167 = vpop.permute.xlu0 %1166
        %1168 = vrot.lane.b32.xlu0 %v825, 112
        %v1169 = vpop.permute.xlu0 %1168
        %1170 = vrot.lane.b32.xlu0 %v827, 80
        %v1171 = vpop.permute.xlu0 %1170
        %1172 = vrot.lane.b32.xlu0 %v828, 80
        %v1173 = vpop.permute.xlu0 %1172
        %v1175 = vsel %vm836, %v1167, 0
        %v1178 = vsel %vm836, %v1169, 0
        %v1181 = vsel %vm836, %v1171, 0
        %v1184 = vsel %vm836, %v1173, 0
        %1186 = vmatprep.subr.bf16.mxu0 0
        %1187 = vmatpush1.bf16.xpose.msra.mxu0 0
        %1188 = vmatprep.subr.bf16.mxu0 0
        %1189 = vmatpush1.bf16.xpose.msra.mxu0 0
        %1190 = vmatprep.subr.bf16.mxu0 0
        %1191 = vmatpush1.bf16.xpose.msra.mxu0 0
        %1192 = vmatprep.subr.bf16.mxu0 0
        %1193 = vmatpush1.bf16.xpose.msra.mxu0 0
        %1194 = vmatprep.subr.bf16.mxu0 0
        %1195 = vmatpush1.bf16.xpose.msra.mxu0 0
        %1196 = vmatprep.subr.bf16.mxu0 0
        %1197 = vmatpush1.bf16.xpose.msra.mxu0 0
        %1198 = vmatprep.subr.bf16.mxu0 0
        %1199 = vmatpush1.bf16.xpose.msra.mxu0 %v1184
        %1200 = vmatprep.subr.bf16.mxu0 0
        %1201 = vmatpush1.bf16.xpose.msra.mxu0 %v1181
        %1202 = vmatprep.subr.bf16.mxu0 0
        %1203 = vmatpush2.bf16.xpose.msra.mxu0 0
        %1204 = vmatprep.subr.bf16.mxu0 0
        %1205 = vmatpush2.bf16.xpose.msra.mxu0 0
        %1206 = vmatprep.subr.bf16.mxu0 0
        %1207 = vmatpush2.bf16.xpose.msra.mxu0 0
        %1208 = vmatprep.subr.bf16.mxu0 0
        %1209 = vmatpush2.bf16.xpose.msra.mxu0 0
        %1210 = vmatprep.subr.bf16.mxu0 0
        %1211 = vmatpush2.bf16.xpose.msra.mxu0 0
        %1212 = vmatprep.subr.bf16.mxu0 0
        %1213 = vmatpush2.bf16.xpose.msra.mxu0 0
        %1214 = vmatprep.subr.bf16.mxu0 0
        %1215 = vmatpush2.bf16.xpose.msra.mxu0 0
        %1216 = vmatprep.subr.bf16.mxu0 0
        %1217 = vmatpush2.bf16.xpose.msra.mxu0 0
        %1218 = vmatprep.mubr.bf16.mxu0 0
        %1219 = vmatmul.mubr.bf16.gmra.mxu0 %v1175
        %v1220 = vpop.f32.mrf.mxu0
        %v1221 = vadd.f32 0.0, %v1220
        %v1222 = vpop.f32.mrf.mxu0
        %v1223 = vpop.f32.mrf.mxu0
        %v1224 = vadd.f32 0.0, %v1223
        %v1225 = vpop.f32.mrf.mxu0
        %1226 = vmatprep.mubr.bf16.mxu0 0
        %1227 = vmatmul.mubr.bf16.gmra.mxu0 %v1178
        %v1228 = vpop.f32.mrf.mxu0
        %v1229 = vadd.f32 0.0, %v1228
        %v1230 = vpop.f32.mrf.mxu0
        %v1231 = vpop.f32.mrf.mxu0
        %v1232 = vpop.f32.mrf.mxu0
        %1233 = vdwg.mxu0
        %v1234 = vsel %vm897, %v1221, -inf
        %1235 = vmax.xlane.f32.xlu0 %v1234
        %v1236 = vpop.xlane.xlu0 %1235
        %v1237 = vsel %vm897, %v1224, -inf
        %1238 = vmax.xlane.f32.xlu0 %v1237
        %v1239 = vpop.xlane.xlu0 %1238
        %v1240 = vsel %vm904, %v1229, -inf
        %1241 = vmax.xlane.f32.xlu0 %v1240
        %v1242 = vpop.xlane.xlu0 %1241
        %v1243 = vsub.f32 %v1221, %v1236
        %v1244 = vsub.f32 %v1224, %v1239
        %v1245 = vsub.f32 %v1229, %v1242
        %v1246 = vmul.f32 %v1243, 1.442695
        %v1247 = vpow.pop %v1246
        %v1248 = vmul.f32 %v1244, 1.442695
        %v1249 = vpow.pop %v1248
        %v1250 = vmul.f32 %v1245, 1.442695
        %v1251 = vpow.pop %v1250
        %v1252 = vsel %vm897, %v1247, 0.0
        %1253 = vadd.xlane.f32.xlu0 %v1252
        %v1254 = vpop.xlane.xlu0 %1253
        %v1255 = vsel %vm897, %v1249, 0.0
        %1256 = vadd.xlane.f32.xlu0 %v1255
        %v1257 = vpop.xlane.xlu0 %1256
        %v1258 = vsel %vm904, %v1251, 0.0
        %1259 = vadd.xlane.f32.xlu0 %v1258
        %v1260 = vpop.xlane.xlu0 %1259
        %v1261 = vrcp.pop %v1254
        %v1262 = vrcp.pop %v1257
        %v1263 = vrcp.pop %v1260
        %v1264 = vmul.f32 %v1247, %v1261
        %v1265 = vmul.f32 %v1249, %v1262
        %v1266 = vmul.f32 %v1251, %v1263
        %v1267 = vpack.c.bf16 %v1265, %v1264
        %v1268 = vpack.c.bf16 %v1266, %v1266
        %1269 = vrot.lane.b32.xlu0 %v827, 48
        %v1270 = vpop.permute.xlu0 %1269
        %1271 = vrot.lane.b32.xlu0 %v828, 48
        %v1272 = vpop.permute.xlu0 %1271
        %v1275 = vsel %vm897, %v1267, 0
        %v1278 = vsel %vm897, %v1268, 0
        %v1281 = vand.u32 %v1272, %v947
        %1283 = vmatprep.subr.bf16.mxu0 0
        %1284 = vmatpush1.bf16.msra.mxu0 0
        %1285 = vmatprep.subr.bf16.mxu0 0
        %1286 = vmatpush1.bf16.msra.mxu0 0
        %1287 = vmatprep.subr.bf16.mxu0 0
        %1288 = vmatpush1.bf16.msra.mxu0 0
        %1289 = vmatprep.subr.bf16.mxu0 0
        %1290 = vmatpush1.bf16.msra.mxu0 0
        %1291 = vmatprep.subr.bf16.mxu0 0
        %1292 = vmatpush1.bf16.msra.mxu0 0
        %1293 = vmatprep.subr.bf16.mxu0 0
        %1294 = vmatpush1.bf16.msra.mxu0 0
        %1295 = vmatprep.subr.bf16.mxu0 0
        %1296 = vmatpush1.bf16.msra.mxu0 %v1281
        %1297 = vmatprep.subr.bf16.mxu0 0
        %1298 = vmatpush1.bf16.msra.mxu0 %v1270
        %1299 = vmatprep.subr.bf16.mxu0 0
        %1300 = vmatpush2.bf16.msra.mxu0 0
        %1301 = vmatprep.subr.bf16.mxu0 0
        %1302 = vmatpush2.bf16.msra.mxu0 0
        %1303 = vmatprep.subr.bf16.mxu0 0
        %1304 = vmatpush2.bf16.msra.mxu0 0
        %1305 = vmatprep.subr.bf16.mxu0 0
        %1306 = vmatpush2.bf16.msra.mxu0 0
        %1307 = vmatprep.subr.bf16.mxu0 0
        %1308 = vmatpush2.bf16.msra.mxu0 0
        %1309 = vmatprep.subr.bf16.mxu0 0
        %1310 = vmatpush2.bf16.msra.mxu0 0
        %1311 = vmatprep.subr.bf16.mxu0 0
        %1312 = vmatpush2.bf16.msra.mxu0 0
        %1313 = vmatprep.subr.bf16.mxu0 0
        %1314 = vmatpush2.bf16.msra.mxu0 0
        %1315 = vmatprep.mubr.bf16.mxu0 0
        %1316 = vmatmul.mubr.bf16.gmra.mxu0 %v1275
        %v1317 = vpop.f32.mrf.mxu0
        %v1318 = vadd.f32 0.0, %v1317
        %v1319 = vpop.f32.mrf.mxu0
        %v1320 = vpop.f32.mrf.mxu0
        %v1321 = vadd.f32 0.0, %v1320
        %v1322 = vpop.f32.mrf.mxu0
        %1323 = vmatprep.mubr.bf16.mxu0 0
        %1324 = vmatmul.mubr.bf16.gmra.mxu0 %v1278
        %v1325 = vpop.f32.mrf.mxu0
        %v1326 = vadd.f32 0.0, %v1325
        %v1327 = vpop.f32.mrf.mxu0
        %v1328 = vpop.f32.mrf.mxu0
        %v1329 = vpop.f32.mrf.mxu0
        %1330 = vdwg.mxu0
        %1331 = vrot.lane.b32.xlu0 %v824, 104
        %v1332 = vpop.permute.xlu0 %1331
        %1333 = vrot.lane.b32.xlu0 %v825, 104
        %v1334 = vpop.permute.xlu0 %1333
        %1335 = vrot.lane.b32.xlu0 %v827, 72
        %v1336 = vpop.permute.xlu0 %1335
        %1337 = vrot.lane.b32.xlu0 %v828, 72
        %v1338 = vpop.permute.xlu0 %1337
        %v1340 = vsel %vm836, %v1332, 0
        %v1343 = vsel %vm836, %v1334, 0
        %v1346 = vsel %vm836, %v1336, 0
        %v1349 = vsel %vm836, %v1338, 0
        %1351 = vmatprep.subr.bf16.mxu0 0
        %1352 = vmatpush1.bf16.xpose.msra.mxu0 0
        %1353 = vmatprep.subr.bf16.mxu0 0
        %1354 = vmatpush1.bf16.xpose.msra.mxu0 0
        %1355 = vmatprep.subr.bf16.mxu0 0
        %1356 = vmatpush1.bf16.xpose.msra.mxu0 0
        %1357 = vmatprep.subr.bf16.mxu0 0
        %1358 = vmatpush1.bf16.xpose.msra.mxu0 0
        %1359 = vmatprep.subr.bf16.mxu0 0
        %1360 = vmatpush1.bf16.xpose.msra.mxu0 0
        %1361 = vmatprep.subr.bf16.mxu0 0
        %1362 = vmatpush1.bf16.xpose.msra.mxu0 0
        %1363 = vmatprep.subr.bf16.mxu0 0
        %1364 = vmatpush1.bf16.xpose.msra.mxu0 %v1349
        %1365 = vmatprep.subr.bf16.mxu0 0
        %1366 = vmatpush1.bf16.xpose.msra.mxu0 %v1346
        %1367 = vmatprep.subr.bf16.mxu0 0
        %1368 = vmatpush2.bf16.xpose.msra.mxu0 0
        %1369 = vmatprep.subr.bf16.mxu0 0
        %1370 = vmatpush2.bf16.xpose.msra.mxu0 0
        %1371 = vmatprep.subr.bf16.mxu0 0
        %1372 = vmatpush2.bf16.xpose.msra.mxu0 0
        %1373 = vmatprep.subr.bf16.mxu0 0
        %1374 = vmatpush2.bf16.xpose.msra.mxu0 0
        %1375 = vmatprep.subr.bf16.mxu0 0
        %1376 = vmatpush2.bf16.xpose.msra.mxu0 0
        %1377 = vmatprep.subr.bf16.mxu0 0
        %1378 = vmatpush2.bf16.xpose.msra.mxu0 0
        %1379 = vmatprep.subr.bf16.mxu0 0
        %1380 = vmatpush2.bf16.xpose.msra.mxu0 0
        %1381 = vmatprep.subr.bf16.mxu0 0
        %1382 = vmatpush2.bf16.xpose.msra.mxu0 0
        %1383 = vmatprep.mubr.bf16.mxu0 0
        %1384 = vmatmul.mubr.bf16.gmra.mxu0 %v1340
        %v1385 = vpop.f32.mrf.mxu0
        %v1386 = vadd.f32 0.0, %v1385
        %v1387 = vpop.f32.mrf.mxu0
        %v1388 = vpop.f32.mrf.mxu0
        %v1389 = vadd.f32 0.0, %v1388
        %v1390 = vpop.f32.mrf.mxu0
        %1391 = vmatprep.mubr.bf16.mxu0 0
        %1392 = vmatmul.mubr.bf16.gmra.mxu0 %v1343
        %v1393 = vpop.f32.mrf.mxu0
        %v1394 = vadd.f32 0.0, %v1393
        %v1395 = vpop.f32.mrf.mxu0
        %v1396 = vpop.f32.mrf.mxu0
        %v1397 = vpop.f32.mrf.mxu0
        %1398 = vdwg.mxu0
        %v1399 = vsel %vm897, %v1386, -inf
        %1400 = vmax.xlane.f32.xlu0 %v1399
        %v1401 = vpop.xlane.xlu0 %1400
        %v1402 = vsel %vm897, %v1389, -inf
        %1403 = vmax.xlane.f32.xlu0 %v1402
        %v1404 = vpop.xlane.xlu0 %1403
        %v1405 = vsel %vm904, %v1394, -inf
        %1406 = vmax.xlane.f32.xlu0 %v1405
        %v1407 = vpop.xlane.xlu0 %1406
        %v1408 = vsub.f32 %v1386, %v1401
        %v1409 = vsub.f32 %v1389, %v1404
        %v1410 = vsub.f32 %v1394, %v1407
        %v1411 = vmul.f32 %v1408, 1.442695
        %v1412 = vpow.pop %v1411
        %v1413 = vmul.f32 %v1409, 1.442695
        %v1414 = vpow.pop %v1413
        %v1415 = vmul.f32 %v1410, 1.442695
        %v1416 = vpow.pop %v1415
        %v1417 = vsel %vm897, %v1412, 0.0
        %1418 = vadd.xlane.f32.xlu0 %v1417
        %v1419 = vpop.xlane.xlu0 %1418
        %v1420 = vsel %vm897, %v1414, 0.0
        %1421 = vadd.xlane.f32.xlu0 %v1420
        %v1422 = vpop.xlane.xlu0 %1421
        %v1423 = vsel %vm904, %v1416, 0.0
        %1424 = vadd.xlane.f32.xlu0 %v1423
        %v1425 = vpop.xlane.xlu0 %1424
        %v1426 = vrcp.pop %v1419
        %v1427 = vrcp.pop %v1422
        %v1428 = vrcp.pop %v1425
        %v1429 = vmul.f32 %v1412, %v1426
        %v1430 = vmul.f32 %v1414, %v1427
        %v1431 = vmul.f32 %v1416, %v1428
        %v1432 = vpack.c.bf16 %v1430, %v1429
        %v1433 = vpack.c.bf16 %v1431, %v1431
        %1434 = vrot.lane.b32.xlu0 %v827, 40
        %v1435 = vpop.permute.xlu0 %1434
        %1436 = vrot.lane.b32.xlu0 %v828, 40
        %v1437 = vpop.permute.xlu0 %1436
        %v1440 = vsel %vm897, %v1432, 0
        %v1443 = vsel %vm897, %v1433, 0
        %v1446 = vand.u32 %v1437, %v947
        %1448 = vmatprep.subr.bf16.mxu0 0
        %1449 = vmatpush1.bf16.msra.mxu0 0
        %1450 = vmatprep.subr.bf16.mxu0 0
        %1451 = vmatpush1.bf16.msra.mxu0 0
        %1452 = vmatprep.subr.bf16.mxu0 0
        %1453 = vmatpush1.bf16.msra.mxu0 0
        %1454 = vmatprep.subr.bf16.mxu0 0
        %1455 = vmatpush1.bf16.msra.mxu0 0
        %1456 = vmatprep.subr.bf16.mxu0 0
        %1457 = vmatpush1.bf16.msra.mxu0 0
        %1458 = vmatprep.subr.bf16.mxu0 0
        %1459 = vmatpush1.bf16.msra.mxu0 0
        %1460 = vmatprep.subr.bf16.mxu0 0
        %1461 = vmatpush1.bf16.msra.mxu0 %v1446
        %1462 = vmatprep.subr.bf16.mxu0 0
        %1463 = vmatpush1.bf16.msra.mxu0 %v1435
        %1464 = vmatprep.subr.bf16.mxu0 0
        %1465 = vmatpush2.bf16.msra.mxu0 0
        %1466 = vmatprep.subr.bf16.mxu0 0
        %1467 = vmatpush2.bf16.msra.mxu0 0
        %1468 = vmatprep.subr.bf16.mxu0 0
        %1469 = vmatpush2.bf16.msra.mxu0 0
        %1470 = vmatprep.subr.bf16.mxu0 0
        %1471 = vmatpush2.bf16.msra.mxu0 0
        %1472 = vmatprep.subr.bf16.mxu0 0
        %1473 = vmatpush2.bf16.msra.mxu0 0
        %1474 = vmatprep.subr.bf16.mxu0 0
        %1475 = vmatpush2.bf16.msra.mxu0 0
        %1476 = vmatprep.subr.bf16.mxu0 0
        %1477 = vmatpush2.bf16.msra.mxu0 0
        %1478 = vmatprep.subr.bf16.mxu0 0
        %1479 = vmatpush2.bf16.msra.mxu0 0
        %1480 = vmatprep.mubr.bf16.mxu0 0
        %1481 = vmatmul.mubr.bf16.gmra.mxu0 %v1440
        %v1482 = vpop.f32.mrf.mxu0
        %v1483 = vadd.f32 0.0, %v1482
        %v1484 = vpop.f32.mrf.mxu0
        %v1485 = vpop.f32.mrf.mxu0
        %v1486 = vadd.f32 0.0, %v1485
        %v1487 = vpop.f32.mrf.mxu0
        %1488 = vmatprep.mubr.bf16.mxu0 0
        %1489 = vmatmul.mubr.bf16.gmra.mxu0 %v1443
        %v1490 = vpop.f32.mrf.mxu0
        %v1491 = vadd.f32 0.0, %v1490
        %v1492 = vpop.f32.mrf.mxu0
        %v1493 = vpop.f32.mrf.mxu0
        %v1494 = vpop.f32.mrf.mxu0
        %1495 = vdwg.mxu0
        %1499 = vrot.lane.b32.xlu0 %v1153, 8
        %v1500 = vpop.permute.xlu0 %1499
        %1501 = vrot.lane.b32.xlu0 %v1156, 8
        %v1502 = vpop.permute.xlu0 %1501
        %1503 = vrot.lane.b32.xlu0 %v1161, 8
        %v1504 = vpop.permute.xlu0 %1503
        %1511 = vrot.lane.b32.xlu0 %v1318, 16
        %v1512 = vpop.permute.xlu0 %1511
        %1513 = vrot.lane.b32.xlu0 %v1321, 16
        %v1514 = vpop.permute.xlu0 %1513
        %1515 = vrot.lane.b32.xlu0 %v1326, 16
        %v1516 = vpop.permute.xlu0 %1515
        %1523 = vrot.lane.b32.xlu0 %v1483, 24
        %v1524 = vpop.permute.xlu0 %1523
        %1525 = vrot.lane.b32.xlu0 %v1486, 24
        %v1526 = vpop.permute.xlu0 %1525
        %1527 = vrot.lane.b32.xlu0 %v1491, 24
        %v1528 = vpop.permute.xlu0 %1527
        %v1532 = vsel %vm836, %v986, %v1500
        %v1533 = vsel %vm836, %v989, %v1502
        %v1534 = vsel %vm836, %v994, %v1504
        %vm1535 = vcmask 130048
        %v1536 = vsel %vm1535, %v1532, %v1512
        %v1537 = vsel %vm1535, %v1533, %v1514
        %v1538 = vsel %vm1535, %v1534, %v1516
        %vm1539 = vcmask 195584
        %v1540 = vsel %vm1539, %v1536, %v1524
        %v1541 = vsel %vm1539, %v1537, %v1526
        %v1542 = vsel %vm1539, %v1538, %v1528
        %vm1543 = vsmask.f32 7424
        %v1544 = vshrl.u32 %v825, 16
        %v1546 = vshll.u32 %v825, 16
        %v1548 = vrot.slane %v1546, 1
        %v1549 = vor.u32 %v1544, %v1548
        %v1551 = vshll.u32 %v826, 16
        %v1553 = vrot.slane %v1551, 1
        %v1554 = vsel %vm1543, %v1549, %v1553
        %v1555 = vshrl.u32 %v826, 16
        %v1558 = vshrl.u32 %v828, 16
        %v1560 = vshll.u32 %v828, 16
        %v1562 = vrot.slane %v1560, 1
        %v1563 = vor.u32 %v1558, %v1562
        %v1565 = vshll.u32 %v829, 16
        %v1567 = vrot.slane %v1565, 1
        %v1568 = vsel %vm1543, %v1563, %v1567
        %v1569 = vshrl.u32 %v829, 16
        %1571 = vrot.lane.b32.xlu0 %v1568, 96
        %v1572 = vpop.permute.xlu0 %1571
        %1573 = vrot.lane.b32.xlu0 %v1569, 96
        %v1574 = vpop.permute.xlu0 %1573
        %v1576 = vsel %vm836, %v1554, 0
        %v1579 = vsel %vm836, %v1555, 0
        %v1582 = vsel %vm836, %v1572, 0
        %v1585 = vsel %vm836, %v1574, 0
        %1587 = vmatprep.subr.bf16.mxu0 0
        %1588 = vmatpush1.bf16.xpose.msra.mxu0 0
        %1589 = vmatprep.subr.bf16.mxu0 0
        %1590 = vmatpush1.bf16.xpose.msra.mxu0 0
        %1591 = vmatprep.subr.bf16.mxu0 0
        %1592 = vmatpush1.bf16.xpose.msra.mxu0 0
        %1593 = vmatprep.subr.bf16.mxu0 0
        %1594 = vmatpush1.bf16.xpose.msra.mxu0 0
        %1595 = vmatprep.subr.bf16.mxu0 0
        %1596 = vmatpush1.bf16.xpose.msra.mxu0 0
        %1597 = vmatprep.subr.bf16.mxu0 0
        %1598 = vmatpush1.bf16.xpose.msra.mxu0 0
        %1599 = vmatprep.subr.bf16.mxu0 0
        %1600 = vmatpush1.bf16.xpose.msra.mxu0 %v1585
        %1601 = vmatprep.subr.bf16.mxu0 0
        %1602 = vmatpush1.bf16.xpose.msra.mxu0 %v1582
        %1603 = vmatprep.subr.bf16.mxu0 0
        %1604 = vmatpush2.bf16.xpose.msra.mxu0 0
        %1605 = vmatprep.subr.bf16.mxu0 0
        %1606 = vmatpush2.bf16.xpose.msra.mxu0 0
        %1607 = vmatprep.subr.bf16.mxu0 0
        %1608 = vmatpush2.bf16.xpose.msra.mxu0 0
        %1609 = vmatprep.subr.bf16.mxu0 0
        %1610 = vmatpush2.bf16.xpose.msra.mxu0 0
        %1611 = vmatprep.subr.bf16.mxu0 0
        %1612 = vmatpush2.bf16.xpose.msra.mxu0 0
        %1613 = vmatprep.subr.bf16.mxu0 0
        %1614 = vmatpush2.bf16.xpose.msra.mxu0 0
        %1615 = vmatprep.subr.bf16.mxu0 0
        %1616 = vmatpush2.bf16.xpose.msra.mxu0 0
        %1617 = vmatprep.subr.bf16.mxu0 0
        %1618 = vmatpush2.bf16.xpose.msra.mxu0 0
        %1619 = vmatprep.mubr.bf16.mxu0 0
        %1620 = vmatmul.mubr.bf16.gmra.mxu0 %v1576
        %v1621 = vpop.f32.mrf.mxu0
        %v1622 = vadd.f32 0.0, %v1621
        %v1623 = vpop.f32.mrf.mxu0
        %v1624 = vpop.f32.mrf.mxu0
        %v1625 = vadd.f32 0.0, %v1624
        %v1626 = vpop.f32.mrf.mxu0
        %1627 = vmatprep.mubr.bf16.mxu0 0
        %1628 = vmatmul.mubr.bf16.gmra.mxu0 %v1579
        %v1629 = vpop.f32.mrf.mxu0
        %v1630 = vadd.f32 0.0, %v1629
        %v1631 = vpop.f32.mrf.mxu0
        %v1632 = vpop.f32.mrf.mxu0
        %v1633 = vpop.f32.mrf.mxu0
        %1634 = vdwg.mxu0
        %v1635 = vsel %vm897, %v1622, -inf
        %1636 = vmax.xlane.f32.xlu0 %v1635
        %v1637 = vpop.xlane.xlu0 %1636
        %v1638 = vsel %vm897, %v1625, -inf
        %1639 = vmax.xlane.f32.xlu0 %v1638
        %v1640 = vpop.xlane.xlu0 %1639
        %v1641 = vsel %vm904, %v1630, -inf
        %1642 = vmax.xlane.f32.xlu0 %v1641
        %v1643 = vpop.xlane.xlu0 %1642
        %v1644 = vsub.f32 %v1622, %v1637
        %v1645 = vsub.f32 %v1625, %v1640
        %v1646 = vsub.f32 %v1630, %v1643
        %v1647 = vmul.f32 %v1644, 1.442695
        %v1648 = vpow.pop %v1647
        %v1649 = vmul.f32 %v1645, 1.442695
        %v1650 = vpow.pop %v1649
        %v1651 = vmul.f32 %v1646, 1.442695
        %v1652 = vpow.pop %v1651
        %v1653 = vsel %vm897, %v1648, 0.0
        %1654 = vadd.xlane.f32.xlu0 %v1653
        %v1655 = vpop.xlane.xlu0 %1654
        %v1656 = vsel %vm897, %v1650, 0.0
        %1657 = vadd.xlane.f32.xlu0 %v1656
        %v1658 = vpop.xlane.xlu0 %1657
        %v1659 = vsel %vm904, %v1652, 0.0
        %1660 = vadd.xlane.f32.xlu0 %v1659
        %v1661 = vpop.xlane.xlu0 %1660
        %v1662 = vrcp.pop %v1655
        %v1663 = vrcp.pop %v1658
        %v1664 = vrcp.pop %v1661
        %v1665 = vmul.f32 %v1648, %v1662
        %v1666 = vmul.f32 %v1650, %v1663
        %v1667 = vmul.f32 %v1652, %v1664
        %v1668 = vpack.c.bf16 %v1666, %v1665
        %v1669 = vpack.c.bf16 %v1667, %v1667
        %1670 = vrot.lane.b32.xlu0 %v1568, 64
        %v1671 = vpop.permute.xlu0 %1670
        %1672 = vrot.lane.b32.xlu0 %v1569, 64
        %v1673 = vpop.permute.xlu0 %1672
        %v1676 = vsel %vm897, %v1668, 0
        %v1679 = vsel %vm897, %v1669, 0
        %v1682 = vand.u32 %v1673, %v947
        %1684 = vmatprep.subr.bf16.mxu0 0
        %1685 = vmatpush1.bf16.msra.mxu0 0
        %1686 = vmatprep.subr.bf16.mxu0 0
        %1687 = vmatpush1.bf16.msra.mxu0 0
        %1688 = vmatprep.subr.bf16.mxu0 0
        %1689 = vmatpush1.bf16.msra.mxu0 0
        %1690 = vmatprep.subr.bf16.mxu0 0
        %1691 = vmatpush1.bf16.msra.mxu0 0
        %1692 = vmatprep.subr.bf16.mxu0 0
        %1693 = vmatpush1.bf16.msra.mxu0 0
        %1694 = vmatprep.subr.bf16.mxu0 0
        %1695 = vmatpush1.bf16.msra.mxu0 0
        %1696 = vmatprep.subr.bf16.mxu0 0
        %1697 = vmatpush1.bf16.msra.mxu0 %v1682
        %1698 = vmatprep.subr.bf16.mxu0 0
        %1699 = vmatpush1.bf16.msra.mxu0 %v1671
        %1700 = vmatprep.subr.bf16.mxu0 0
        %1701 = vmatpush2.bf16.msra.mxu0 0
        %1702 = vmatprep.subr.bf16.mxu0 0
        %1703 = vmatpush2.bf16.msra.mxu0 0
        %1704 = vmatprep.subr.bf16.mxu0 0
        %1705 = vmatpush2.bf16.msra.mxu0 0
        %1706 = vmatprep.subr.bf16.mxu0 0
        %1707 = vmatpush2.bf16.msra.mxu0 0
        %1708 = vmatprep.subr.bf16.mxu0 0
        %1709 = vmatpush2.bf16.msra.mxu0 0
        %1710 = vmatprep.subr.bf16.mxu0 0
        %1711 = vmatpush2.bf16.msra.mxu0 0
        %1712 = vmatprep.subr.bf16.mxu0 0
        %1713 = vmatpush2.bf16.msra.mxu0 0
        %1714 = vmatprep.subr.bf16.mxu0 0
        %1715 = vmatpush2.bf16.msra.mxu0 0
        %1716 = vmatprep.mubr.bf16.mxu0 0
        %1717 = vmatmul.mubr.bf16.gmra.mxu0 %v1676
        %v1718 = vpop.f32.mrf.mxu0
        %v1719 = vadd.f32 0.0, %v1718
        %v1720 = vpop.f32.mrf.mxu0
        %v1721 = vpop.f32.mrf.mxu0
        %v1722 = vadd.f32 0.0, %v1721
        %v1723 = vpop.f32.mrf.mxu0
        %1724 = vmatprep.mubr.bf16.mxu0 0
        %1725 = vmatmul.mubr.bf16.gmra.mxu0 %v1679
        %v1726 = vpop.f32.mrf.mxu0
        %v1727 = vadd.f32 0.0, %v1726
        %v1728 = vpop.f32.mrf.mxu0
        %v1729 = vpop.f32.mrf.mxu0
        %v1730 = vpop.f32.mrf.mxu0
        %1731 = vdwg.mxu0
        %1732 = vrot.lane.b32.xlu0 %v1554, 120
        %v1733 = vpop.permute.xlu0 %1732
        %1734 = vrot.lane.b32.xlu0 %v1555, 120
        %v1735 = vpop.permute.xlu0 %1734
        %1736 = vrot.lane.b32.xlu0 %v1568, 88
        %v1737 = vpop.permute.xlu0 %1736
        %1738 = vrot.lane.b32.xlu0 %v1569, 88
        %v1739 = vpop.permute.xlu0 %1738
        %v1741 = vsel %vm836, %v1733, 0
        %v1744 = vsel %vm836, %v1735, 0
        %v1747 = vsel %vm836, %v1737, 0
        %v1750 = vsel %vm836, %v1739, 0
        %1752 = vmatprep.subr.bf16.mxu0 0
        %1753 = vmatpush1.bf16.xpose.msra.mxu0 0
        %1754 = vmatprep.subr.bf16.mxu0 0
        %1755 = vmatpush1.bf16.xpose.msra.mxu0 0
        %1756 = vmatprep.subr.bf16.mxu0 0
        %1757 = vmatpush1.bf16.xpose.msra.mxu0 0
        %1758 = vmatprep.subr.bf16.mxu0 0
        %1759 = vmatpush1.bf16.xpose.msra.mxu0 0
        %1760 = vmatprep.subr.bf16.mxu0 0
        %1761 = vmatpush1.bf16.xpose.msra.mxu0 0
        %1762 = vmatprep.subr.bf16.mxu0 0
        %1763 = vmatpush1.bf16.xpose.msra.mxu0 0
        %1764 = vmatprep.subr.bf16.mxu0 0
        %1765 = vmatpush1.bf16.xpose.msra.mxu0 %v1750
        %1766 = vmatprep.subr.bf16.mxu0 0
        %1767 = vmatpush1.bf16.xpose.msra.mxu0 %v1747
        %1768 = vmatprep.subr.bf16.mxu0 0
        %1769 = vmatpush2.bf16.xpose.msra.mxu0 0
        %1770 = vmatprep.subr.bf16.mxu0 0
        %1771 = vmatpush2.bf16.xpose.msra.mxu0 0
        %1772 = vmatprep.subr.bf16.mxu0 0
        %1773 = vmatpush2.bf16.xpose.msra.mxu0 0
        %1774 = vmatprep.subr.bf16.mxu0 0
        %1775 = vmatpush2.bf16.xpose.msra.mxu0 0
        %1776 = vmatprep.subr.bf16.mxu0 0
        %1777 = vmatpush2.bf16.xpose.msra.mxu0 0
        %1778 = vmatprep.subr.bf16.mxu0 0
        %1779 = vmatpush2.bf16.xpose.msra.mxu0 0
        %1780 = vmatprep.subr.bf16.mxu0 0
        %1781 = vmatpush2.bf16.xpose.msra.mxu0 0
        %1782 = vmatprep.subr.bf16.mxu0 0
        %1783 = vmatpush2.bf16.xpose.msra.mxu0 0
        %1784 = vmatprep.mubr.bf16.mxu0 0
        %1785 = vmatmul.mubr.bf16.gmra.mxu0 %v1741
        %v1786 = vpop.f32.mrf.mxu0
        %v1787 = vadd.f32 0.0, %v1786
        %v1788 = vpop.f32.mrf.mxu0
        %v1789 = vpop.f32.mrf.mxu0
        %v1790 = vadd.f32 0.0, %v1789
        %v1791 = vpop.f32.mrf.mxu0
        %1792 = vmatprep.mubr.bf16.mxu0 0
        %1793 = vmatmul.mubr.bf16.gmra.mxu0 %v1744
        %v1794 = vpop.f32.mrf.mxu0
        %v1795 = vadd.f32 0.0, %v1794
        %v1796 = vpop.f32.mrf.mxu0
        %v1797 = vpop.f32.mrf.mxu0
        %v1798 = vpop.f32.mrf.mxu0
        %1799 = vdwg.mxu0
        %v1800 = vsel %vm897, %v1787, -inf
        %1801 = vmax.xlane.f32.xlu0 %v1800
        %v1802 = vpop.xlane.xlu0 %1801
        %v1803 = vsel %vm897, %v1790, -inf
        %1804 = vmax.xlane.f32.xlu0 %v1803
        %v1805 = vpop.xlane.xlu0 %1804
        %v1806 = vsel %vm904, %v1795, -inf
        %1807 = vmax.xlane.f32.xlu0 %v1806
        %v1808 = vpop.xlane.xlu0 %1807
        %v1809 = vsub.f32 %v1787, %v1802
        %v1810 = vsub.f32 %v1790, %v1805
        %v1811 = vsub.f32 %v1795, %v1808
        %v1812 = vmul.f32 %v1809, 1.442695
        %v1813 = vpow.pop %v1812
        %v1814 = vmul.f32 %v1810, 1.442695
        %v1815 = vpow.pop %v1814
        %v1816 = vmul.f32 %v1811, 1.442695
        %v1817 = vpow.pop %v1816
        %v1818 = vsel %vm897, %v1813, 0.0
        %1819 = vadd.xlane.f32.xlu0 %v1818
        %v1820 = vpop.xlane.xlu0 %1819
        %v1821 = vsel %vm897, %v1815, 0.0
        %1822 = vadd.xlane.f32.xlu0 %v1821
        %v1823 = vpop.xlane.xlu0 %1822
        %v1824 = vsel %vm904, %v1817, 0.0
        %1825 = vadd.xlane.f32.xlu0 %v1824
        %v1826 = vpop.xlane.xlu0 %1825
        %v1827 = vrcp.pop %v1820
        %v1828 = vrcp.pop %v1823
        %v1829 = vrcp.pop %v1826
        %v1830 = vmul.f32 %v1813, %v1827
        %v1831 = vmul.f32 %v1815, %v1828
        %v1832 = vmul.f32 %v1817, %v1829
        %v1833 = vpack.c.bf16 %v1831, %v1830
        %v1834 = vpack.c.bf16 %v1832, %v1832
        %1835 = vrot.lane.b32.xlu0 %v1568, 56
        %v1836 = vpop.permute.xlu0 %1835
        %1837 = vrot.lane.b32.xlu0 %v1569, 56
        %v1838 = vpop.permute.xlu0 %1837
        %v1841 = vsel %vm897, %v1833, 0
        %v1844 = vsel %vm897, %v1834, 0
        %v1847 = vand.u32 %v1838, %v947
        %1849 = vmatprep.subr.bf16.mxu0 0
        %1850 = vmatpush1.bf16.msra.mxu0 0
        %1851 = vmatprep.subr.bf16.mxu0 0
        %1852 = vmatpush1.bf16.msra.mxu0 0
        %1853 = vmatprep.subr.bf16.mxu0 0
        %1854 = vmatpush1.bf16.msra.mxu0 0
        %1855 = vmatprep.subr.bf16.mxu0 0
        %1856 = vmatpush1.bf16.msra.mxu0 0
        %1857 = vmatprep.subr.bf16.mxu0 0
        %1858 = vmatpush1.bf16.msra.mxu0 0
        %1859 = vmatprep.subr.bf16.mxu0 0
        %1860 = vmatpush1.bf16.msra.mxu0 0
        %1861 = vmatprep.subr.bf16.mxu0 0
        %1862 = vmatpush1.bf16.msra.mxu0 %v1847
        %1863 = vmatprep.subr.bf16.mxu0 0
        %1864 = vmatpush1.bf16.msra.mxu0 %v1836
        %1865 = vmatprep.subr.bf16.mxu0 0
        %1866 = vmatpush2.bf16.msra.mxu0 0
        %1867 = vmatprep.subr.bf16.mxu0 0
        %1868 = vmatpush2.bf16.msra.mxu0 0
        %1869 = vmatprep.subr.bf16.mxu0 0
        %1870 = vmatpush2.bf16.msra.mxu0 0
        %1871 = vmatprep.subr.bf16.mxu0 0
        %1872 = vmatpush2.bf16.msra.mxu0 0
        %1873 = vmatprep.subr.bf16.mxu0 0
        %1874 = vmatpush2.bf16.msra.mxu0 0
        %1875 = vmatprep.subr.bf16.mxu0 0
        %1876 = vmatpush2.bf16.msra.mxu0 0
        %1877 = vmatprep.subr.bf16.mxu0 0
        %1878 = vmatpush2.bf16.msra.mxu0 0
        %1879 = vmatprep.subr.bf16.mxu0 0
        %1880 = vmatpush2.bf16.msra.mxu0 0
        %1881 = vmatprep.mubr.bf16.mxu0 0
        %1882 = vmatmul.mubr.bf16.gmra.mxu0 %v1841
        %v1883 = vpop.f32.mrf.mxu0
        %v1884 = vadd.f32 0.0, %v1883
        %v1885 = vpop.f32.mrf.mxu0
        %v1886 = vpop.f32.mrf.mxu0
        %v1887 = vadd.f32 0.0, %v1886
        %v1888 = vpop.f32.mrf.mxu0
        %1889 = vmatprep.mubr.bf16.mxu0 0
        %1890 = vmatmul.mubr.bf16.gmra.mxu0 %v1844
        %v1891 = vpop.f32.mrf.mxu0
        %v1892 = vadd.f32 0.0, %v1891
        %v1893 = vpop.f32.mrf.mxu0
        %v1894 = vpop.f32.mrf.mxu0
        %v1895 = vpop.f32.mrf.mxu0
        %1896 = vdwg.mxu0
        %1897 = vrot.lane.b32.xlu0 %v1554, 112
        %v1898 = vpop.permute.xlu0 %1897
        %1899 = vrot.lane.b32.xlu0 %v1555, 112
        %v1900 = vpop.permute.xlu0 %1899
        %1901 = vrot.lane.b32.xlu0 %v1568, 80
        %v1902 = vpop.permute.xlu0 %1901
        %1903 = vrot.lane.b32.xlu0 %v1569, 80
        %v1904 = vpop.permute.xlu0 %1903
        %v1906 = vsel %vm836, %v1898, 0
        %v1909 = vsel %vm836, %v1900, 0
        %v1912 = vsel %vm836, %v1902, 0
        %v1915 = vsel %vm836, %v1904, 0
        %1917 = vmatprep.subr.bf16.mxu0 0
        %1918 = vmatpush1.bf16.xpose.msra.mxu0 0
        %1919 = vmatprep.subr.bf16.mxu0 0
        %1920 = vmatpush1.bf16.xpose.msra.mxu0 0
        %1921 = vmatprep.subr.bf16.mxu0 0
        %1922 = vmatpush1.bf16.xpose.msra.mxu0 0
        %1923 = vmatprep.subr.bf16.mxu0 0
        %1924 = vmatpush1.bf16.xpose.msra.mxu0 0
        %1925 = vmatprep.subr.bf16.mxu0 0
        %1926 = vmatpush1.bf16.xpose.msra.mxu0 0
        %1927 = vmatprep.subr.bf16.mxu0 0
        %1928 = vmatpush1.bf16.xpose.msra.mxu0 0
        %1929 = vmatprep.subr.bf16.mxu0 0
        %1930 = vmatpush1.bf16.xpose.msra.mxu0 %v1915
        %1931 = vmatprep.subr.bf16.mxu0 0
        %1932 = vmatpush1.bf16.xpose.msra.mxu0 %v1912
        %1933 = vmatprep.subr.bf16.mxu0 0
        %1934 = vmatpush2.bf16.xpose.msra.mxu0 0
        %1935 = vmatprep.subr.bf16.mxu0 0
        %1936 = vmatpush2.bf16.xpose.msra.mxu0 0
        %1937 = vmatprep.subr.bf16.mxu0 0
        %1938 = vmatpush2.bf16.xpose.msra.mxu0 0
        %1939 = vmatprep.subr.bf16.mxu0 0
        %1940 = vmatpush2.bf16.xpose.msra.mxu0 0
        %1941 = vmatprep.subr.bf16.mxu0 0
        %1942 = vmatpush2.bf16.xpose.msra.mxu0 0
        %1943 = vmatprep.subr.bf16.mxu0 0
        %1944 = vmatpush2.bf16.xpose.msra.mxu0 0
        %1945 = vmatprep.subr.bf16.mxu0 0
        %1946 = vmatpush2.bf16.xpose.msra.mxu0 0
        %1947 = vmatprep.subr.bf16.mxu0 0
        %1948 = vmatpush2.bf16.xpose.msra.mxu0 0
        %1949 = vmatprep.mubr.bf16.mxu0 0
        %1950 = vmatmul.mubr.bf16.gmra.mxu0 %v1906
        %v1951 = vpop.f32.mrf.mxu0
        %v1952 = vadd.f32 0.0, %v1951
        %v1953 = vpop.f32.mrf.mxu0
        %v1954 = vpop.f32.mrf.mxu0
        %v1955 = vadd.f32 0.0, %v1954
        %v1956 = vpop.f32.mrf.mxu0
        %1957 = vmatprep.mubr.bf16.mxu0 0
        %1958 = vmatmul.mubr.bf16.gmra.mxu0 %v1909
        %v1959 = vpop.f32.mrf.mxu0
        %v1960 = vadd.f32 0.0, %v1959
        %v1961 = vpop.f32.mrf.mxu0
        %v1962 = vpop.f32.mrf.mxu0
        %v1963 = vpop.f32.mrf.mxu0
        %1964 = vdwg.mxu0
        %v1965 = vsel %vm897, %v1952, -inf
        %1966 = vmax.xlane.f32.xlu0 %v1965
        %v1967 = vpop.xlane.xlu0 %1966
        %v1968 = vsel %vm897, %v1955, -inf
        %1969 = vmax.xlane.f32.xlu0 %v1968
        %v1970 = vpop.xlane.xlu0 %1969
        %v1971 = vsel %vm904, %v1960, -inf
        %1972 = vmax.xlane.f32.xlu0 %v1971
        %v1973 = vpop.xlane.xlu0 %1972
        %v1974 = vsub.f32 %v1952, %v1967
        %v1975 = vsub.f32 %v1955, %v1970
        %v1976 = vsub.f32 %v1960, %v1973
        %v1977 = vmul.f32 %v1974, 1.442695
        %v1978 = vpow.pop %v1977
        %v1979 = vmul.f32 %v1975, 1.442695
        %v1980 = vpow.pop %v1979
        %v1981 = vmul.f32 %v1976, 1.442695
        %v1982 = vpow.pop %v1981
        %v1983 = vsel %vm897, %v1978, 0.0
        %1984 = vadd.xlane.f32.xlu0 %v1983
        %v1985 = vpop.xlane.xlu0 %1984
        %v1986 = vsel %vm897, %v1980, 0.0
        %1987 = vadd.xlane.f32.xlu0 %v1986
        %v1988 = vpop.xlane.xlu0 %1987
        %v1989 = vsel %vm904, %v1982, 0.0
        %1990 = vadd.xlane.f32.xlu0 %v1989
        %v1991 = vpop.xlane.xlu0 %1990
        %v1992 = vrcp.pop %v1985
        %v1993 = vrcp.pop %v1988
        %v1994 = vrcp.pop %v1991
        %v1995 = vmul.f32 %v1978, %v1992
        %v1996 = vmul.f32 %v1980, %v1993
        %v1997 = vmul.f32 %v1982, %v1994
        %v1998 = vpack.c.bf16 %v1996, %v1995
        %v1999 = vpack.c.bf16 %v1997, %v1997
        %2000 = vrot.lane.b32.xlu0 %v1568, 48
        %v2001 = vpop.permute.xlu0 %2000
        %2002 = vrot.lane.b32.xlu0 %v1569, 48
        %v2003 = vpop.permute.xlu0 %2002
        %v2006 = vsel %vm897, %v1998, 0
        %v2009 = vsel %vm897, %v1999, 0
        %v2012 = vand.u32 %v2003, %v947
        %2014 = vmatprep.subr.bf16.mxu0 0
        %2015 = vmatpush1.bf16.msra.mxu0 0
        %2016 = vmatprep.subr.bf16.mxu0 0
        %2017 = vmatpush1.bf16.msra.mxu0 0
        %2018 = vmatprep.subr.bf16.mxu0 0
        %2019 = vmatpush1.bf16.msra.mxu0 0
        %2020 = vmatprep.subr.bf16.mxu0 0
        %2021 = vmatpush1.bf16.msra.mxu0 0
        %2022 = vmatprep.subr.bf16.mxu0 0
        %2023 = vmatpush1.bf16.msra.mxu0 0
        %2024 = vmatprep.subr.bf16.mxu0 0
        %2025 = vmatpush1.bf16.msra.mxu0 0
        %2026 = vmatprep.subr.bf16.mxu0 0
        %2027 = vmatpush1.bf16.msra.mxu0 %v2012
        %2028 = vmatprep.subr.bf16.mxu0 0
        %2029 = vmatpush1.bf16.msra.mxu0 %v2001
        %2030 = vmatprep.subr.bf16.mxu0 0
        %2031 = vmatpush2.bf16.msra.mxu0 0
        %2032 = vmatprep.subr.bf16.mxu0 0
        %2033 = vmatpush2.bf16.msra.mxu0 0
        %2034 = vmatprep.subr.bf16.mxu0 0
        %2035 = vmatpush2.bf16.msra.mxu0 0
        %2036 = vmatprep.subr.bf16.mxu0 0
        %2037 = vmatpush2.bf16.msra.mxu0 0
        %2038 = vmatprep.subr.bf16.mxu0 0
        %2039 = vmatpush2.bf16.msra.mxu0 0
        %2040 = vmatprep.subr.bf16.mxu0 0
        %2041 = vmatpush2.bf16.msra.mxu0 0
        %2042 = vmatprep.subr.bf16.mxu0 0
        %2043 = vmatpush2.bf16.msra.mxu0 0
        %2044 = vmatprep.subr.bf16.mxu0 0
        %2045 = vmatpush2.bf16.msra.mxu0 0
        %2046 = vmatprep.mubr.bf16.mxu0 0
        %2047 = vmatmul.mubr.bf16.gmra.mxu0 %v2006
        %v2048 = vpop.f32.mrf.mxu0
        %v2049 = vadd.f32 0.0, %v2048
        %v2050 = vpop.f32.mrf.mxu0
        %v2051 = vpop.f32.mrf.mxu0
        %v2052 = vadd.f32 0.0, %v2051
        %v2053 = vpop.f32.mrf.mxu0
        %2054 = vmatprep.mubr.bf16.mxu0 0
        %2055 = vmatmul.mubr.bf16.gmra.mxu0 %v2009
        %v2056 = vpop.f32.mrf.mxu0
        %v2057 = vadd.f32 0.0, %v2056
        %v2058 = vpop.f32.mrf.mxu0
        %v2059 = vpop.f32.mrf.mxu0
        %v2060 = vpop.f32.mrf.mxu0
        %2061 = vdwg.mxu0
        %2062 = vrot.lane.b32.xlu0 %v1554, 104
        %v2063 = vpop.permute.xlu0 %2062
        %2064 = vrot.lane.b32.xlu0 %v1555, 104
        %v2065 = vpop.permute.xlu0 %2064
        %2066 = vrot.lane.b32.xlu0 %v1568, 72
        %v2067 = vpop.permute.xlu0 %2066
        %2068 = vrot.lane.b32.xlu0 %v1569, 72
        %v2069 = vpop.permute.xlu0 %2068
        %v2071 = vsel %vm836, %v2063, 0
        %v2074 = vsel %vm836, %v2065, 0
        %v2077 = vsel %vm836, %v2067, 0
        %v2080 = vsel %vm836, %v2069, 0
        %2082 = vmatprep.subr.bf16.mxu0 0
        %2083 = vmatpush1.bf16.xpose.msra.mxu0 0
        %2084 = vmatprep.subr.bf16.mxu0 0
        %2085 = vmatpush1.bf16.xpose.msra.mxu0 0
        %2086 = vmatprep.subr.bf16.mxu0 0
        %2087 = vmatpush1.bf16.xpose.msra.mxu0 0
        %2088 = vmatprep.subr.bf16.mxu0 0
        %2089 = vmatpush1.bf16.xpose.msra.mxu0 0
        %2090 = vmatprep.subr.bf16.mxu0 0
        %2091 = vmatpush1.bf16.xpose.msra.mxu0 0
        %2092 = vmatprep.subr.bf16.mxu0 0
        %2093 = vmatpush1.bf16.xpose.msra.mxu0 0
        %2094 = vmatprep.subr.bf16.mxu0 0
        %2095 = vmatpush1.bf16.xpose.msra.mxu0 %v2080
        %2096 = vmatprep.subr.bf16.mxu0 0
        %2097 = vmatpush1.bf16.xpose.msra.mxu0 %v2077
        %2098 = vmatprep.subr.bf16.mxu0 0
        %2099 = vmatpush2.bf16.xpose.msra.mxu0 0
        %2100 = vmatprep.subr.bf16.mxu0 0
        %2101 = vmatpush2.bf16.xpose.msra.mxu0 0
        %2102 = vmatprep.subr.bf16.mxu0 0
        %2103 = vmatpush2.bf16.xpose.msra.mxu0 0
        %2104 = vmatprep.subr.bf16.mxu0 0
        %2105 = vmatpush2.bf16.xpose.msra.mxu0 0
        %2106 = vmatprep.subr.bf16.mxu0 0
        %2107 = vmatpush2.bf16.xpose.msra.mxu0 0
        %2108 = vmatprep.subr.bf16.mxu0 0
        %2109 = vmatpush2.bf16.xpose.msra.mxu0 0
        %2110 = vmatprep.subr.bf16.mxu0 0
        %2111 = vmatpush2.bf16.xpose.msra.mxu0 0
        %2112 = vmatprep.subr.bf16.mxu0 0
        %2113 = vmatpush2.bf16.xpose.msra.mxu0 0
        %2114 = vmatprep.mubr.bf16.mxu0 0
        %2115 = vmatmul.mubr.bf16.gmra.mxu0 %v2071
        %v2116 = vpop.f32.mrf.mxu0
        %v2117 = vadd.f32 0.0, %v2116
        %v2118 = vpop.f32.mrf.mxu0
        %v2119 = vpop.f32.mrf.mxu0
        %v2120 = vadd.f32 0.0, %v2119
        %v2121 = vpop.f32.mrf.mxu0
        %2122 = vmatprep.mubr.bf16.mxu0 0
        %2123 = vmatmul.mubr.bf16.gmra.mxu0 %v2074
        %v2124 = vpop.f32.mrf.mxu0
        %v2125 = vadd.f32 0.0, %v2124
        %v2126 = vpop.f32.mrf.mxu0
        %v2127 = vpop.f32.mrf.mxu0
        %v2128 = vpop.f32.mrf.mxu0
        %2129 = vdwg.mxu0
        %v2130 = vsel %vm897, %v2117, -inf
        %2131 = vmax.xlane.f32.xlu0 %v2130
        %v2132 = vpop.xlane.xlu0 %2131
        %v2133 = vsel %vm897, %v2120, -inf
        %2134 = vmax.xlane.f32.xlu0 %v2133
        %v2135 = vpop.xlane.xlu0 %2134
        %v2136 = vsel %vm904, %v2125, -inf
        %2137 = vmax.xlane.f32.xlu0 %v2136
        %v2138 = vpop.xlane.xlu0 %2137
        %v2139 = vsub.f32 %v2117, %v2132
        %v2140 = vsub.f32 %v2120, %v2135
        %v2141 = vsub.f32 %v2125, %v2138
        %v2142 = vmul.f32 %v2139, 1.442695
        %v2143 = vpow.pop %v2142
        %v2144 = vmul.f32 %v2140, 1.442695
        %v2145 = vpow.pop %v2144
        %v2146 = vmul.f32 %v2141, 1.442695
        %v2147 = vpow.pop %v2146
        %v2148 = vsel %vm897, %v2143, 0.0
        %2149 = vadd.xlane.f32.xlu0 %v2148
        %v2150 = vpop.xlane.xlu0 %2149
        %v2151 = vsel %vm897, %v2145, 0.0
        %2152 = vadd.xlane.f32.xlu0 %v2151
        %v2153 = vpop.xlane.xlu0 %2152
        %v2154 = vsel %vm904, %v2147, 0.0
        %2155 = vadd.xlane.f32.xlu0 %v2154
        %v2156 = vpop.xlane.xlu0 %2155
        %v2157 = vrcp.pop %v2150
        %v2158 = vrcp.pop %v2153
        %v2159 = vrcp.pop %v2156
        %v2160 = vmul.f32 %v2143, %v2157
        %v2161 = vmul.f32 %v2145, %v2158
        %v2162 = vmul.f32 %v2147, %v2159
        %v2163 = vpack.c.bf16 %v2161, %v2160
        %v2164 = vpack.c.bf16 %v2162, %v2162
        %2165 = vrot.lane.b32.xlu0 %v1568, 40
        %v2166 = vpop.permute.xlu0 %2165
        %2167 = vrot.lane.b32.xlu0 %v1569, 40
        %v2168 = vpop.permute.xlu0 %2167
        %v2171 = vsel %vm897, %v2163, 0
        %v2174 = vsel %vm897, %v2164, 0
        %v2177 = vand.u32 %v2168, %v947
        %2179 = vmatprep.subr.bf16.mxu0 0
        %2180 = vmatpush1.bf16.msra.mxu0 0
        %2181 = vmatprep.subr.bf16.mxu0 0
        %2182 = vmatpush1.bf16.msra.mxu0 0
        %2183 = vmatprep.subr.bf16.mxu0 0
        %2184 = vmatpush1.bf16.msra.mxu0 0
        %2185 = vmatprep.subr.bf16.mxu0 0
        %2186 = vmatpush1.bf16.msra.mxu0 0
        %2187 = vmatprep.subr.bf16.mxu0 0
        %2188 = vmatpush1.bf16.msra.mxu0 0
        %2189 = vmatprep.subr.bf16.mxu0 0
        %2190 = vmatpush1.bf16.msra.mxu0 0
        %2191 = vmatprep.subr.bf16.mxu0 0
        %2192 = vmatpush1.bf16.msra.mxu0 %v2177
        %2193 = vmatprep.subr.bf16.mxu0 0
        %2194 = vmatpush1.bf16.msra.mxu0 %v2166
        %2195 = vmatprep.subr.bf16.mxu0 0
        %2196 = vmatpush2.bf16.msra.mxu0 0
        %2197 = vmatprep.subr.bf16.mxu0 0
        %2198 = vmatpush2.bf16.msra.mxu0 0
        %2199 = vmatprep.subr.bf16.mxu0 0
        %2200 = vmatpush2.bf16.msra.mxu0 0
        %2201 = vmatprep.subr.bf16.mxu0 0
        %2202 = vmatpush2.bf16.msra.mxu0 0
        %2203 = vmatprep.subr.bf16.mxu0 0
        %2204 = vmatpush2.bf16.msra.mxu0 0
        %2205 = vmatprep.subr.bf16.mxu0 0
        %2206 = vmatpush2.bf16.msra.mxu0 0
        %2207 = vmatprep.subr.bf16.mxu0 0
        %2208 = vmatpush2.bf16.msra.mxu0 0
        %2209 = vmatprep.subr.bf16.mxu0 0
        %2210 = vmatpush2.bf16.msra.mxu0 0
        %2211 = vmatprep.mubr.bf16.mxu0 0
        %2212 = vmatmul.mubr.bf16.gmra.mxu0 %v2171
        %v2213 = vpop.f32.mrf.mxu0
        %v2214 = vadd.f32 0.0, %v2213
        %v2215 = vpop.f32.mrf.mxu0
        %v2216 = vpop.f32.mrf.mxu0
        %v2217 = vadd.f32 0.0, %v2216
        %v2218 = vpop.f32.mrf.mxu0
        %2219 = vmatprep.mubr.bf16.mxu0 0
        %2220 = vmatmul.mubr.bf16.gmra.mxu0 %v2174
        %v2221 = vpop.f32.mrf.mxu0
        %v2222 = vadd.f32 0.0, %v2221
        %v2223 = vpop.f32.mrf.mxu0
        %v2224 = vpop.f32.mrf.mxu0
        %v2225 = vpop.f32.mrf.mxu0
        %2226 = vdwg.mxu0
        %2230 = vrot.lane.b32.xlu0 %v1884, 8
        %v2231 = vpop.permute.xlu0 %2230
        %2232 = vrot.lane.b32.xlu0 %v1887, 8
        %v2233 = vpop.permute.xlu0 %2232
        %2234 = vrot.lane.b32.xlu0 %v1892, 8
        %v2235 = vpop.permute.xlu0 %2234
        %2242 = vrot.lane.b32.xlu0 %v2049, 16
        %v2243 = vpop.permute.xlu0 %2242
        %2244 = vrot.lane.b32.xlu0 %v2052, 16
        %v2245 = vpop.permute.xlu0 %2244
        %2246 = vrot.lane.b32.xlu0 %v2057, 16
        %v2247 = vpop.permute.xlu0 %2246
        %2254 = vrot.lane.b32.xlu0 %v2214, 24
        %v2255 = vpop.permute.xlu0 %2254
        %2256 = vrot.lane.b32.xlu0 %v2217, 24
        %v2257 = vpop.permute.xlu0 %2256
        %2258 = vrot.lane.b32.xlu0 %v2222, 24
        %v2259 = vpop.permute.xlu0 %2258
        %v2263 = vsel %vm836, %v1719, %v2231
        %v2264 = vsel %vm836, %v1722, %v2233
        %v2265 = vsel %vm836, %v1727, %v2235
        %v2266 = vsel %vm1535, %v2263, %v2243
        %v2267 = vsel %vm1535, %v2264, %v2245
        %v2268 = vsel %vm1535, %v2265, %v2247
        %v2269 = vsel %vm1539, %v2266, %v2255
        %v2270 = vsel %vm1539, %v2267, %v2257
        %v2271 = vsel %vm1539, %v2268, %v2259
        %v2275 = vrot.slane %v2269, 7
        %v2276 = vrot.slane %v2270, 7
        %v2277 = vsel %vm945, %v2275, %v2276
        %v2278 = vrot.slane %v2271, 7
        %v2279 = vsel %vm945, %v2276, %v2278
        %v2283 = vsel %vm945, %v1542, %v2275
        %v2284 = vpack.c.bf16 %v1541, %v1540
        %v2285 = vpack.c.bf16 %v2277, %v2283
        %v2286 = vpack.c.bf16 %v2279, %v2279
        %v2287 = vld [vmem:[%s503] sm:$0xf]
        %v2288 = vld [vmem:[%s503 + $0x4] sm:$0xf]
        %v2289 = vld [vmem:[%s503 + $0x8] sm:$0xf]
        %v2290 = vld [vmem:[%s503 + $0xc] sm:$0xf]
        %v2295 = vunpack.c.l.b16 %v2287
        %v2296 = vunpack.c.l.b16 %v2288
        %v2297 = vunpack.c.l.b16 %v2289
        %v2298 = vunpack.c.l.b16 %v2290
        %v2299 = vpack.c.b16 %v2296, %v2295
        %v2300 = vpack.c.b16 %v2298, %v2297
        %v2304 = vsel %vm645, %v2284, 0
        %v2307 = vsel %vm645, %v2285, 0
        %v2310 = vsel %vm645, %v2286, 0
        %2312 = vmatprep.subr.bf16.mxu0 0
        %2313 = vmatpush1.bf16.msra.mxu0 0
        %2314 = vmatprep.subr.bf16.mxu0 0
        %2315 = vmatpush1.bf16.msra.mxu0 0
        %2316 = vmatprep.subr.bf16.mxu0 0
        %2317 = vmatpush1.bf16.msra.mxu0 0
        %2318 = vmatprep.subr.bf16.mxu0 0
        %2319 = vmatpush1.bf16.msra.mxu0 0
        %2320 = vmatprep.subr.bf16.mxu0 0
        %2321 = vmatpush1.bf16.msra.mxu0 0
        %2322 = vmatprep.subr.bf16.mxu0 0
        %2323 = vmatpush1.bf16.msra.mxu0 0
        %2324 = vmatprep.subr.bf16.mxu0 0
        %2325 = vmatpush1.bf16.msra.mxu0 %v2300
        %2326 = vmatprep.subr.bf16.mxu0 0
        %2327 = vmatpush1.bf16.msra.mxu0 %v2299
        %2328 = vmatprep.subr.bf16.mxu0 0
        %2329 = vmatpush2.bf16.msra.mxu0 0
        %2330 = vmatprep.subr.bf16.mxu0 0
        %2331 = vmatpush2.bf16.msra.mxu0 0
        %2332 = vmatprep.subr.bf16.mxu0 0
        %2333 = vmatpush2.bf16.msra.mxu0 0
        %2334 = vmatprep.subr.bf16.mxu0 0
        %2335 = vmatpush2.bf16.msra.mxu0 0
        %2336 = vmatprep.subr.bf16.mxu0 0
        %2337 = vmatpush2.bf16.msra.mxu0 0
        %2338 = vmatprep.subr.bf16.mxu0 0
        %2339 = vmatpush2.bf16.msra.mxu0 0
        %2340 = vmatprep.subr.bf16.mxu0 0
        %2341 = vmatpush2.bf16.msra.mxu0 0
        %2342 = vmatprep.subr.bf16.mxu0 0
        %2343 = vmatpush2.bf16.msra.mxu0 0
        %2344 = vmatprep.mubr.bf16.mxu0 0
        %2345 = vmatmul.mubr.bf16.gmra.mxu0 %v2304
        %v2346 = vpop.f32.mrf.mxu0
        %v2347 = vadd.f32 0.0, %v2346
        %v2348 = vpop.f32.mrf.mxu0
        %v2349 = vpop.f32.mrf.mxu0
        %v2350 = vadd.f32 0.0, %v2349
        %v2351 = vpop.f32.mrf.mxu0
        %2352 = vmatprep.mubr.bf16.mxu0 0
        %2353 = vmatmul.mubr.bf16.gmra.mxu0 %v2307
        %v2354 = vpop.f32.mrf.mxu0
        %v2355 = vadd.f32 0.0, %v2354
        %v2356 = vpop.f32.mrf.mxu0
        %v2357 = vpop.f32.mrf.mxu0
        %v2358 = vadd.f32 0.0, %v2357
        %v2359 = vpop.f32.mrf.mxu0
        %2360 = vmatprep.mubr.bf16.mxu0 0
        %2361 = vmatmul.mubr.bf16.gmra.mxu0 %v2310
        %v2362 = vpop.f32.mrf.mxu0
        %v2363 = vadd.f32 0.0, %v2362
        %v2364 = vpop.f32.mrf.mxu0
        %v2365 = vpop.f32.mrf.mxu0
        %v2366 = vpop.f32.mrf.mxu0
        %2367 = vdwg.mxu0
        %v2368 = vadd.f32 %v639, %v2347
        %v2369 = vadd.f32 %v640, %v2350
        %v2370 = vadd.f32 %v641, %v2355
        %v2371 = vadd.f32 %v642, %v2358
        %v2372 = vadd.f32 %v643, %v2363
        %v2373 = vlaneseq
        %v2374 = vshrl.u32 %v2373, 7
        %v2375 = vsub.s32 3, %v2374
        %v2376 = vrot.slane %v644, %v2375
        %v2377 = vadd.f32 %v2368, %v2376
        %v2378 = vadd.f32 %v2369, %v2376
        %v2379 = vadd.f32 %v2370, %v2376
        %v2380 = vadd.f32 %v2371, %v2376
        %v2381 = vadd.f32 %v2372, %v2376
        %v2382 = vsel %vm645, %v2377, 0.0
        %2383 = vadd.xlane.f32.xlu0 %v2382
        %v2384 = vpop.xlane.xlu0 %2383
        %v2385 = vsel %vm645, %v2378, 0.0
        %2386 = vadd.xlane.f32.xlu0 %v2385
        %v2387 = vpop.xlane.xlu0 %2386
        %v2388 = vsel %vm645, %v2379, 0.0
        %2389 = vadd.xlane.f32.xlu0 %v2388
        %v2390 = vpop.xlane.xlu0 %2389
        %v2391 = vsel %vm645, %v2380, 0.0
        %2392 = vadd.xlane.f32.xlu0 %v2391
        %v2393 = vpop.xlane.xlu0 %2392
        %v2394 = vsel %vm658, %v2381, 0.0
        %2395 = vadd.xlane.f32.xlu0 %v2394
        %v2396 = vpop.xlane.xlu0 %2395
        %v2397 = vmul.f32 %v2384, %v662
        %v2398 = vmul.f32 %v2387, %v662
        %v2399 = vmul.f32 %v2390, %v662
        %v2400 = vmul.f32 %v2393, %v662
        %v2401 = vmul.f32 %v2396, %v662
        %v2402 = vsub.f32 %v2377, %v2397
        %v2403 = vsub.f32 %v2378, %v2398
        %v2404 = vsub.f32 %v2379, %v2399
        %v2405 = vsub.f32 %v2380, %v2400
        %v2406 = vsub.f32 %v2381, %v2401
        %v2407 = vmul.f32 %v2402, %v2402
        %v2408 = vmul.f32 %v2403, %v2403
        %v2409 = vmul.f32 %v2404, %v2404
        %v2410 = vmul.f32 %v2405, %v2405
        %v2411 = vmul.f32 %v2406, %v2406
        %v2412 = vsel %vm645, %v2407, 0.0
        %2413 = vadd.xlane.f32.xlu0 %v2412
        %v2414 = vpop.xlane.xlu0 %2413
        %v2415 = vsel %vm645, %v2408, 0.0
        %2416 = vadd.xlane.f32.xlu0 %v2415
        %v2417 = vpop.xlane.xlu0 %2416
        %v2418 = vsel %vm645, %v2409, 0.0
        %2419 = vadd.xlane.f32.xlu0 %v2418
        %v2420 = vpop.xlane.xlu0 %2419
        %v2421 = vsel %vm645, %v2410, 0.0
        %2422 = vadd.xlane.f32.xlu0 %v2421
        %v2423 = vpop.xlane.xlu0 %2422
        %v2424 = vsel %vm658, %v2411, 0.0
        %2425 = vadd.xlane.f32.xlu0 %v2424
        %v2426 = vpop.xlane.xlu0 %2425
        %v2427 = vmul.f32 %v2414, %v662
        %v2428 = vmul.f32 %v2417, %v662
        %v2429 = vmul.f32 %v2420, %v662
        %v2430 = vmul.f32 %v2423, %v662
        %v2431 = vmul.f32 %v2426, %v662
        %v2432 = vadd.f32 %v2427, 1e-06
        %v2433 = vadd.f32 %v2428, 1e-06
        %v2434 = vadd.f32 %v2429, 1e-06
        %v2435 = vadd.f32 %v2430, 1e-06
        %v2436 = vadd.f32 %v2431, 1e-06
        %v2437 = vrsqrt.pop %v2432
        %v2438 = vrsqrt.pop %v2433
        %v2439 = vrsqrt.pop %v2434
        %v2440 = vrsqrt.pop %v2435
        %v2441 = vrsqrt.pop %v2436
        %v2442 = vmul.f32 %v2402, %v2437
        %v2443 = vmul.f32 %v2403, %v2438
        %v2444 = vmul.f32 %v2404, %v2439
        %v2445 = vmul.f32 %v2405, %v2440
        %v2446 = vmul.f32 %v2406, %v2441
        %v2447 = vlaneseq
        %v2448 = vshrl.u32 %v2447, 7
        %v2449 = vsub.s32 4, %v2448
        %v2450 = vrot.slane %v644, %v2449
        %v2451 = vmul.f32 %v2442, %v2450
        %v2452 = vmul.f32 %v2443, %v2450
        %v2453 = vmul.f32 %v2444, %v2450
        %v2454 = vmul.f32 %v2445, %v2450
        %v2455 = vmul.f32 %v2446, %v2450
        %v2456 = vlaneseq
        %v2457 = vshrl.u32 %v2456, 7
        %v2458 = vsub.s32 5, %v2457
        %v2459 = vrot.slane %v644, %v2458
        %v2460 = vadd.f32 %v2451, %v2459
        %v2461 = vadd.f32 %v2452, %v2459
        %v2462 = vadd.f32 %v2453, %v2459
        %v2463 = vadd.f32 %v2454, %v2459
        %v2464 = vadd.f32 %v2455, %v2459
        %v2465 = vpack.c.bf16 %v2461, %v2460
        %v2466 = vpack.c.bf16 %v2463, %v2462
        %v2467 = vpack.c.bf16 %v2464, %v2464
        %v2468 = vld [vmem:[%s508] sm:$0xf]
        %v2469 = vld [vmem:[%s508 + $0x4] sm:$0xf]
        %v2470 = vld [vmem:[%s508 + $0x8] sm:$0xf]
        %v2471 = vld [vmem:[%s508 + $0xc] sm:$0xf]
        %v2472 = vlaneseq
        %v2473 = vshrl.u32 %v2472, 7
        %v2474 = vsub.s32 6, %v2473
        %v2475 = vrot.slane %v644, %v2474
        %v2480 = vunpack.c.l.b16 %v2468
        %v2481 = vunpack.c.l.b16 %v2469
        %v2482 = vunpack.c.l.b16 %v2470
        %v2483 = vunpack.c.l.b16 %v2471
        %v2484 = vpack.c.b16 %v2481, %v2480
        %v2485 = vpack.c.b16 %v2483, %v2482
        %v2489 = vsel %vm645, %v2465, 0
        %v2492 = vsel %vm645, %v2466, 0
        %v2495 = vsel %vm645, %v2467, 0
        %2497 = vmatprep.subr.bf16.mxu0 0
        %2498 = vmatpush1.bf16.msra.mxu0 0
        %2499 = vmatprep.subr.bf16.mxu0 0
        %2500 = vmatpush1.bf16.msra.mxu0 0
        %2501 = vmatprep.subr.bf16.mxu0 0
        %2502 = vmatpush1.bf16.msra.mxu0 0
        %2503 = vmatprep.subr.bf16.mxu0 0
        %2504 = vmatpush1.bf16.msra.mxu0 0
        %2505 = vmatprep.subr.bf16.mxu0 0
        %2506 = vmatpush1.bf16.msra.mxu0 0
        %2507 = vmatprep.subr.bf16.mxu0 0
        %2508 = vmatpush1.bf16.msra.mxu0 0
        %2509 = vmatprep.subr.bf16.mxu0 0
        %2510 = vmatpush1.bf16.msra.mxu0 %v2485
        %2511 = vmatprep.subr.bf16.mxu0 0
        %2512 = vmatpush1.bf16.msra.mxu0 %v2484
        %2513 = vmatprep.subr.bf16.mxu0 0
        %2514 = vmatpush2.bf16.msra.mxu0 0
        %2515 = vmatprep.subr.bf16.mxu0 0
        %2516 = vmatpush2.bf16.msra.mxu0 0
        %2517 = vmatprep.subr.bf16.mxu0 0
        %2518 = vmatpush2.bf16.msra.mxu0 0
        %2519 = vmatprep.subr.bf16.mxu0 0
        %2520 = vmatpush2.bf16.msra.mxu0 0
        %2521 = vmatprep.subr.bf16.mxu0 0
        %2522 = vmatpush2.bf16.msra.mxu0 0
        %2523 = vmatprep.subr.bf16.mxu0 0
        %2524 = vmatpush2.bf16.msra.mxu0 0
        %2525 = vmatprep.subr.bf16.mxu0 0
        %2526 = vmatpush2.bf16.msra.mxu0 0
        %2527 = vmatprep.subr.bf16.mxu0 0
        %2528 = vmatpush2.bf16.msra.mxu0 0
        %2529 = vmatprep.mubr.bf16.mxu0 0
        %2530 = vmatmul.mubr.bf16.gmra.mxu0 %v2489
        %v2531 = vpop.f32.mrf.mxu0
        %v2532 = vadd.f32 %v2475, %v2531
        %v2533 = vpop.f32.mrf.mxu0
        %v2534 = vpop.f32.mrf.mxu0
        %v2535 = vadd.f32 %v2475, %v2534
        %v2536 = vpop.f32.mrf.mxu0
        %2537 = vmatprep.mubr.bf16.mxu0 0
        %2538 = vmatmul.mubr.bf16.gmra.mxu0 %v2492
        %v2539 = vpop.f32.mrf.mxu0
        %v2540 = vadd.f32 %v2475, %v2539
        %v2541 = vpop.f32.mrf.mxu0
        %v2542 = vpop.f32.mrf.mxu0
        %v2543 = vadd.f32 %v2475, %v2542
        %v2544 = vpop.f32.mrf.mxu0
        %2545 = vmatprep.mubr.bf16.mxu0 0
        %2546 = vmatmul.mubr.bf16.gmra.mxu0 %v2495
        %v2547 = vpop.f32.mrf.mxu0
        %v2548 = vadd.f32 %v2475, %v2547
        %v2549 = vpop.f32.mrf.mxu0
        %v2550 = vpop.f32.mrf.mxu0
        %v2551 = vpop.f32.mrf.mxu0
        %2552 = vdwg.mxu0
        %v2553 = vmul.f32 %v2532, %v2532
        %v2554 = vmul.f32 %v2535, %v2535
        %v2555 = vmul.f32 %v2540, %v2540
        %v2556 = vmul.f32 %v2543, %v2543
        %v2557 = vmul.f32 %v2548, %v2548
        %v2558 = vmul.f32 %v2532, %v2553
        %v2559 = vmul.f32 %v2535, %v2554
        %v2560 = vmul.f32 %v2540, %v2555
        %v2561 = vmul.f32 %v2543, %v2556
        %v2562 = vmul.f32 %v2548, %v2557
        %v2563 = vmul.f32 %v2558, 0.044715
        %v2564 = vmul.f32 %v2559, 0.044715
        %v2565 = vmul.f32 %v2560, 0.044715
        %v2566 = vmul.f32 %v2561, 0.044715
        %v2567 = vmul.f32 %v2562, 0.044715
        %v2568 = vadd.f32 %v2532, %v2563
        %v2569 = vadd.f32 %v2535, %v2564
        %v2570 = vadd.f32 %v2540, %v2565
        %v2571 = vadd.f32 %v2543, %v2566
        %v2572 = vadd.f32 %v2548, %v2567
        %v2573 = vmul.f32 %v2568, 0.7978846
        %v2574 = vmul.f32 %v2569, 0.7978846
        %v2575 = vmul.f32 %v2570, 0.7978846
        %v2576 = vmul.f32 %v2571, 0.7978846
        %v2577 = vmul.f32 %v2572, 0.7978846
        %v2578 = vtanh.pop %v2573
        %v2579 = vtanh.pop %v2574
        %v2580 = vtanh.pop %v2575
        %v2581 = vtanh.pop %v2576
        %v2582 = vtanh.pop %v2577
        %v2583 = vadd.f32 %v2578, 1.0
        %v2584 = vadd.f32 %v2579, 1.0
        %v2585 = vadd.f32 %v2580, 1.0
        %v2586 = vadd.f32 %v2581, 1.0
        %v2587 = vadd.f32 %v2582, 1.0
        %v2588 = vmul.f32 %v2583, 0.5
        %v2589 = vmul.f32 %v2584, 0.5
        %v2590 = vmul.f32 %v2585, 0.5
        %v2591 = vmul.f32 %v2586, 0.5
        %v2592 = vmul.f32 %v2587, 0.5
        %v2593 = vmul.f32 %v2532, %v2588
        %v2594 = vmul.f32 %v2535, %v2589
        %v2595 = vmul.f32 %v2540, %v2590
        %v2596 = vmul.f32 %v2543, %v2591
        %v2597 = vmul.f32 %v2548, %v2592
        %v2598 = vpack.c.bf16 %v2594, %v2593
        %v2599 = vpack.c.bf16 %v2596, %v2595
        %v2600 = vpack.c.bf16 %v2597, %v2597
        %v2601 = vld [vmem:[%s513] sm:$0xf]
        %v2602 = vld [vmem:[%s513 + $0x4] sm:$0xf]
        %v2603 = vld [vmem:[%s513 + $0x8] sm:$0xf]
        %v2604 = vld [vmem:[%s513 + $0xc] sm:$0xf]
        %v2605 = vld [vmem:[%s513 + $0x10] sm:$0xf]
        %v2606 = vld [vmem:[%s513 + $0x14] sm:$0xf]
        %v2607 = vld [vmem:[%s513 + $0x18] sm:$0xf]
        %v2608 = vld [vmem:[%s513 + $0x1c] sm:$0xf]
        %v2609 = vlaneseq
        %v2610 = vshrl.u32 %v2609, 7
        %v2611 = vsub.s32 7, %v2610
        %v2612 = vrot.slane %v644, %v2611
        %v2621 = vunpack.c.l.b16 %v2601
        %v2622 = vunpack.c.l.b16 %v2602
        %v2623 = vunpack.c.l.b16 %v2603
        %v2624 = vunpack.c.l.b16 %v2604
        %v2625 = vunpack.c.l.b16 %v2605
        %v2626 = vunpack.c.l.b16 %v2606
        %v2627 = vunpack.c.l.b16 %v2607
        %v2628 = vunpack.c.l.b16 %v2608
        %v2629 = vpack.c.b16 %v2622, %v2621
        %v2630 = vpack.c.b16 %v2624, %v2623
        %v2631 = vpack.c.b16 %v2626, %v2625
        %v2632 = vpack.c.b16 %v2628, %v2627
        %vm2637 = vcmask 523264
        %v2639 = vsel %vm2637, %v2598, 0
        %v2642 = vsel %vm2637, %v2599, 0
        %v2645 = vsel %vm2637, %v2600, 0
        %2647 = vmatprep.subr.bf16.mxu0 0
        %2648 = vmatpush1.bf16.msra.mxu0 0
        %2649 = vmatprep.subr.bf16.mxu0 0
        %2650 = vmatpush1.bf16.msra.mxu0 0
        %2651 = vmatprep.subr.bf16.mxu0 0
        %2652 = vmatpush1.bf16.msra.mxu0 0
        %2653 = vmatprep.subr.bf16.mxu0 0
        %2654 = vmatpush1.bf16.msra.mxu0 0
        %2655 = vmatprep.subr.bf16.mxu0 0
        %2656 = vmatpush1.bf16.msra.mxu0 %v2632
        %2657 = vmatprep.subr.bf16.mxu0 0
        %2658 = vmatpush1.bf16.msra.mxu0 %v2631
        %2659 = vmatprep.subr.bf16.mxu0 0
        %2660 = vmatpush1.bf16.msra.mxu0 %v2630
        %2661 = vmatprep.subr.bf16.mxu0 0
        %2662 = vmatpush1.bf16.msra.mxu0 %v2629
        %2663 = vmatprep.subr.bf16.mxu0 0
        %2664 = vmatpush2.bf16.msra.mxu0 0
        %2665 = vmatprep.subr.bf16.mxu0 0
        %2666 = vmatpush2.bf16.msra.mxu0 0
        %2667 = vmatprep.subr.bf16.mxu0 0
        %2668 = vmatpush2.bf16.msra.mxu0 0
        %2669 = vmatprep.subr.bf16.mxu0 0
        %2670 = vmatpush2.bf16.msra.mxu0 0
        %2671 = vmatprep.subr.bf16.mxu0 0
        %2672 = vmatpush2.bf16.msra.mxu0 0
        %2673 = vmatprep.subr.bf16.mxu0 0
        %2674 = vmatpush2.bf16.msra.mxu0 0
        %2675 = vmatprep.subr.bf16.mxu0 0
        %2676 = vmatpush2.bf16.msra.mxu0 0
        %2677 = vmatprep.subr.bf16.mxu0 0
        %2678 = vmatpush2.bf16.msra.mxu0 0
        %2679 = vmatprep.mubr.bf16.mxu0 0
        %2680 = vmatmul.mubr.bf16.gmra.mxu0 %v2639
        %v2681 = vpop.f32.mrf.mxu0
        %v2682 = vadd.f32 %v2612, %v2681
        %v2683 = vpop.f32.mrf.mxu0
        %v2684 = vpop.f32.mrf.mxu0
        %v2685 = vadd.f32 %v2612, %v2684
        %v2686 = vpop.f32.mrf.mxu0
        %2687 = vmatprep.mubr.bf16.mxu0 0
        %2688 = vmatmul.mubr.bf16.gmra.mxu0 %v2642
        %v2689 = vpop.f32.mrf.mxu0
        %v2690 = vadd.f32 %v2612, %v2689
        %v2691 = vpop.f32.mrf.mxu0
        %v2692 = vpop.f32.mrf.mxu0
        %v2693 = vadd.f32 %v2612, %v2692
        %v2694 = vpop.f32.mrf.mxu0
        %2695 = vmatprep.mubr.bf16.mxu0 0
        %2696 = vmatmul.mubr.bf16.gmra.mxu0 %v2645
        %v2697 = vpop.f32.mrf.mxu0
        %v2698 = vadd.f32 %v2612, %v2697
        %v2699 = vpop.f32.mrf.mxu0
        %v2700 = vpop.f32.mrf.mxu0
        %v2701 = vpop.f32.mrf.mxu0
        %2702 = vdwg.mxu0
        %v2703 = vadd.f32 %v2377, %v2682
        %v2704 = vadd.f32 %v2378, %v2685
        %v2705 = vadd.f32 %v2379, %v2690
        %v2706 = vadd.f32 %v2380, %v2693
        %v2707 = vadd.f32 %v2381, %v2698
        %2708 = vst.msk [vmem:[#allocation2] sm:$0xff] %vm645, %v2703
        %2709 = vst.msk [vmem:[#allocation2 + $0x8] sm:$0xff] %vm645, %v2704
        %2710 = vst.msk [vmem:[#allocation2 + $0x10] sm:$0xff] %vm645, %v2705
        %2711 = vst.msk [vmem:[#allocation2 + $0x18] sm:$0xff] %vm645, %v2706
        %2712 = vst.msk [vmem:[#allocation2 + $0x20] sm:$0x3] %vm658, %v2707
        %p2713 = scmp.eq.s32.totalorder %s29, 1
        // Predicated region
        $region73: #{tpu_custom_call.1} parent=67 // pred_check
          %p2714 = pneg %p2713
        $region74: #{tpu_custom_call.1} parent=67 // pred_check_branch
          %2716 = sbr.rel (%p2714) target = $region76
        $region75: #{tpu_custom_call.1} parent=67 // pred_region
          %v2717 = vsel %vm945, %v2703, %v2705
          %v2718 = vld [vmem:[%s8] sm:$0x1]
          %v2719 = vld [vmem:[%s9] sm:$0x1]
          %v2720 = vsel %vm658, %v2717, 0.0
          %2721 = vadd.xlane.f32.xlu0 %v2720
          %v2722 = vpop.xlane.xlu0 %2721
          %v2723 = vmul.f32 %v2722, %v662
          %v2724 = vsub.f32 %v2717, %v2723
          %v2725 = vmul.f32 %v2724, %v2724
          %v2726 = vsel %vm658, %v2725, 0.0
          %2727 = vadd.xlane.f32.xlu0 %v2726
          %v2728 = vpop.xlane.xlu0 %2727
          %v2729 = vmul.f32 %v2728, %v662
          %v2730 = vadd.f32 %v2729, 1e-06
          %v2731 = vrsqrt.pop %v2730
          %v2732 = vmul.f32 %v2724, %v2731
          %v2734 = vlaneseq
          %v2735 = vshrl.u32 %v2734, 7
          %v2736 = vsub.s32 0, %v2735
          %v2737 = vrot.slane %v2718, %v2736
          %v2739 = vmul.f32 %v2732, %v2737
          %v2741 = vlaneseq
          %v2742 = vshrl.u32 %v2741, 7
          %v2743 = vsub.s32 0, %v2742
          %v2744 = vrot.slane %v2719, %v2743
          %v2746 = vadd.f32 %v2739, %v2744
          %v2747 = vpack.c.bf16 %v2746, %v2746
          %v2748 = vld [vmem:[%s10] sm:$0xf]
          %v2749 = vld [vmem:[%s10 + $0x4] sm:$0xf]
          %v2750 = vld [vmem:[%s10 + $0x8] sm:$0xf]
          %v2751 = vld [vmem:[%s10 + $0xc] sm:$0xf]
          %v2752 = vld [vmem:[%s11] sm:$0x1]
          %v2754 = vlaneseq
          %v2755 = vshrl.u32 %v2754, 7
          %v2756 = vsub.s32 0, %v2755
          %v2757 = vrot.slane %v2752, %v2756
          %v2763 = vunpack.c.l.b16 %v2748
          %v2764 = vunpack.c.l.b16 %v2749
          %v2765 = vunpack.c.l.b16 %v2750
          %v2766 = vunpack.c.l.b16 %v2751
          %v2767 = vpack.c.b16 %v2764, %v2763
          %v2768 = vpack.c.b16 %v2766, %v2765
          %v2772 = vsel %vm645, %v2747, 0
          %2774 = vmatprep.subr.bf16.mxu0 0
          %2775 = vmatpush1.bf16.msra.mxu0 0
          %2776 = vmatprep.subr.bf16.mxu0 0
          %2777 = vmatpush1.bf16.msra.mxu0 0
          %2778 = vmatprep.subr.bf16.mxu0 0
          %2779 = vmatpush1.bf16.msra.mxu0 0
          %2780 = vmatprep.subr.bf16.mxu0 0
          %2781 = vmatpush1.bf16.msra.mxu0 0
          %2782 = vmatprep.subr.bf16.mxu0 0
          %2783 = vmatpush1.bf16.msra.mxu0 0
          %2784 = vmatprep.subr.bf16.mxu0 0
          %2785 = vmatpush1.bf16.msra.mxu0 0
          %2786 = vmatprep.subr.bf16.mxu0 0
          %2787 = vmatpush1.bf16.msra.mxu0 %v2768
          %2788 = vmatprep.subr.bf16.mxu0 0
          %2789 = vmatpush1.bf16.msra.mxu0 %v2767
          %2790 = vmatprep.subr.bf16.mxu0 0
          %2791 = vmatpush2.bf16.msra.mxu0 0
          %2792 = vmatprep.subr.bf16.mxu0 0
          %2793 = vmatpush2.bf16.msra.mxu0 0
          %2794 = vmatprep.subr.bf16.mxu0 0
          %2795 = vmatpush2.bf16.msra.mxu0 0
          %2796 = vmatprep.subr.bf16.mxu0 0
          %2797 = vmatpush2.bf16.msra.mxu0 0
          %2798 = vmatprep.subr.bf16.mxu0 0
          %2799 = vmatpush2.bf16.msra.mxu0 0
          %2800 = vmatprep.subr.bf16.mxu0 0
          %2801 = vmatpush2.bf16.msra.mxu0 0
          %2802 = vmatprep.subr.bf16.mxu0 0
          %2803 = vmatpush2.bf16.msra.mxu0 0
          %2804 = vmatprep.subr.bf16.mxu0 0
          %2805 = vmatpush2.bf16.msra.mxu0 0
          %2806 = vmatprep.mubr.bf16.mxu0 0
          %2807 = vmatmul.mubr.bf16.gmra.mxu0 %v2772
          %v2808 = vpop.f32.mrf.mxu0
          %v2809 = vadd.f32 %v2757, %v2808
          %v2810 = vpop.f32.mrf.mxu0
          %v2811 = vpop.f32.mrf.mxu0
          %v2812 = vpop.f32.mrf.mxu0
          %2813 = vdwg.mxu0
          %2814 = vst [vmem:[#allocation3] sm:$0x3] %v2809
        $region76: #{tpu_custom_call.1} parent=67 // pred_fallthru
          _
        // Predicated region
        $region77: #{tpu_custom_call.1} parent=67 // pred_check
          %p2815 = pneg %p336
        $region78: #{tpu_custom_call.1} parent=67 // pred_check_branch
          %2817 = sbr.rel (%p2815) target = $region80
        $region79: #{tpu_custom_call.1} parent=67 // pred_region
          %s2819 = ssub.s32 32, 32
          %2820 = vsyncadd [#allocation4], %s2819
          %s2821 = smul.addr %s28, 32
          %s2822 = scalar_lea.hbm %s12, %s2821
          %s2824 = sshll.u32 [#allocation3], 4
          %s2825 = int_to_ptr.vmem [resolvable:$true] %s2824
          %2827 = dma.vmem_to_hbm [thread:$0]  %s2825, 32, %s2822, [#allocation4]
        $region80: #{tpu_custom_call.1} parent=67 // pred_fallthru
          _
        // Predicated region
        $region81: #{tpu_custom_call.1} parent=67 // pred_check
          %p2828 = pneg %p336
        $region82: #{tpu_custom_call.1} parent=67 // pred_check_branch
          %2830 = sbr.rel (%p2828) target = $region84
        $region83: #{tpu_custom_call.1} parent=67 // pred_region
          %2831 = dma.done [#allocation4], 32
        $region84: #{tpu_custom_call.1} parent=67 // pred_fallthru
          _
      $region68: #{tpu_custom_call.1} parent=5 // pred_fallthru
        _
      %p2832 = scmp.le.s32.totalorder 2, %s19
      // Predicated region
      $region85: #{tpu_custom_call.1} parent=5 // pred_check
        %p2833 = pneg %p2832
      $region86: #{tpu_custom_call.1} parent=5 // pred_check_branch
        %2835 = sbr.rel (%p2833) target = $region88
      $region87: #{tpu_custom_call.1} parent=5 // pred_region
        %s2836 = ssub.s32 %s19, 2
      $region88: #{tpu_custom_call.1} parent=5 // pred_fallthru
        _
    $region6: #{tpu_custom_call.1} parent=1 // loop_footer
      %s23 = sadd.s32 1, %s19
    $region7: #{tpu_custom_call.1} parent=1 // loop_footer_branch
      %18 = sbr.rel target = $region3
    $region8: #{tpu_custom_call.1} parent=1 // loop_exit
      _
    %2837 = vsyncpa [#allocation4], 1
    %s2838 = scalar_lea.sflag [#allocation4], 1
    %2839 = vsyncpa %s2838, 1

</llo_original>
